<compile_context>
chip_gen: v5e
topology: v5e:2x2
jax: 0.10.0
libtpu: 0.0.40
codegen_flags: <defaults>
</compile_context>

<pallas_src>
import functools

import jax
import jax.numpy as jnp
from jax import lax
from jax.experimental import pallas as pl
from jax.experimental.pallas import tpu as pltpu

C = 3            # inplanes = planes = outplanes = 3 (module defaults, groups=3)
NUM_BLOCKS = 3   # conv_body = 3 x ResConvBlock
EPS = 1e-5       # BatchNorm2d eps
N_PARAMS = NUM_BLOCKS * (C * C + C + C * 9 + C + C * C + C) + C   # 165


def _freqconv_kernel(params_ref, x_ref, klastb_ref, out_ref, *,
                     img_w, img_wp, img_h, n_sub):
    # params_ref : flat f32[165] in SMEM: per block (w1[9], b1[3], k2[27], b2[3],
    #              w3[9], b3[3]) x 3 blocks, then last-conv bias [3] (BN folded)
    # x_ref      : (1, C, S*H, P*Wp) f32 VMEM  (S groups on sublanes, P images on lanes)
    # klastb_ref : (C, 3, H, P*Wp)   f32 VMEM  (last-conv weights, lane/sublane dense)
    # out_ref    : (1, C, S, P*Wp)   f32 VMEM  (H collapsed; one row per image group)
    _, _, _SH, PW = x_ref.shape
    H, W, Wp, S = img_h, img_w, img_wp, n_sub

    # ---- hoist all 165 scalar parameter reads (SMEM) above the batch loop ----
    p = [params_ref[i] for i in range(N_PARAMS)]
    off = 0
    blocks = []
    for _blk in range(NUM_BLOCKS):
        w1 = [[p[off + o * C + i] for i in range(C)] for o in range(C)]; off += C * C
        b1 = [p[off + o] for o in range(C)]; off += C
        k2 = [[[p[off + c * 9 + kh * 3 + kw] for kw in range(3)]
               for kh in range(3)] for c in range(C)]; off += C * 9
        b2 = [p[off + c] for c in range(C)]; off += C
        w3 = [[p[off + o * C + i] for i in range(C)] for o in range(C)]; off += C * C
        b3 = [p[off + o] for o in range(C)]; off += C
        blocks.append((w1, b1, k2, b2, w3, b3))
    blast = [p[off + c] for c in range(C)]

    # ---- per-image edge masks, built once on an (H, PW) tile (hoisted) ----
    row = lax.broadcasted_iota(jnp.int32, (H, PW), 0)
    col = lax.broadcasted_iota(jnp.int32, (H, PW), 1)
    if PW == Wp:                                   # single image per lane group
        col_in = col
    elif (Wp & (Wp - 1)) == 0:
        col_in = col & (Wp - 1)
    else:
        col_in = col % Wp
    not_top = row > 0                              # valid when reading h-1
    not_bot = row < H - 1                          # valid when reading h+1
    not_left = col_in > 0                          # valid when reading w-1
    not_right = col_in < W - 1                     # valid when reading w+1 (true W!)

    def lane_taps(a):
        # (a(h,w-1), a(h,w), a(h,w+1)) with zeros beyond each packed image's edges.
        # pltpu.roll requires non-negative shifts: shift of -1 == shift of PW-1.
        left = jnp.where(not_left, pltpu.roll(a, 1, axis=1), 0.0)
        right = jnp.where(not_right, pltpu.roll(a, PW - 1, axis=1), 0.0)
        return (left, a, right)

    def mix1x1_relu(inp, w, b, residual=None):
        # 1x1 channel mix (+ folded BN) [+ residual] + ReLU on the VPU (C=3: MXU
        # would be ~0.1% utilized, so deliberately stay on the vector unit).
        out = []
        for o in range(C):
            acc = inp[0] * w[o][0] + inp[1] * w[o][1] + inp[2] * w[o][2] + b[o]
            if residual is not None:
                acc = acc + residual[o]
            out.append(jnp.maximum(acc, 0.0))
        return out

    def depthwise3x3_relu(a, kv, bias):
        # 3x3 depthwise conv, padding=1 (+ folded BN) + ReLU via XLU roll + masks.
        taps = lane_taps(a)
        acc = taps[0] * kv[1][0] + taps[1] * kv[1][1] + taps[2] * kv[1][2]
        for kh, mrow, sh in ((0, not_top, 1), (2, not_bot, H - 1)):   # sh>=0 always
            for kw in range(3):
                t = jnp.where(mrow, pltpu.roll(taps[kw], sh, axis=0), 0.0)
                acc = acc + t * kv[kh][kw]
        return jnp.maximum(acc + bias, 0.0)

    def body(s, carry):
        r0 = pl.multiple_of(s * H, H)
        x = [x_ref[0, c, pl.ds(r0, H), :] for c in range(C)]     # per-channel (H, PW)

        for (w1, b1, k2, b2, w3, b3) in blocks:                  # 3 x ResConvBlock
            y = mix1x1_relu(x, w1, b1)
            z = [depthwise3x3_relu(y[c], k2[c], b2[c]) for c in range(C)]
            x = mix1x1_relu(z, w3, b3, residual=x)               # conv3+bn3+identity+relu

        # last conv: grouped (H, 3) kernel, padding (0, 1), bias; H collapses to 1
        # (realizes the .squeeze(-2)).  Weight planes are lane-dense (no broadcasts).
        for c in range(C):
            taps = lane_taps(x[c])
            acc = (taps[0] * klastb_ref[c, 0] + taps[1] * klastb_ref[c, 1]
                   + taps[2] * klastb_ref[c, 2])
            out_ref[0, c, pl.ds(s, 1), :] = (
                jnp.sum(acc, axis=0, keepdims=True) + blast[c]).astype(out_ref.dtype)
        return carry

    # Bounded in-kernel batch loop (keeps vreg live ranges to one (H, PW) group).
    lax.fori_loop(0, S, body, 0)


def _pad_width(w):
    # Pad the image width so lanes pack densely: Wp divides 128 (or is a multiple
    # of 128 for very wide images).  Keeps every vreg / store full-lane.
    if w >= 128:
        return -(-w // 128) * 128
    wp = w
    while 128 % wp != 0:
        wp += 1
    return wp


def freq_convolution(x, flat_params, klast, *, sublane_groups=8):
    """x: (N, C, H, W) f32; klast: (C, H, 3) grouped last-conv weights (unfolded)."""
    N, Cc, H, W = x.shape
    Wp = _pad_width(W)
    if Wp != W:
        x = jnp.pad(x, ((0, 0), (0, 0), (0, 0), (0, Wp - W)))
    P = max(1, 128 // Wp)                         # images packed along lanes
    PW = P * Wp
    S = int(max(1, min(sublane_groups, -(-N // P))))   # image groups stacked on sublanes
    G = S * P                                     # images per grid step
    NB = -(-N // G)
    Npad = NB * G
    if Npad != N:
        x = jnp.concatenate([x, jnp.zeros((Npad - N, Cc, H, Wp), x.dtype)], axis=0)
    SH = S * H

    # (Npad,C,H,Wp) -> (NB,S,P,C,H,Wp) -> (NB,C,S,H,P,Wp) -> (NB,C,SH,PW)
    xp = x.reshape(NB, S, P, Cc, H, Wp).transpose(0, 3, 1, 4, 2, 5).reshape(NB, Cc, SH, PW)

    # Last-conv weights pre-broadcast lane-dense: klastb[c, kw, h, :] = klast[c, h, kw].
    klastb = jnp.broadcast_to(
        jnp.transpose(klast, (0, 2, 1))[:, :, :, None], (Cc, 3, H, PW)).astype(x.dtype)

    out = pl.pallas_call(
        functools.partial(_freqconv_kernel, img_w=W, img_wp=Wp, img_h=H, n_sub=S),
        out_shape=jax.ShapeDtypeStruct((NB, Cc, S, PW), x.dtype),
        grid=(NB,),
        in_specs=[
            pl.BlockSpec(memory_space=pltpu.MemorySpace.SMEM),        # flat folded params
            pl.BlockSpec((1, Cc, SH, PW), lambda n: (n, 0, 0, 0)),    # packed images
            pl.BlockSpec((Cc, 3, H, PW), lambda n: (0, 0, 0, 0)),     # last-conv planes
        ],
        out_specs=pl.BlockSpec((1, Cc, S, PW), lambda n: (n, 0, 0, 0)),
        compiler_params=pltpu.CompilerParams(dimension_semantics=("parallel",)),
    )(flat_params, xp, klastb)

    # (NB,C,S,PW) -> (NB,S,P,C,Wp) -> (Npad,C,Wp) -> (N,C,W)
    out = out.reshape(NB, Cc, S, P, Wp).transpose(0, 2, 3, 1, 4).reshape(Npad, Cc, Wp)
    return out[:N, :, :W]


# ---------------- parameter construction (deterministic, synthetic) ----------------
def init_params(key, width):
    keys = iter(jax.random.split(key, 64))

    def nrm(shape, s=0.4):
        return (jax.random.normal(next(keys), shape) * s).astype(jnp.float32)

    def uni(shape):
        return jax.random.uniform(next(keys), shape, minval=0.5, maxval=1.5).astype(jnp.float32)

    blocks = []
    for _ in range(NUM_BLOCKS):
        blocks.append(dict(
            w1=nrm((C, C)),                                         # conv1x1 (C,C,1,1)
            bn1=(uni((C,)), nrm((C,), 0.1), nrm((C,), 0.1), uni((C,))),
            k2=nrm((C, 3, 3)),                                      # depthwise (C,1,3,3)
            bn2=(uni((C,)), nrm((C,), 0.1), nrm((C,), 0.1), uni((C,))),
            w3=nrm((C, C)),
            bn3=(uni((C,)), nrm((C,), 0.1), nrm((C,), 0.1), uni((C,))),
        ))
    klast = nrm((C, width, 3))                                      # last_conv (C,1,H,3)
    blast = nrm((C,), 0.1)
    return dict(blocks=blocks, klast=klast, blast=blast)


def fold_params(params):
    """Fold inference BatchNorm (gamma, beta, mean, var) into preceding convs."""
    def fold(w, bn, depthwise=False):
        g, b, m, v = bn
        s = g / jnp.sqrt(v + EPS)
        t = b - m * s
        wf = w * (s[:, None, None] if depthwise else s[:, None])
        return wf, t

    flat = []
    for blk in params['blocks']:
        w1f, b1f = fold(blk['w1'], blk['bn1'])
        k2f, b2f = fold(blk['k2'], blk['bn2'], depthwise=True)
        w3f, b3f = fold(blk['w3'], blk['bn3'])
        flat += [w1f.reshape(-1), b1f, k2f.reshape(-1), b2f, w3f.reshape(-1), b3f]
    flat.append(params['blast'])
    return jnp.concatenate(flat).astype(jnp.float32)


# ---------------- plain-JAX reference (un-folded, mirrors PyTorch eval forward) ----
def reference_forward(x, params):
    def conv(xx, w, padding, groups):
        return lax.conv_general_dilated(
            xx, w, (1, 1), padding,
            dimension_numbers=('NCHW', 'OIHW', 'NCHW'),
            feature_group_count=groups,
            precision=lax.Precision.HIGHEST)

    def bn(xx, p):
        g, b, m, v = p
        return (g[None, :, None, None] * (xx - m[None, :, None, None])
                / jnp.sqrt(v[None, :, None, None] + EPS) + b[None, :, None, None])

    for blk in params['blocks']:
        idn = x
        y = conv(x, blk['w1'][:, :, None, None], ((0, 0), (0, 0)), 1)
        y = jax.nn.relu(bn(y, blk['bn1']))
        y = conv(y, blk['k2'][:, None, :, :], ((1, 1), (1, 1)), C)
        y = jax.nn.relu(bn(y, blk['bn2']))
        y = conv(y, blk['w3'][:, :, None, None], ((0, 0), (0, 0)), 1)
        y = bn(y, blk['bn3'])
        x = jax.nn.relu(y + idn)
    y = conv(x, params['klast'][:, None, :, :], ((0, 0), (1, 1)), C)
    y = y + params['blast'][None, :, None, None]
    return y[:, :, 0, :]                                            # squeeze(-2)


if __name__ == "__main__":
    key = jax.random.PRNGKey(0)
    k_x, k_p = jax.random.split(key)

    # proposal_dim = -1, width = 16  ==> input height must equal width.
    # N = 128 -> 2 grid steps of 64 images each (8 lane-packed x 8 sublane-stacked):
    # amortizes per-step overhead and keeps the grid even so both v7x TCs get work.
    N, H, W = 128, 16, 16
    x = jax.random.normal(k_x, (N, C, H, W), dtype=jnp.float32)

    params = init_params(k_p, width=H)
    flat = fold_params(params)
    assert flat.shape[0] == N_PARAMS

    out = freq_convolution(x, flat, params['klast'])
    out = jax.block_until_ready(out)

    ref = reference_forward(x, params)
    assert out.shape == (N, C, W)
    if not jnp.allclose(out, ref, atol=1e-3, rtol=1e-3):
        raise AssertionError(
            f"mismatch: max abs err {float(jnp.max(jnp.abs(out - ref)))}")
    print("KERNEL_OK")
</pallas_src>

<mosaic_0001>
module attributes {stable_mosaic.version = 11 : i64} {
  func.func @_freqconv_kernel(%arg0: i32, %arg1: memref<165xf32, #tpu.memory_space<smem>>, %arg2: memref<1x3x128x128xf32, #tpu.memory_space<vmem>>, %arg3: memref<3x3x16x128xf32, #tpu.memory_space<vmem>>, %arg4: memref<1x3x8x128xf32, #tpu.memory_space<vmem>>) attributes {dimension_semantics = [#tpu.dimension_semantics<parallel>], iteration_bounds = array<i64: 2>, scalar_prefetch = 0 : i64, scratch_operands = 0 : i64, tpu.core_type = #tpu.core_type<tc>, window_params = [{transform_indices = @transform_0, window_bounds = array<i64: 165>}, {transform_indices = @transform_1, window_bounds = array<i64: 1, 3, 128, 128>}, {pipeline_mode = #tpu.pipeline_mode<synchronous>, transform_indices = @transform_2, window_bounds = array<i64: 3, 3, 16, 128>}, {transform_indices = @transform_3, window_bounds = array<i64: 1, 3, 8, 128>}]} {
    %c0 = arith.constant 0 : index
    %0 = memref.load %arg1[%c0] : memref<165xf32, #tpu.memory_space<smem>>
    %c1 = arith.constant 1 : index
    %1 = memref.load %arg1[%c1] : memref<165xf32, #tpu.memory_space<smem>>
    %c2 = arith.constant 2 : index
    %2 = memref.load %arg1[%c2] : memref<165xf32, #tpu.memory_space<smem>>
    %c3 = arith.constant 3 : index
    %3 = memref.load %arg1[%c3] : memref<165xf32, #tpu.memory_space<smem>>
    %c4 = arith.constant 4 : index
    %4 = memref.load %arg1[%c4] : memref<165xf32, #tpu.memory_space<smem>>
    %c5 = arith.constant 5 : index
    %5 = memref.load %arg1[%c5] : memref<165xf32, #tpu.memory_space<smem>>
    %c6 = arith.constant 6 : index
    %6 = memref.load %arg1[%c6] : memref<165xf32, #tpu.memory_space<smem>>
    %c7 = arith.constant 7 : index
    %7 = memref.load %arg1[%c7] : memref<165xf32, #tpu.memory_space<smem>>
    %c8 = arith.constant 8 : index
    %8 = memref.load %arg1[%c8] : memref<165xf32, #tpu.memory_space<smem>>
    %c9 = arith.constant 9 : index
    %9 = memref.load %arg1[%c9] : memref<165xf32, #tpu.memory_space<smem>>
    %c10 = arith.constant 10 : index
    %10 = memref.load %arg1[%c10] : memref<165xf32, #tpu.memory_space<smem>>
    %c11 = arith.constant 11 : index
    %11 = memref.load %arg1[%c11] : memref<165xf32, #tpu.memory_space<smem>>
    %c12 = arith.constant 12 : index
    %12 = memref.load %arg1[%c12] : memref<165xf32, #tpu.memory_space<smem>>
    %c13 = arith.constant 13 : index
    %13 = memref.load %arg1[%c13] : memref<165xf32, #tpu.memory_space<smem>>
    %c14 = arith.constant 14 : index
    %14 = memref.load %arg1[%c14] : memref<165xf32, #tpu.memory_space<smem>>
    %c15 = arith.constant 15 : index
    %15 = memref.load %arg1[%c15] : memref<165xf32, #tpu.memory_space<smem>>
    %c16 = arith.constant 16 : index
    %16 = memref.load %arg1[%c16] : memref<165xf32, #tpu.memory_space<smem>>
    %c17 = arith.constant 17 : index
    %17 = memref.load %arg1[%c17] : memref<165xf32, #tpu.memory_space<smem>>
    %c18 = arith.constant 18 : index
    %18 = memref.load %arg1[%c18] : memref<165xf32, #tpu.memory_space<smem>>
    %c19 = arith.constant 19 : index
    %19 = memref.load %arg1[%c19] : memref<165xf32, #tpu.memory_space<smem>>
    %c20 = arith.constant 20 : index
    %20 = memref.load %arg1[%c20] : memref<165xf32, #tpu.memory_space<smem>>
    %c21 = arith.constant 21 : index
    %21 = memref.load %arg1[%c21] : memref<165xf32, #tpu.memory_space<smem>>
    %c22 = arith.constant 22 : index
    %22 = memref.load %arg1[%c22] : memref<165xf32, #tpu.memory_space<smem>>
    %c23 = arith.constant 23 : index
    %23 = memref.load %arg1[%c23] : memref<165xf32, #tpu.memory_space<smem>>
    %c24 = arith.constant 24 : index
    %24 = memref.load %arg1[%c24] : memref<165xf32, #tpu.memory_space<smem>>
    %c25 = arith.constant 25 : index
    %25 = memref.load %arg1[%c25] : memref<165xf32, #tpu.memory_space<smem>>
    %c26 = arith.constant 26 : index
    %26 = memref.load %arg1[%c26] : memref<165xf32, #tpu.memory_space<smem>>
    %c27 = arith.constant 27 : index
    %27 = memref.load %arg1[%c27] : memref<165xf32, #tpu.memory_space<smem>>
    %c28 = arith.constant 28 : index
    %28 = memref.load %arg1[%c28] : memref<165xf32, #tpu.memory_space<smem>>
    %c29 = arith.constant 29 : index
    %29 = memref.load %arg1[%c29] : memref<165xf32, #tpu.memory_space<smem>>
    %c30 = arith.constant 30 : index
    %30 = memref.load %arg1[%c30] : memref<165xf32, #tpu.memory_space<smem>>
    %c31 = arith.constant 31 : index
    %31 = memref.load %arg1[%c31] : memref<165xf32, #tpu.memory_space<smem>>
    %c32 = arith.constant 32 : index
    %32 = memref.load %arg1[%c32] : memref<165xf32, #tpu.memory_space<smem>>
    %c33 = arith.constant 33 : index
    %33 = memref.load %arg1[%c33] : memref<165xf32, #tpu.memory_space<smem>>
    %c34 = arith.constant 34 : index
    %34 = memref.load %arg1[%c34] : memref<165xf32, #tpu.memory_space<smem>>
    %c35 = arith.constant 35 : index
    %35 = memref.load %arg1[%c35] : memref<165xf32, #tpu.memory_space<smem>>
    %c36 = arith.constant 36 : index
    %36 = memref.load %arg1[%c36] : memref<165xf32, #tpu.memory_space<smem>>
    %c37 = arith.constant 37 : index
    %37 = memref.load %arg1[%c37] : memref<165xf32, #tpu.memory_space<smem>>
    %c38 = arith.constant 38 : index
    %38 = memref.load %arg1[%c38] : memref<165xf32, #tpu.memory_space<smem>>
    %c39 = arith.constant 39 : index
    %39 = memref.load %arg1[%c39] : memref<165xf32, #tpu.memory_space<smem>>
    %c40 = arith.constant 40 : index
    %40 = memref.load %arg1[%c40] : memref<165xf32, #tpu.memory_space<smem>>
    %c41 = arith.constant 41 : index
    %41 = memref.load %arg1[%c41] : memref<165xf32, #tpu.memory_space<smem>>
    %c42 = arith.constant 42 : index
    %42 = memref.load %arg1[%c42] : memref<165xf32, #tpu.memory_space<smem>>
    %c43 = arith.constant 43 : index
    %43 = memref.load %arg1[%c43] : memref<165xf32, #tpu.memory_space<smem>>
    %c44 = arith.constant 44 : index
    %44 = memref.load %arg1[%c44] : memref<165xf32, #tpu.memory_space<smem>>
    %c45 = arith.constant 45 : index
    %45 = memref.load %arg1[%c45] : memref<165xf32, #tpu.memory_space<smem>>
    %c46 = arith.constant 46 : index
    %46 = memref.load %arg1[%c46] : memref<165xf32, #tpu.memory_space<smem>>
    %c47 = arith.constant 47 : index
    %47 = memref.load %arg1[%c47] : memref<165xf32, #tpu.memory_space<smem>>
    %c48 = arith.constant 48 : index
    %48 = memref.load %arg1[%c48] : memref<165xf32, #tpu.memory_space<smem>>
    %c49 = arith.constant 49 : index
    %49 = memref.load %arg1[%c49] : memref<165xf32, #tpu.memory_space<smem>>
    %c50 = arith.constant 50 : index
    %50 = memref.load %arg1[%c50] : memref<165xf32, #tpu.memory_space<smem>>
    %c51 = arith.constant 51 : index
    %51 = memref.load %arg1[%c51] : memref<165xf32, #tpu.memory_space<smem>>
    %c52 = arith.constant 52 : index
    %52 = memref.load %arg1[%c52] : memref<165xf32, #tpu.memory_space<smem>>
    %c53 = arith.constant 53 : index
    %53 = memref.load %arg1[%c53] : memref<165xf32, #tpu.memory_space<smem>>
    %c54 = arith.constant 54 : index
    %54 = memref.load %arg1[%c54] : memref<165xf32, #tpu.memory_space<smem>>
    %c55 = arith.constant 55 : index
    %55 = memref.load %arg1[%c55] : memref<165xf32, #tpu.memory_space<smem>>
    %c56 = arith.constant 56 : index
    %56 = memref.load %arg1[%c56] : memref<165xf32, #tpu.memory_space<smem>>
    %c57 = arith.constant 57 : index
    %57 = memref.load %arg1[%c57] : memref<165xf32, #tpu.memory_space<smem>>
    %c58 = arith.constant 58 : index
    %58 = memref.load %arg1[%c58] : memref<165xf32, #tpu.memory_space<smem>>
    %c59 = arith.constant 59 : index
    %59 = memref.load %arg1[%c59] : memref<165xf32, #tpu.memory_space<smem>>
    %c60 = arith.constant 60 : index
    %60 = memref.load %arg1[%c60] : memref<165xf32, #tpu.memory_space<smem>>
    %c61 = arith.constant 61 : index
    %61 = memref.load %arg1[%c61] : memref<165xf32, #tpu.memory_space<smem>>
    %c62 = arith.constant 62 : index
    %62 = memref.load %arg1[%c62] : memref<165xf32, #tpu.memory_space<smem>>
    %c63 = arith.constant 63 : index
    %63 = memref.load %arg1[%c63] : memref<165xf32, #tpu.memory_space<smem>>
    %c64 = arith.constant 64 : index
    %64 = memref.load %arg1[%c64] : memref<165xf32, #tpu.memory_space<smem>>
    %c65 = arith.constant 65 : index
    %65 = memref.load %arg1[%c65] : memref<165xf32, #tpu.memory_space<smem>>
    %c66 = arith.constant 66 : index
    %66 = memref.load %arg1[%c66] : memref<165xf32, #tpu.memory_space<smem>>
    %c67 = arith.constant 67 : index
    %67 = memref.load %arg1[%c67] : memref<165xf32, #tpu.memory_space<smem>>
    %c68 = arith.constant 68 : index
    %68 = memref.load %arg1[%c68] : memref<165xf32, #tpu.memory_space<smem>>
    %c69 = arith.constant 69 : index
    %69 = memref.load %arg1[%c69] : memref<165xf32, #tpu.memory_space<smem>>
    %c70 = arith.constant 70 : index
    %70 = memref.load %arg1[%c70] : memref<165xf32, #tpu.memory_space<smem>>
    %c71 = arith.constant 71 : index
    %71 = memref.load %arg1[%c71] : memref<165xf32, #tpu.memory_space<smem>>
    %c72 = arith.constant 72 : index
    %72 = memref.load %arg1[%c72] : memref<165xf32, #tpu.memory_space<smem>>
    %c73 = arith.constant 73 : index
    %73 = memref.load %arg1[%c73] : memref<165xf32, #tpu.memory_space<smem>>
    %c74 = arith.constant 74 : index
    %74 = memref.load %arg1[%c74] : memref<165xf32, #tpu.memory_space<smem>>
    %c75 = arith.constant 75 : index
    %75 = memref.load %arg1[%c75] : memref<165xf32, #tpu.memory_space<smem>>
    %c76 = arith.constant 76 : index
    %76 = memref.load %arg1[%c76] : memref<165xf32, #tpu.memory_space<smem>>
    %c77 = arith.constant 77 : index
    %77 = memref.load %arg1[%c77] : memref<165xf32, #tpu.memory_space<smem>>
    %c78 = arith.constant 78 : index
    %78 = memref.load %arg1[%c78] : memref<165xf32, #tpu.memory_space<smem>>
    %c79 = arith.constant 79 : index
    %79 = memref.load %arg1[%c79] : memref<165xf32, #tpu.memory_space<smem>>
    %c80 = arith.constant 80 : index
    %80 = memref.load %arg1[%c80] : memref<165xf32, #tpu.memory_space<smem>>
    %c81 = arith.constant 81 : index
    %81 = memref.load %arg1[%c81] : memref<165xf32, #tpu.memory_space<smem>>
    %c82 = arith.constant 82 : index
    %82 = memref.load %arg1[%c82] : memref<165xf32, #tpu.memory_space<smem>>
    %c83 = arith.constant 83 : index
    %83 = memref.load %arg1[%c83] : memref<165xf32, #tpu.memory_space<smem>>
    %c84 = arith.constant 84 : index
    %84 = memref.load %arg1[%c84] : memref<165xf32, #tpu.memory_space<smem>>
    %c85 = arith.constant 85 : index
    %85 = memref.load %arg1[%c85] : memref<165xf32, #tpu.memory_space<smem>>
    %c86 = arith.constant 86 : index
    %86 = memref.load %arg1[%c86] : memref<165xf32, #tpu.memory_space<smem>>
    %c87 = arith.constant 87 : index
    %87 = memref.load %arg1[%c87] : memref<165xf32, #tpu.memory_space<smem>>
    %c88 = arith.constant 88 : index
    %88 = memref.load %arg1[%c88] : memref<165xf32, #tpu.memory_space<smem>>
    %c89 = arith.constant 89 : index
    %89 = memref.load %arg1[%c89] : memref<165xf32, #tpu.memory_space<smem>>
    %c90 = arith.constant 90 : index
    %90 = memref.load %arg1[%c90] : memref<165xf32, #tpu.memory_space<smem>>
    %c91 = arith.constant 91 : index
    %91 = memref.load %arg1[%c91] : memref<165xf32, #tpu.memory_space<smem>>
    %c92 = arith.constant 92 : index
    %92 = memref.load %arg1[%c92] : memref<165xf32, #tpu.memory_space<smem>>
    %c93 = arith.constant 93 : index
    %93 = memref.load %arg1[%c93] : memref<165xf32, #tpu.memory_space<smem>>
    %c94 = arith.constant 94 : index
    %94 = memref.load %arg1[%c94] : memref<165xf32, #tpu.memory_space<smem>>
    %c95 = arith.constant 95 : index
    %95 = memref.load %arg1[%c95] : memref<165xf32, #tpu.memory_space<smem>>
    %c96 = arith.constant 96 : index
    %96 = memref.load %arg1[%c96] : memref<165xf32, #tpu.memory_space<smem>>
    %c97 = arith.constant 97 : index
    %97 = memref.load %arg1[%c97] : memref<165xf32, #tpu.memory_space<smem>>
    %c98 = arith.constant 98 : index
    %98 = memref.load %arg1[%c98] : memref<165xf32, #tpu.memory_space<smem>>
    %c99 = arith.constant 99 : index
    %99 = memref.load %arg1[%c99] : memref<165xf32, #tpu.memory_space<smem>>
    %c100 = arith.constant 100 : index
    %100 = memref.load %arg1[%c100] : memref<165xf32, #tpu.memory_space<smem>>
    %c101 = arith.constant 101 : index
    %101 = memref.load %arg1[%c101] : memref<165xf32, #tpu.memory_space<smem>>
    %c102 = arith.constant 102 : index
    %102 = memref.load %arg1[%c102] : memref<165xf32, #tpu.memory_space<smem>>
    %c103 = arith.constant 103 : index
    %103 = memref.load %arg1[%c103] : memref<165xf32, #tpu.memory_space<smem>>
    %c104 = arith.constant 104 : index
    %104 = memref.load %arg1[%c104] : memref<165xf32, #tpu.memory_space<smem>>
    %c105 = arith.constant 105 : index
    %105 = memref.load %arg1[%c105] : memref<165xf32, #tpu.memory_space<smem>>
    %c106 = arith.constant 106 : index
    %106 = memref.load %arg1[%c106] : memref<165xf32, #tpu.memory_space<smem>>
    %c107 = arith.constant 107 : index
    %107 = memref.load %arg1[%c107] : memref<165xf32, #tpu.memory_space<smem>>
    %c108 = arith.constant 108 : index
    %108 = memref.load %arg1[%c108] : memref<165xf32, #tpu.memory_space<smem>>
    %c109 = arith.constant 109 : index
    %109 = memref.load %arg1[%c109] : memref<165xf32, #tpu.memory_space<smem>>
    %c110 = arith.constant 110 : index
    %110 = memref.load %arg1[%c110] : memref<165xf32, #tpu.memory_space<smem>>
    %c111 = arith.constant 111 : index
    %111 = memref.load %arg1[%c111] : memref<165xf32, #tpu.memory_space<smem>>
    %c112 = arith.constant 112 : index
    %112 = memref.load %arg1[%c112] : memref<165xf32, #tpu.memory_space<smem>>
    %c113 = arith.constant 113 : index
    %113 = memref.load %arg1[%c113] : memref<165xf32, #tpu.memory_space<smem>>
    %c114 = arith.constant 114 : index
    %114 = memref.load %arg1[%c114] : memref<165xf32, #tpu.memory_space<smem>>
    %c115 = arith.constant 115 : index
    %115 = memref.load %arg1[%c115] : memref<165xf32, #tpu.memory_space<smem>>
    %c116 = arith.constant 116 : index
    %116 = memref.load %arg1[%c116] : memref<165xf32, #tpu.memory_space<smem>>
    %c117 = arith.constant 117 : index
    %117 = memref.load %arg1[%c117] : memref<165xf32, #tpu.memory_space<smem>>
    %c118 = arith.constant 118 : index
    %118 = memref.load %arg1[%c118] : memref<165xf32, #tpu.memory_space<smem>>
    %c119 = arith.constant 119 : index
    %119 = memref.load %arg1[%c119] : memref<165xf32, #tpu.memory_space<smem>>
    %c120 = arith.constant 120 : index
    %120 = memref.load %arg1[%c120] : memref<165xf32, #tpu.memory_space<smem>>
    %c121 = arith.constant 121 : index
    %121 = memref.load %arg1[%c121] : memref<165xf32, #tpu.memory_space<smem>>
    %c122 = arith.constant 122 : index
    %122 = memref.load %arg1[%c122] : memref<165xf32, #tpu.memory_space<smem>>
    %c123 = arith.constant 123 : index
    %123 = memref.load %arg1[%c123] : memref<165xf32, #tpu.memory_space<smem>>
    %c124 = arith.constant 124 : index
    %124 = memref.load %arg1[%c124] : memref<165xf32, #tpu.memory_space<smem>>
    %c125 = arith.constant 125 : index
    %125 = memref.load %arg1[%c125] : memref<165xf32, #tpu.memory_space<smem>>
    %c126 = arith.constant 126 : index
    %126 = memref.load %arg1[%c126] : memref<165xf32, #tpu.memory_space<smem>>
    %c127 = arith.constant 127 : index
    %127 = memref.load %arg1[%c127] : memref<165xf32, #tpu.memory_space<smem>>
    %c128 = arith.constant 128 : index
    %128 = memref.load %arg1[%c128] : memref<165xf32, #tpu.memory_space<smem>>
    %c129 = arith.constant 129 : index
    %129 = memref.load %arg1[%c129] : memref<165xf32, #tpu.memory_space<smem>>
    %c130 = arith.constant 130 : index
    %130 = memref.load %arg1[%c130] : memref<165xf32, #tpu.memory_space<smem>>
    %c131 = arith.constant 131 : index
    %131 = memref.load %arg1[%c131] : memref<165xf32, #tpu.memory_space<smem>>
    %c132 = arith.constant 132 : index
    %132 = memref.load %arg1[%c132] : memref<165xf32, #tpu.memory_space<smem>>
    %c133 = arith.constant 133 : index
    %133 = memref.load %arg1[%c133] : memref<165xf32, #tpu.memory_space<smem>>
    %c134 = arith.constant 134 : index
    %134 = memref.load %arg1[%c134] : memref<165xf32, #tpu.memory_space<smem>>
    %c135 = arith.constant 135 : index
    %135 = memref.load %arg1[%c135] : memref<165xf32, #tpu.memory_space<smem>>
    %c136 = arith.constant 136 : index
    %136 = memref.load %arg1[%c136] : memref<165xf32, #tpu.memory_space<smem>>
    %c137 = arith.constant 137 : index
    %137 = memref.load %arg1[%c137] : memref<165xf32, #tpu.memory_space<smem>>
    %c138 = arith.constant 138 : index
    %138 = memref.load %arg1[%c138] : memref<165xf32, #tpu.memory_space<smem>>
    %c139 = arith.constant 139 : index
    %139 = memref.load %arg1[%c139] : memref<165xf32, #tpu.memory_space<smem>>
    %c140 = arith.constant 140 : index
    %140 = memref.load %arg1[%c140] : memref<165xf32, #tpu.memory_space<smem>>
    %c141 = arith.constant 141 : index
    %141 = memref.load %arg1[%c141] : memref<165xf32, #tpu.memory_space<smem>>
    %c142 = arith.constant 142 : index
    %142 = memref.load %arg1[%c142] : memref<165xf32, #tpu.memory_space<smem>>
    %c143 = arith.constant 143 : index
    %143 = memref.load %arg1[%c143] : memref<165xf32, #tpu.memory_space<smem>>
    %c144 = arith.constant 144 : index
    %144 = memref.load %arg1[%c144] : memref<165xf32, #tpu.memory_space<smem>>
    %c145 = arith.constant 145 : index
    %145 = memref.load %arg1[%c145] : memref<165xf32, #tpu.memory_space<smem>>
    %c146 = arith.constant 146 : index
    %146 = memref.load %arg1[%c146] : memref<165xf32, #tpu.memory_space<smem>>
    %c147 = arith.constant 147 : index
    %147 = memref.load %arg1[%c147] : memref<165xf32, #tpu.memory_space<smem>>
    %c148 = arith.constant 148 : index
    %148 = memref.load %arg1[%c148] : memref<165xf32, #tpu.memory_space<smem>>
    %c149 = arith.constant 149 : index
    %149 = memref.load %arg1[%c149] : memref<165xf32, #tpu.memory_space<smem>>
    %c150 = arith.constant 150 : index
    %150 = memref.load %arg1[%c150] : memref<165xf32, #tpu.memory_space<smem>>
    %c151 = arith.constant 151 : index
    %151 = memref.load %arg1[%c151] : memref<165xf32, #tpu.memory_space<smem>>
    %c152 = arith.constant 152 : index
    %152 = memref.load %arg1[%c152] : memref<165xf32, #tpu.memory_space<smem>>
    %c153 = arith.constant 153 : index
    %153 = memref.load %arg1[%c153] : memref<165xf32, #tpu.memory_space<smem>>
    %c154 = arith.constant 154 : index
    %154 = memref.load %arg1[%c154] : memref<165xf32, #tpu.memory_space<smem>>
    %c155 = arith.constant 155 : index
    %155 = memref.load %arg1[%c155] : memref<165xf32, #tpu.memory_space<smem>>
    %c156 = arith.constant 156 : index
    %156 = memref.load %arg1[%c156] : memref<165xf32, #tpu.memory_space<smem>>
    %c157 = arith.constant 157 : index
    %157 = memref.load %arg1[%c157] : memref<165xf32, #tpu.memory_space<smem>>
    %c158 = arith.constant 158 : index
    %158 = memref.load %arg1[%c158] : memref<165xf32, #tpu.memory_space<smem>>
    %c159 = arith.constant 159 : index
    %159 = memref.load %arg1[%c159] : memref<165xf32, #tpu.memory_space<smem>>
    %c160 = arith.constant 160 : index
    %160 = memref.load %arg1[%c160] : memref<165xf32, #tpu.memory_space<smem>>
    %c161 = arith.constant 161 : index
    %161 = memref.load %arg1[%c161] : memref<165xf32, #tpu.memory_space<smem>>
    %c162 = arith.constant 162 : index
    %162 = memref.load %arg1[%c162] : memref<165xf32, #tpu.memory_space<smem>>
    %c163 = arith.constant 163 : index
    %163 = memref.load %arg1[%c163] : memref<165xf32, #tpu.memory_space<smem>>
    %c164 = arith.constant 164 : index
    %164 = memref.load %arg1[%c164] : memref<165xf32, #tpu.memory_space<smem>>
    %165 = tpu.iota {dimensions = array<i32: 0>} : vector<16x128xi32>
    %166 = tpu.iota {dimensions = array<i32: 1>} : vector<16x128xi32>
    %c15_i32 = arith.constant 15 : i32
    %167 = vector.broadcast %c15_i32 : i32 to vector<16x128xi32>
    %168 = arith.andi %166, %167 : vector<16x128xi32>
    %c0_i32 = arith.constant 0 : i32
    %169 = vector.broadcast %c0_i32 : i32 to vector<16x128xi32>
    %170 = arith.cmpi sgt, %165, %169 : vector<16x128xi32>
    %c15_i32_0 = arith.constant 15 : i32
    %171 = vector.broadcast %c15_i32_0 : i32 to vector<16x128xi32>
    %172 = arith.cmpi slt, %165, %171 : vector<16x128xi32>
    %c0_i32_1 = arith.constant 0 : i32
    %173 = vector.broadcast %c0_i32_1 : i32 to vector<16x128xi32>
    %174 = arith.cmpi sgt, %168, %173 : vector<16x128xi32>
    %c15_i32_2 = arith.constant 15 : i32
    %175 = vector.broadcast %c15_i32_2 : i32 to vector<16x128xi32>
    %176 = arith.cmpi slt, %168, %175 : vector<16x128xi32>
    %c0_i32_3 = arith.constant 0 : i32
    %c8_i32 = arith.constant 8 : i32
    %177 = arith.addi %c0_i32_3, %c8_i32 : i32
    %c1_i32 = arith.constant 1 : i32
    scf.for %arg5 = %c0_i32_3 to %177 step %c1_i32  : i32 {
      %c16_i32 = arith.constant 16 : i32
      %178 = arith.muli %arg5, %c16_i32 : i32
      %179 = tpu.assume_multiple %178, 16 : i32
      %c0_5 = arith.constant 0 : index
      %c0_6 = arith.constant 0 : index
      %180 = arith.index_cast %179 : i32 to index
      %c0_7 = arith.constant 0 : index
      %181 = vector.load %arg2[%c0_5, %c0_6, %180, %c0_7] : memref<1x3x128x128xf32, #tpu.memory_space<vmem>>, vector<1x1x16x128xf32>
      %182 = vector.shape_cast %181 : vector<1x1x16x128xf32> to vector<16x128xf32>
      %c0_8 = arith.constant 0 : index
      %c1_9 = arith.constant 1 : index
      %183 = arith.index_cast %179 : i32 to index
      %c0_10 = arith.constant 0 : index
      %184 = vector.load %arg2[%c0_8, %c1_9, %183, %c0_10] : memref<1x3x128x128xf32, #tpu.memory_space<vmem>>, vector<1x1x16x128xf32>
      %185 = vector.shape_cast %184 : vector<1x1x16x128xf32> to vector<16x128xf32>
      %c0_11 = arith.constant 0 : index
      %c2_12 = arith.constant 2 : index
      %186 = arith.index_cast %179 : i32 to index
      %c0_13 = arith.constant 0 : index
      %187 = vector.load %arg2[%c0_11, %c2_12, %186, %c0_13] : memref<1x3x128x128xf32, #tpu.memory_space<vmem>>, vector<1x1x16x128xf32>
      %188 = vector.shape_cast %187 : vector<1x1x16x128xf32> to vector<16x128xf32>
      %189 = vector.broadcast %0 : f32 to vector<16x128xf32>
      %190 = arith.mulf %182, %189 : vector<16x128xf32>
      %191 = vector.broadcast %1 : f32 to vector<16x128xf32>
      %192 = arith.mulf %185, %191 : vector<16x128xf32>
      %193 = arith.addf %190, %192 : vector<16x128xf32>
      %194 = vector.broadcast %2 : f32 to vector<16x128xf32>
      %195 = arith.mulf %188, %194 : vector<16x128xf32>
      %196 = arith.addf %193, %195 : vector<16x128xf32>
      %197 = vector.broadcast %9 : f32 to vector<16x128xf32>
      %198 = arith.addf %196, %197 : vector<16x128xf32>
      %cst = arith.constant 0.000000e+00 : f32
      %199 = vector.broadcast %cst : f32 to vector<16x128xf32>
      %200 = arith.maximumf %198, %199 : vector<16x128xf32>
      %201 = vector.broadcast %3 : f32 to vector<16x128xf32>
      %202 = arith.mulf %182, %201 : vector<16x128xf32>
      %203 = vector.broadcast %4 : f32 to vector<16x128xf32>
      %204 = arith.mulf %185, %203 : vector<16x128xf32>
      %205 = arith.addf %202, %204 : vector<16x128xf32>
      %206 = vector.broadcast %5 : f32 to vector<16x128xf32>
      %207 = arith.mulf %188, %206 : vector<16x128xf32>
      %208 = arith.addf %205, %207 : vector<16x128xf32>
      %209 = vector.broadcast %10 : f32 to vector<16x128xf32>
      %210 = arith.addf %208, %209 : vector<16x128xf32>
      %cst_14 = arith.constant 0.000000e+00 : f32
      %211 = vector.broadcast %cst_14 : f32 to vector<16x128xf32>
      %212 = arith.maximumf %210, %211 : vector<16x128xf32>
      %213 = vector.broadcast %6 : f32 to vector<16x128xf32>
      %214 = arith.mulf %182, %213 : vector<16x128xf32>
      %215 = vector.broadcast %7 : f32 to vector<16x128xf32>
      %216 = arith.mulf %185, %215 : vector<16x128xf32>
      %217 = arith.addf %214, %216 : vector<16x128xf32>
      %218 = vector.broadcast %8 : f32 to vector<16x128xf32>
      %219 = arith.mulf %188, %218 : vector<16x128xf32>
      %220 = arith.addf %217, %219 : vector<16x128xf32>
      %221 = vector.broadcast %11 : f32 to vector<16x128xf32>
      %222 = arith.addf %220, %221 : vector<16x128xf32>
      %cst_15 = arith.constant 0.000000e+00 : f32
      %223 = vector.broadcast %cst_15 : f32 to vector<16x128xf32>
      %224 = arith.maximumf %222, %223 : vector<16x128xf32>
      %c1_i32_16 = arith.constant 1 : i32
      %225 = tpu.dynamic_rotate %200 by %c1_i32_16 dim 1 : vector<16x128xf32>, i32 -> vector<16x128xf32>
      %cst_17 = arith.constant 0.000000e+00 : f32
      %226 = vector.broadcast %cst_17 : f32 to vector<16x128xf32>
      %227 = arith.select %174, %225, %226 : vector<16x128xi1>, vector<16x128xf32>
      %c127_i32 = arith.constant 127 : i32
      %228 = tpu.dynamic_rotate %200 by %c127_i32 dim 1 : vector<16x128xf32>, i32 -> vector<16x128xf32>
      %cst_18 = arith.constant 0.000000e+00 : f32
      %229 = vector.broadcast %cst_18 : f32 to vector<16x128xf32>
      %230 = arith.select %176, %228, %229 : vector<16x128xi1>, vector<16x128xf32>
      %231 = vector.broadcast %15 : f32 to vector<16x128xf32>
      %232 = arith.mulf %227, %231 : vector<16x128xf32>
      %233 = vector.broadcast %16 : f32 to vector<16x128xf32>
      %234 = arith.mulf %200, %233 : vector<16x128xf32>
      %235 = arith.addf %232, %234 : vector<16x128xf32>
      %236 = vector.broadcast %17 : f32 to vector<16x128xf32>
      %237 = arith.mulf %230, %236 : vector<16x128xf32>
      %238 = arith.addf %235, %237 : vector<16x128xf32>
      %c1_i32_19 = arith.constant 1 : i32
      %239 = tpu.dynamic_rotate %227 by %c1_i32_19 dim 0 : vector<16x128xf32>, i32 -> vector<16x128xf32>
      %cst_20 = arith.constant 0.000000e+00 : f32
      %240 = vector.broadcast %cst_20 : f32 to vector<16x128xf32>
      %241 = arith.select %170, %239, %240 : vector<16x128xi1>, vector<16x128xf32>
      %242 = vector.broadcast %12 : f32 to vector<16x128xf32>
      %243 = arith.mulf %241, %242 : vector<16x128xf32>
      %244 = arith.addf %238, %243 : vector<16x128xf32>
      %c1_i32_21 = arith.constant 1 : i32
      %245 = tpu.dynamic_rotate %200 by %c1_i32_21 dim 0 : vector<16x128xf32>, i32 -> vector<16x128xf32>
      %cst_22 = arith.constant 0.000000e+00 : f32
      %246 = vector.broadcast %cst_22 : f32 to vector<16x128xf32>
      %247 = arith.select %170, %245, %246 : vector<16x128xi1>, vector<16x128xf32>
      %248 = vector.broadcast %13 : f32 to vector<16x128xf32>
      %249 = arith.mulf %247, %248 : vector<16x128xf32>
      %250 = arith.addf %244, %249 : vector<16x128xf32>
      %c1_i32_23 = arith.constant 1 : i32
      %251 = tpu.dynamic_rotate %230 by %c1_i32_23 dim 0 : vector<16x128xf32>, i32 -> vector<16x128xf32>
      %cst_24 = arith.constant 0.000000e+00 : f32
      %252 = vector.broadcast %cst_24 : f32 to vector<16x128xf32>
      %253 = arith.select %170, %251, %252 : vector<16x128xi1>, vector<16x128xf32>
      %254 = vector.broadcast %14 : f32 to vector<16x128xf32>
      %255 = arith.mulf %253, %254 : vector<16x128xf32>
      %256 = arith.addf %250, %255 : vector<16x128xf32>
      %c15_i32_25 = arith.constant 15 : i32
      %257 = tpu.dynamic_rotate %227 by %c15_i32_25 dim 0 : vector<16x128xf32>, i32 -> vector<16x128xf32>
      %cst_26 = arith.constant 0.000000e+00 : f32
      %258 = vector.broadcast %cst_26 : f32 to vector<16x128xf32>
      %259 = arith.select %172, %257, %258 : vector<16x128xi1>, vector<16x128xf32>
      %260 = vector.broadcast %18 : f32 to vector<16x128xf32>
      %261 = arith.mulf %259, %260 : vector<16x128xf32>
      %262 = arith.addf %256, %261 : vector<16x128xf32>
      %c15_i32_27 = arith.constant 15 : i32
      %263 = tpu.dynamic_rotate %200 by %c15_i32_27 dim 0 : vector<16x128xf32>, i32 -> vector<16x128xf32>
      %cst_28 = arith.constant 0.000000e+00 : f32
      %264 = vector.broadcast %cst_28 : f32 to vector<16x128xf32>
      %265 = arith.select %172, %263, %264 : vector<16x128xi1>, vector<16x128xf32>
      %266 = vector.broadcast %19 : f32 to vector<16x128xf32>
      %267 = arith.mulf %265, %266 : vector<16x128xf32>
      %268 = arith.addf %262, %267 : vector<16x128xf32>
      %c15_i32_29 = arith.constant 15 : i32
      %269 = tpu.dynamic_rotate %230 by %c15_i32_29 dim 0 : vector<16x128xf32>, i32 -> vector<16x128xf32>
      %cst_30 = arith.constant 0.000000e+00 : f32
      %270 = vector.broadcast %cst_30 : f32 to vector<16x128xf32>
      %271 = arith.select %172, %269, %270 : vector<16x128xi1>, vector<16x128xf32>
      %272 = vector.broadcast %20 : f32 to vector<16x128xf32>
      %273 = arith.mulf %271, %272 : vector<16x128xf32>
      %274 = arith.addf %268, %273 : vector<16x128xf32>
      %275 = vector.broadcast %39 : f32 to vector<16x128xf32>
      %276 = arith.addf %274, %275 : vector<16x128xf32>
      %cst_31 = arith.constant 0.000000e+00 : f32
      %277 = vector.broadcast %cst_31 : f32 to vector<16x128xf32>
      %278 = arith.maximumf %276, %277 : vector<16x128xf32>
      %c1_i32_32 = arith.constant 1 : i32
      %279 = tpu.dynamic_rotate %212 by %c1_i32_32 dim 1 : vector<16x128xf32>, i32 -> vector<16x128xf32>
      %cst_33 = arith.constant 0.000000e+00 : f32
      %280 = vector.broadcast %cst_33 : f32 to vector<16x128xf32>
      %281 = arith.select %174, %279, %280 : vector<16x128xi1>, vector<16x128xf32>
      %c127_i32_34 = arith.constant 127 : i32
      %282 = tpu.dynamic_rotate %212 by %c127_i32_34 dim 1 : vector<16x128xf32>, i32 -> vector<16x128xf32>
      %cst_35 = arith.constant 0.000000e+00 : f32
      %283 = vector.broadcast %cst_35 : f32 to vector<16x128xf32>
      %284 = arith.select %176, %282, %283 : vector<16x128xi1>, vector<16x128xf32>
      %285 = vector.broadcast %24 : f32 to vector<16x128xf32>
      %286 = arith.mulf %281, %285 : vector<16x128xf32>
      %287 = vector.broadcast %25 : f32 to vector<16x128xf32>
      %288 = arith.mulf %212, %287 : vector<16x128xf32>
      %289 = arith.addf %286, %288 : vector<16x128xf32>
      %290 = vector.broadcast %26 : f32 to vector<16x128xf32>
      %291 = arith.mulf %284, %290 : vector<16x128xf32>
      %292 = arith.addf %289, %291 : vector<16x128xf32>
      %c1_i32_36 = arith.constant 1 : i32
      %293 = tpu.dynamic_rotate %281 by %c1_i32_36 dim 0 : vector<16x128xf32>, i32 -> vector<16x128xf32>
      %cst_37 = arith.constant 0.000000e+00 : f32
      %294 = vector.broadcast %cst_37 : f32 to vector<16x128xf32>
      %295 = arith.select %170, %293, %294 : vector<16x128xi1>, vector<16x128xf32>
      %296 = vector.broadcast %21 : f32 to vector<16x128xf32>
      %297 = arith.mulf %295, %296 : vector<16x128xf32>
      %298 = arith.addf %292, %297 : vector<16x128xf32>
      %c1_i32_38 = arith.constant 1 : i32
      %299 = tpu.dynamic_rotate %212 by %c1_i32_38 dim 0 : vector<16x128xf32>, i32 -> vector<16x128xf32>
      %cst_39 = arith.constant 0.000000e+00 : f32
      %300 = vector.broadcast %cst_39 : f32 to vector<16x128xf32>
      %301 = arith.select %170, %299, %300 : vector<16x128xi1>, vector<16x128xf32>
      %302 = vector.broadcast %22 : f32 to vector<16x128xf32>
      %303 = arith.mulf %301, %302 : vector<16x128xf32>
      %304 = arith.addf %298, %303 : vector<16x128xf32>
      %c1_i32_40 = arith.constant 1 : i32
      %305 = tpu.dynamic_rotate %284 by %c1_i32_40 dim 0 : vector<16x128xf32>, i32 -> vector<16x128xf32>
      %cst_41 = arith.constant 0.000000e+00 : f32
      %306 = vector.broadcast %cst_41 : f32 to vector<16x128xf32>
      %307 = arith.select %170, %305, %306 : vector<16x128xi1>, vector<16x128xf32>
      %308 = vector.broadcast %23 : f32 to vector<16x128xf32>
      %309 = arith.mulf %307, %308 : vector<16x128xf32>
      %310 = arith.addf %304, %309 : vector<16x128xf32>
      %c15_i32_42 = arith.constant 15 : i32
      %311 = tpu.dynamic_rotate %281 by %c15_i32_42 dim 0 : vector<16x128xf32>, i32 -> vector<16x128xf32>
      %cst_43 = arith.constant 0.000000e+00 : f32
      %312 = vector.broadcast %cst_43 : f32 to vector<16x128xf32>
      %313 = arith.select %172, %311, %312 : vector<16x128xi1>, vector<16x128xf32>
      %314 = vector.broadcast %27 : f32 to vector<16x128xf32>
      %315 = arith.mulf %313, %314 : vector<16x128xf32>
      %316 = arith.addf %310, %315 : vector<16x128xf32>
      %c15_i32_44 = arith.constant 15 : i32
      %317 = tpu.dynamic_rotate %212 by %c15_i32_44 dim 0 : vector<16x128xf32>, i32 -> vector<16x128xf32>
      %cst_45 = arith.constant 0.000000e+00 : f32
      %318 = vector.broadcast %cst_45 : f32 to vector<16x128xf32>
      %319 = arith.select %172, %317, %318 : vector<16x128xi1>, vector<16x128xf32>
      %320 = vector.broadcast %28 : f32 to vector<16x128xf32>
      %321 = arith.mulf %319, %320 : vector<16x128xf32>
      %322 = arith.addf %316, %321 : vector<16x128xf32>
      %c15_i32_46 = arith.constant 15 : i32
      %323 = tpu.dynamic_rotate %284 by %c15_i32_46 dim 0 : vector<16x128xf32>, i32 -> vector<16x128xf32>
      %cst_47 = arith.constant 0.000000e+00 : f32
      %324 = vector.broadcast %cst_47 : f32 to vector<16x128xf32>
      %325 = arith.select %172, %323, %324 : vector<16x128xi1>, vector<16x128xf32>
      %326 = vector.broadcast %29 : f32 to vector<16x128xf32>
      %327 = arith.mulf %325, %326 : vector<16x128xf32>
      %328 = arith.addf %322, %327 : vector<16x128xf32>
      %329 = vector.broadcast %40 : f32 to vector<16x128xf32>
      %330 = arith.addf %328, %329 : vector<16x128xf32>
      %cst_48 = arith.constant 0.000000e+00 : f32
      %331 = vector.broadcast %cst_48 : f32 to vector<16x128xf32>
      %332 = arith.maximumf %330, %331 : vector<16x128xf32>
      %c1_i32_49 = arith.constant 1 : i32
      %333 = tpu.dynamic_rotate %224 by %c1_i32_49 dim 1 : vector<16x128xf32>, i32 -> vector<16x128xf32>
      %cst_50 = arith.constant 0.000000e+00 : f32
      %334 = vector.broadcast %cst_50 : f32 to vector<16x128xf32>
      %335 = arith.select %174, %333, %334 : vector<16x128xi1>, vector<16x128xf32>
      %c127_i32_51 = arith.constant 127 : i32
      %336 = tpu.dynamic_rotate %224 by %c127_i32_51 dim 1 : vector<16x128xf32>, i32 -> vector<16x128xf32>
      %cst_52 = arith.constant 0.000000e+00 : f32
      %337 = vector.broadcast %cst_52 : f32 to vector<16x128xf32>
      %338 = arith.select %176, %336, %337 : vector<16x128xi1>, vector<16x128xf32>
      %339 = vector.broadcast %33 : f32 to vector<16x128xf32>
      %340 = arith.mulf %335, %339 : vector<16x128xf32>
      %341 = vector.broadcast %34 : f32 to vector<16x128xf32>
      %342 = arith.mulf %224, %341 : vector<16x128xf32>
      %343 = arith.addf %340, %342 : vector<16x128xf32>
      %344 = vector.broadcast %35 : f32 to vector<16x128xf32>
      %345 = arith.mulf %338, %344 : vector<16x128xf32>
      %346 = arith.addf %343, %345 : vector<16x128xf32>
      %c1_i32_53 = arith.constant 1 : i32
      %347 = tpu.dynamic_rotate %335 by %c1_i32_53 dim 0 : vector<16x128xf32>, i32 -> vector<16x128xf32>
      %cst_54 = arith.constant 0.000000e+00 : f32
      %348 = vector.broadcast %cst_54 : f32 to vector<16x128xf32>
      %349 = arith.select %170, %347, %348 : vector<16x128xi1>, vector<16x128xf32>
      %350 = vector.broadcast %30 : f32 to vector<16x128xf32>
      %351 = arith.mulf %349, %350 : vector<16x128xf32>
      %352 = arith.addf %346, %351 : vector<16x128xf32>
      %c1_i32_55 = arith.constant 1 : i32
      %353 = tpu.dynamic_rotate %224 by %c1_i32_55 dim 0 : vector<16x128xf32>, i32 -> vector<16x128xf32>
      %cst_56 = arith.constant 0.000000e+00 : f32
      %354 = vector.broadcast %cst_56 : f32 to vector<16x128xf32>
      %355 = arith.select %170, %353, %354 : vector<16x128xi1>, vector<16x128xf32>
      %356 = vector.broadcast %31 : f32 to vector<16x128xf32>
      %357 = arith.mulf %355, %356 : vector<16x128xf32>
      %358 = arith.addf %352, %357 : vector<16x128xf32>
      %c1_i32_57 = arith.constant 1 : i32
      %359 = tpu.dynamic_rotate %338 by %c1_i32_57 dim 0 : vector<16x128xf32>, i32 -> vector<16x128xf32>
      %cst_58 = arith.constant 0.000000e+00 : f32
      %360 = vector.broadcast %cst_58 : f32 to vector<16x128xf32>
      %361 = arith.select %170, %359, %360 : vector<16x128xi1>, vector<16x128xf32>
      %362 = vector.broadcast %32 : f32 to vector<16x128xf32>
      %363 = arith.mulf %361, %362 : vector<16x128xf32>
      %364 = arith.addf %358, %363 : vector<16x128xf32>
      %c15_i32_59 = arith.constant 15 : i32
      %365 = tpu.dynamic_rotate %335 by %c15_i32_59 dim 0 : vector<16x128xf32>, i32 -> vector<16x128xf32>
      %cst_60 = arith.constant 0.000000e+00 : f32
      %366 = vector.broadcast %cst_60 : f32 to vector<16x128xf32>
      %367 = arith.select %172, %365, %366 : vector<16x128xi1>, vector<16x128xf32>
      %368 = vector.broadcast %36 : f32 to vector<16x128xf32>
      %369 = arith.mulf %367, %368 : vector<16x128xf32>
      %370 = arith.addf %364, %369 : vector<16x128xf32>
      %c15_i32_61 = arith.constant 15 : i32
      %371 = tpu.dynamic_rotate %224 by %c15_i32_61 dim 0 : vector<16x128xf32>, i32 -> vector<16x128xf32>
      %cst_62 = arith.constant 0.000000e+00 : f32
      %372 = vector.broadcast %cst_62 : f32 to vector<16x128xf32>
      %373 = arith.select %172, %371, %372 : vector<16x128xi1>, vector<16x128xf32>
      %374 = vector.broadcast %37 : f32 to vector<16x128xf32>
      %375 = arith.mulf %373, %374 : vector<16x128xf32>
      %376 = arith.addf %370, %375 : vector<16x128xf32>
      %c15_i32_63 = arith.constant 15 : i32
      %377 = tpu.dynamic_rotate %338 by %c15_i32_63 dim 0 : vector<16x128xf32>, i32 -> vector<16x128xf32>
      %cst_64 = arith.constant 0.000000e+00 : f32
      %378 = vector.broadcast %cst_64 : f32 to vector<16x128xf32>
      %379 = arith.select %172, %377, %378 : vector<16x128xi1>, vector<16x128xf32>
      %380 = vector.broadcast %38 : f32 to vector<16x128xf32>
      %381 = arith.mulf %379, %380 : vector<16x128xf32>
      %382 = arith.addf %376, %381 : vector<16x128xf32>
      %383 = vector.broadcast %41 : f32 to vector<16x128xf32>
      %384 = arith.addf %382, %383 : vector<16x128xf32>
      %cst_65 = arith.constant 0.000000e+00 : f32
      %385 = vector.broadcast %cst_65 : f32 to vector<16x128xf32>
      %386 = arith.maximumf %384, %385 : vector<16x128xf32>
      %387 = vector.broadcast %42 : f32 to vector<16x128xf32>
      %388 = arith.mulf %278, %387 : vector<16x128xf32>
      %389 = vector.broadcast %43 : f32 to vector<16x128xf32>
      %390 = arith.mulf %332, %389 : vector<16x128xf32>
      %391 = arith.addf %388, %390 : vector<16x128xf32>
      %392 = vector.broadcast %44 : f32 to vector<16x128xf32>
      %393 = arith.mulf %386, %392 : vector<16x128xf32>
      %394 = arith.addf %391, %393 : vector<16x128xf32>
      %395 = vector.broadcast %51 : f32 to vector<16x128xf32>
      %396 = arith.addf %394, %395 : vector<16x128xf32>
      %397 = arith.addf %396, %182 : vector<16x128xf32>
      %cst_66 = arith.constant 0.000000e+00 : f32
      %398 = vector.broadcast %cst_66 : f32 to vector<16x128xf32>
      %399 = arith.maximumf %397, %398 : vector<16x128xf32>
      %400 = vector.broadcast %45 : f32 to vector<16x128xf32>
      %401 = arith.mulf %278, %400 : vector<16x128xf32>
      %402 = vector.broadcast %46 : f32 to vector<16x128xf32>
      %403 = arith.mulf %332, %402 : vector<16x128xf32>
      %404 = arith.addf %401, %403 : vector<16x128xf32>
      %405 = vector.broadcast %47 : f32 to vector<16x128xf32>
      %406 = arith.mulf %386, %405 : vector<16x128xf32>
      %407 = arith.addf %404, %406 : vector<16x128xf32>
      %408 = vector.broadcast %52 : f32 to vector<16x128xf32>
      %409 = arith.addf %407, %408 : vector<16x128xf32>
      %410 = arith.addf %409, %185 : vector<16x128xf32>
      %cst_67 = arith.constant 0.000000e+00 : f32
      %411 = vector.broadcast %cst_67 : f32 to vector<16x128xf32>
      %412 = arith.maximumf %410, %411 : vector<16x128xf32>
      %413 = vector.broadcast %48 : f32 to vector<16x128xf32>
      %414 = arith.mulf %278, %413 : vector<16x128xf32>
      %415 = vector.broadcast %49 : f32 to vector<16x128xf32>
      %416 = arith.mulf %332, %415 : vector<16x128xf32>
      %417 = arith.addf %414, %416 : vector<16x128xf32>
      %418 = vector.broadcast %50 : f32 to vector<16x128xf32>
      %419 = arith.mulf %386, %418 : vector<16x128xf32>
      %420 = arith.addf %417, %419 : vector<16x128xf32>
      %421 = vector.broadcast %53 : f32 to vector<16x128xf32>
      %422 = arith.addf %420, %421 : vector<16x128xf32>
      %423 = arith.addf %422, %188 : vector<16x128xf32>
      %cst_68 = arith.constant 0.000000e+00 : f32
      %424 = vector.broadcast %cst_68 : f32 to vector<16x128xf32>
      %425 = arith.maximumf %423, %424 : vector<16x128xf32>
      %426 = vector.broadcast %54 : f32 to vector<16x128xf32>
      %427 = arith.mulf %399, %426 : vector<16x128xf32>
      %428 = vector.broadcast %55 : f32 to vector<16x128xf32>
      %429 = arith.mulf %412, %428 : vector<16x128xf32>
      %430 = arith.addf %427, %429 : vector<16x128xf32>
      %431 = vector.broadcast %56 : f32 to vector<16x128xf32>
      %432 = arith.mulf %425, %431 : vector<16x128xf32>
      %433 = arith.addf %430, %432 : vector<16x128xf32>
      %434 = vector.broadcast %63 : f32 to vector<16x128xf32>
      %435 = arith.addf %433, %434 : vector<16x128xf32>
      %cst_69 = arith.constant 0.000000e+00 : f32
      %436 = vector.broadcast %cst_69 : f32 to vector<16x128xf32>
      %437 = arith.maximumf %435, %436 : vector<16x128xf32>
      %438 = vector.broadcast %57 : f32 to vector<16x128xf32>
      %439 = arith.mulf %399, %438 : vector<16x128xf32>
      %440 = vector.broadcast %58 : f32 to vector<16x128xf32>
      %441 = arith.mulf %412, %440 : vector<16x128xf32>
      %442 = arith.addf %439, %441 : vector<16x128xf32>
      %443 = vector.broadcast %59 : f32 to vector<16x128xf32>
      %444 = arith.mulf %425, %443 : vector<16x128xf32>
      %445 = arith.addf %442, %444 : vector<16x128xf32>
      %446 = vector.broadcast %64 : f32 to vector<16x128xf32>
      %447 = arith.addf %445, %446 : vector<16x128xf32>
      %cst_70 = arith.constant 0.000000e+00 : f32
      %448 = vector.broadcast %cst_70 : f32 to vector<16x128xf32>
      %449 = arith.maximumf %447, %448 : vector<16x128xf32>
      %450 = vector.broadcast %60 : f32 to vector<16x128xf32>
      %451 = arith.mulf %399, %450 : vector<16x128xf32>
      %452 = vector.broadcast %61 : f32 to vector<16x128xf32>
      %453 = arith.mulf %412, %452 : vector<16x128xf32>
      %454 = arith.addf %451, %453 : vector<16x128xf32>
      %455 = vector.broadcast %62 : f32 to vector<16x128xf32>
      %456 = arith.mulf %425, %455 : vector<16x128xf32>
      %457 = arith.addf %454, %456 : vector<16x128xf32>
      %458 = vector.broadcast %65 : f32 to vector<16x128xf32>
      %459 = arith.addf %457, %458 : vector<16x128xf32>
      %cst_71 = arith.constant 0.000000e+00 : f32
      %460 = vector.broadcast %cst_71 : f32 to vector<16x128xf32>
      %461 = arith.maximumf %459, %460 : vector<16x128xf32>
      %c1_i32_72 = arith.constant 1 : i32
      %462 = tpu.dynamic_rotate %437 by %c1_i32_72 dim 1 : vector<16x128xf32>, i32 -> vector<16x128xf32>
      %cst_73 = arith.constant 0.000000e+00 : f32
      %463 = vector.broadcast %cst_73 : f32 to vector<16x128xf32>
      %464 = arith.select %174, %462, %463 : vector<16x128xi1>, vector<16x128xf32>
      %c127_i32_74 = arith.constant 127 : i32
      %465 = tpu.dynamic_rotate %437 by %c127_i32_74 dim 1 : vector<16x128xf32>, i32 -> vector<16x128xf32>
      %cst_75 = arith.constant 0.000000e+00 : f32
      %466 = vector.broadcast %cst_75 : f32 to vector<16x128xf32>
      %467 = arith.select %176, %465, %466 : vector<16x128xi1>, vector<16x128xf32>
      %468 = vector.broadcast %69 : f32 to vector<16x128xf32>
      %469 = arith.mulf %464, %468 : vector<16x128xf32>
      %470 = vector.broadcast %70 : f32 to vector<16x128xf32>
      %471 = arith.mulf %437, %470 : vector<16x128xf32>
      %472 = arith.addf %469, %471 : vector<16x128xf32>
      %473 = vector.broadcast %71 : f32 to vector<16x128xf32>
      %474 = arith.mulf %467, %473 : vector<16x128xf32>
      %475 = arith.addf %472, %474 : vector<16x128xf32>
      %c1_i32_76 = arith.constant 1 : i32
      %476 = tpu.dynamic_rotate %464 by %c1_i32_76 dim 0 : vector<16x128xf32>, i32 -> vector<16x128xf32>
      %cst_77 = arith.constant 0.000000e+00 : f32
      %477 = vector.broadcast %cst_77 : f32 to vector<16x128xf32>
      %478 = arith.select %170, %476, %477 : vector<16x128xi1>, vector<16x128xf32>
      %479 = vector.broadcast %66 : f32 to vector<16x128xf32>
      %480 = arith.mulf %478, %479 : vector<16x128xf32>
      %481 = arith.addf %475, %480 : vector<16x128xf32>
      %c1_i32_78 = arith.constant 1 : i32
      %482 = tpu.dynamic_rotate %437 by %c1_i32_78 dim 0 : vector<16x128xf32>, i32 -> vector<16x128xf32>
      %cst_79 = arith.constant 0.000000e+00 : f32
      %483 = vector.broadcast %cst_79 : f32 to vector<16x128xf32>
      %484 = arith.select %170, %482, %483 : vector<16x128xi1>, vector<16x128xf32>
      %485 = vector.broadcast %67 : f32 to vector<16x128xf32>
      %486 = arith.mulf %484, %485 : vector<16x128xf32>
      %487 = arith.addf %481, %486 : vector<16x128xf32>
      %c1_i32_80 = arith.constant 1 : i32
      %488 = tpu.dynamic_rotate %467 by %c1_i32_80 dim 0 : vector<16x128xf32>, i32 -> vector<16x128xf32>
      %cst_81 = arith.constant 0.000000e+00 : f32
      %489 = vector.broadcast %cst_81 : f32 to vector<16x128xf32>
      %490 = arith.select %170, %488, %489 : vector<16x128xi1>, vector<16x128xf32>
      %491 = vector.broadcast %68 : f32 to vector<16x128xf32>
      %492 = arith.mulf %490, %491 : vector<16x128xf32>
      %493 = arith.addf %487, %492 : vector<16x128xf32>
      %c15_i32_82 = arith.constant 15 : i32
      %494 = tpu.dynamic_rotate %464 by %c15_i32_82 dim 0 : vector<16x128xf32>, i32 -> vector<16x128xf32>
      %cst_83 = arith.constant 0.000000e+00 : f32
      %495 = vector.broadcast %cst_83 : f32 to vector<16x128xf32>
      %496 = arith.select %172, %494, %495 : vector<16x128xi1>, vector<16x128xf32>
      %497 = vector.broadcast %72 : f32 to vector<16x128xf32>
      %498 = arith.mulf %496, %497 : vector<16x128xf32>
      %499 = arith.addf %493, %498 : vector<16x128xf32>
      %c15_i32_84 = arith.constant 15 : i32
      %500 = tpu.dynamic_rotate %437 by %c15_i32_84 dim 0 : vector<16x128xf32>, i32 -> vector<16x128xf32>
      %cst_85 = arith.constant 0.000000e+00 : f32
      %501 = vector.broadcast %cst_85 : f32 to vector<16x128xf32>
      %502 = arith.select %172, %500, %501 : vector<16x128xi1>, vector<16x128xf32>
      %503 = vector.broadcast %73 : f32 to vector<16x128xf32>
      %504 = arith.mulf %502, %503 : vector<16x128xf32>
      %505 = arith.addf %499, %504 : vector<16x128xf32>
      %c15_i32_86 = arith.constant 15 : i32
      %506 = tpu.dynamic_rotate %467 by %c15_i32_86 dim 0 : vector<16x128xf32>, i32 -> vector<16x128xf32>
      %cst_87 = arith.constant 0.000000e+00 : f32
      %507 = vector.broadcast %cst_87 : f32 to vector<16x128xf32>
      %508 = arith.select %172, %506, %507 : vector<16x128xi1>, vector<16x128xf32>
      %509 = vector.broadcast %74 : f32 to vector<16x128xf32>
      %510 = arith.mulf %508, %509 : vector<16x128xf32>
      %511 = arith.addf %505, %510 : vector<16x128xf32>
      %512 = vector.broadcast %93 : f32 to vector<16x128xf32>
      %513 = arith.addf %511, %512 : vector<16x128xf32>
      %cst_88 = arith.constant 0.000000e+00 : f32
      %514 = vector.broadcast %cst_88 : f32 to vector<16x128xf32>
      %515 = arith.maximumf %513, %514 : vector<16x128xf32>
      %c1_i32_89 = arith.constant 1 : i32
      %516 = tpu.dynamic_rotate %449 by %c1_i32_89 dim 1 : vector<16x128xf32>, i32 -> vector<16x128xf32>
      %cst_90 = arith.constant 0.000000e+00 : f32
      %517 = vector.broadcast %cst_90 : f32 to vector<16x128xf32>
      %518 = arith.select %174, %516, %517 : vector<16x128xi1>, vector<16x128xf32>
      %c127_i32_91 = arith.constant 127 : i32
      %519 = tpu.dynamic_rotate %449 by %c127_i32_91 dim 1 : vector<16x128xf32>, i32 -> vector<16x128xf32>
      %cst_92 = arith.constant 0.000000e+00 : f32
      %520 = vector.broadcast %cst_92 : f32 to vector<16x128xf32>
      %521 = arith.select %176, %519, %520 : vector<16x128xi1>, vector<16x128xf32>
      %522 = vector.broadcast %78 : f32 to vector<16x128xf32>
      %523 = arith.mulf %518, %522 : vector<16x128xf32>
      %524 = vector.broadcast %79 : f32 to vector<16x128xf32>
      %525 = arith.mulf %449, %524 : vector<16x128xf32>
      %526 = arith.addf %523, %525 : vector<16x128xf32>
      %527 = vector.broadcast %80 : f32 to vector<16x128xf32>
      %528 = arith.mulf %521, %527 : vector<16x128xf32>
      %529 = arith.addf %526, %528 : vector<16x128xf32>
      %c1_i32_93 = arith.constant 1 : i32
      %530 = tpu.dynamic_rotate %518 by %c1_i32_93 dim 0 : vector<16x128xf32>, i32 -> vector<16x128xf32>
      %cst_94 = arith.constant 0.000000e+00 : f32
      %531 = vector.broadcast %cst_94 : f32 to vector<16x128xf32>
      %532 = arith.select %170, %530, %531 : vector<16x128xi1>, vector<16x128xf32>
      %533 = vector.broadcast %75 : f32 to vector<16x128xf32>
      %534 = arith.mulf %532, %533 : vector<16x128xf32>
      %535 = arith.addf %529, %534 : vector<16x128xf32>
      %c1_i32_95 = arith.constant 1 : i32
      %536 = tpu.dynamic_rotate %449 by %c1_i32_95 dim 0 : vector<16x128xf32>, i32 -> vector<16x128xf32>
      %cst_96 = arith.constant 0.000000e+00 : f32
      %537 = vector.broadcast %cst_96 : f32 to vector<16x128xf32>
      %538 = arith.select %170, %536, %537 : vector<16x128xi1>, vector<16x128xf32>
      %539 = vector.broadcast %76 : f32 to vector<16x128xf32>
      %540 = arith.mulf %538, %539 : vector<16x128xf32>
      %541 = arith.addf %535, %540 : vector<16x128xf32>
      %c1_i32_97 = arith.constant 1 : i32
      %542 = tpu.dynamic_rotate %521 by %c1_i32_97 dim 0 : vector<16x128xf32>, i32 -> vector<16x128xf32>
      %cst_98 = arith.constant 0.000000e+00 : f32
      %543 = vector.broadcast %cst_98 : f32 to vector<16x128xf32>
      %544 = arith.select %170, %542, %543 : vector<16x128xi1>, vector<16x128xf32>
      %545 = vector.broadcast %77 : f32 to vector<16x128xf32>
      %546 = arith.mulf %544, %545 : vector<16x128xf32>
      %547 = arith.addf %541, %546 : vector<16x128xf32>
      %c15_i32_99 = arith.constant 15 : i32
      %548 = tpu.dynamic_rotate %518 by %c15_i32_99 dim 0 : vector<16x128xf32>, i32 -> vector<16x128xf32>
      %cst_100 = arith.constant 0.000000e+00 : f32
      %549 = vector.broadcast %cst_100 : f32 to vector<16x128xf32>
      %550 = arith.select %172, %548, %549 : vector<16x128xi1>, vector<16x128xf32>
      %551 = vector.broadcast %81 : f32 to vector<16x128xf32>
      %552 = arith.mulf %550, %551 : vector<16x128xf32>
      %553 = arith.addf %547, %552 : vector<16x128xf32>
      %c15_i32_101 = arith.constant 15 : i32
      %554 = tpu.dynamic_rotate %449 by %c15_i32_101 dim 0 : vector<16x128xf32>, i32 -> vector<16x128xf32>
      %cst_102 = arith.constant 0.000000e+00 : f32
      %555 = vector.broadcast %cst_102 : f32 to vector<16x128xf32>
      %556 = arith.select %172, %554, %555 : vector<16x128xi1>, vector<16x128xf32>
      %557 = vector.broadcast %82 : f32 to vector<16x128xf32>
      %558 = arith.mulf %556, %557 : vector<16x128xf32>
      %559 = arith.addf %553, %558 : vector<16x128xf32>
      %c15_i32_103 = arith.constant 15 : i32
      %560 = tpu.dynamic_rotate %521 by %c15_i32_103 dim 0 : vector<16x128xf32>, i32 -> vector<16x128xf32>
      %cst_104 = arith.constant 0.000000e+00 : f32
      %561 = vector.broadcast %cst_104 : f32 to vector<16x128xf32>
      %562 = arith.select %172, %560, %561 : vector<16x128xi1>, vector<16x128xf32>
      %563 = vector.broadcast %83 : f32 to vector<16x128xf32>
      %564 = arith.mulf %562, %563 : vector<16x128xf32>
      %565 = arith.addf %559, %564 : vector<16x128xf32>
      %566 = vector.broadcast %94 : f32 to vector<16x128xf32>
      %567 = arith.addf %565, %566 : vector<16x128xf32>
      %cst_105 = arith.constant 0.000000e+00 : f32
      %568 = vector.broadcast %cst_105 : f32 to vector<16x128xf32>
      %569 = arith.maximumf %567, %568 : vector<16x128xf32>
      %c1_i32_106 = arith.constant 1 : i32
      %570 = tpu.dynamic_rotate %461 by %c1_i32_106 dim 1 : vector<16x128xf32>, i32 -> vector<16x128xf32>
      %cst_107 = arith.constant 0.000000e+00 : f32
      %571 = vector.broadcast %cst_107 : f32 to vector<16x128xf32>
      %572 = arith.select %174, %570, %571 : vector<16x128xi1>, vector<16x128xf32>
      %c127_i32_108 = arith.constant 127 : i32
      %573 = tpu.dynamic_rotate %461 by %c127_i32_108 dim 1 : vector<16x128xf32>, i32 -> vector<16x128xf32>
      %cst_109 = arith.constant 0.000000e+00 : f32
      %574 = vector.broadcast %cst_109 : f32 to vector<16x128xf32>
      %575 = arith.select %176, %573, %574 : vector<16x128xi1>, vector<16x128xf32>
      %576 = vector.broadcast %87 : f32 to vector<16x128xf32>
      %577 = arith.mulf %572, %576 : vector<16x128xf32>
      %578 = vector.broadcast %88 : f32 to vector<16x128xf32>
      %579 = arith.mulf %461, %578 : vector<16x128xf32>
      %580 = arith.addf %577, %579 : vector<16x128xf32>
      %581 = vector.broadcast %89 : f32 to vector<16x128xf32>
      %582 = arith.mulf %575, %581 : vector<16x128xf32>
      %583 = arith.addf %580, %582 : vector<16x128xf32>
      %c1_i32_110 = arith.constant 1 : i32
      %584 = tpu.dynamic_rotate %572 by %c1_i32_110 dim 0 : vector<16x128xf32>, i32 -> vector<16x128xf32>
      %cst_111 = arith.constant 0.000000e+00 : f32
      %585 = vector.broadcast %cst_111 : f32 to vector<16x128xf32>
      %586 = arith.select %170, %584, %585 : vector<16x128xi1>, vector<16x128xf32>
      %587 = vector.broadcast %84 : f32 to vector<16x128xf32>
      %588 = arith.mulf %586, %587 : vector<16x128xf32>
      %589 = arith.addf %583, %588 : vector<16x128xf32>
      %c1_i32_112 = arith.constant 1 : i32
      %590 = tpu.dynamic_rotate %461 by %c1_i32_112 dim 0 : vector<16x128xf32>, i32 -> vector<16x128xf32>
      %cst_113 = arith.constant 0.000000e+00 : f32
      %591 = vector.broadcast %cst_113 : f32 to vector<16x128xf32>
      %592 = arith.select %170, %590, %591 : vector<16x128xi1>, vector<16x128xf32>
      %593 = vector.broadcast %85 : f32 to vector<16x128xf32>
      %594 = arith.mulf %592, %593 : vector<16x128xf32>
      %595 = arith.addf %589, %594 : vector<16x128xf32>
      %c1_i32_114 = arith.constant 1 : i32
      %596 = tpu.dynamic_rotate %575 by %c1_i32_114 dim 0 : vector<16x128xf32>, i32 -> vector<16x128xf32>
      %cst_115 = arith.constant 0.000000e+00 : f32
      %597 = vector.broadcast %cst_115 : f32 to vector<16x128xf32>
      %598 = arith.select %170, %596, %597 : vector<16x128xi1>, vector<16x128xf32>
      %599 = vector.broadcast %86 : f32 to vector<16x128xf32>
      %600 = arith.mulf %598, %599 : vector<16x128xf32>
      %601 = arith.addf %595, %600 : vector<16x128xf32>
      %c15_i32_116 = arith.constant 15 : i32
      %602 = tpu.dynamic_rotate %572 by %c15_i32_116 dim 0 : vector<16x128xf32>, i32 -> vector<16x128xf32>
      %cst_117 = arith.constant 0.000000e+00 : f32
      %603 = vector.broadcast %cst_117 : f32 to vector<16x128xf32>
      %604 = arith.select %172, %602, %603 : vector<16x128xi1>, vector<16x128xf32>
      %605 = vector.broadcast %90 : f32 to vector<16x128xf32>
      %606 = arith.mulf %604, %605 : vector<16x128xf32>
      %607 = arith.addf %601, %606 : vector<16x128xf32>
      %c15_i32_118 = arith.constant 15 : i32
      %608 = tpu.dynamic_rotate %461 by %c15_i32_118 dim 0 : vector<16x128xf32>, i32 -> vector<16x128xf32>
      %cst_119 = arith.constant 0.000000e+00 : f32
      %609 = vector.broadcast %cst_119 : f32 to vector<16x128xf32>
      %610 = arith.select %172, %608, %609 : vector<16x128xi1>, vector<16x128xf32>
      %611 = vector.broadcast %91 : f32 to vector<16x128xf32>
      %612 = arith.mulf %610, %611 : vector<16x128xf32>
      %613 = arith.addf %607, %612 : vector<16x128xf32>
      %c15_i32_120 = arith.constant 15 : i32
      %614 = tpu.dynamic_rotate %575 by %c15_i32_120 dim 0 : vector<16x128xf32>, i32 -> vector<16x128xf32>
      %cst_121 = arith.constant 0.000000e+00 : f32
      %615 = vector.broadcast %cst_121 : f32 to vector<16x128xf32>
      %616 = arith.select %172, %614, %615 : vector<16x128xi1>, vector<16x128xf32>
      %617 = vector.broadcast %92 : f32 to vector<16x128xf32>
      %618 = arith.mulf %616, %617 : vector<16x128xf32>
      %619 = arith.addf %613, %618 : vector<16x128xf32>
      %620 = vector.broadcast %95 : f32 to vector<16x128xf32>
      %621 = arith.addf %619, %620 : vector<16x128xf32>
      %cst_122 = arith.constant 0.000000e+00 : f32
      %622 = vector.broadcast %cst_122 : f32 to vector<16x128xf32>
      %623 = arith.maximumf %621, %622 : vector<16x128xf32>
      %624 = vector.broadcast %96 : f32 to vector<16x128xf32>
      %625 = arith.mulf %515, %624 : vector<16x128xf32>
      %626 = vector.broadcast %97 : f32 to vector<16x128xf32>
      %627 = arith.mulf %569, %626 : vector<16x128xf32>
      %628 = arith.addf %625, %627 : vector<16x128xf32>
      %629 = vector.broadcast %98 : f32 to vector<16x128xf32>
      %630 = arith.mulf %623, %629 : vector<16x128xf32>
      %631 = arith.addf %628, %630 : vector<16x128xf32>
      %632 = vector.broadcast %105 : f32 to vector<16x128xf32>
      %633 = arith.addf %631, %632 : vector<16x128xf32>
      %634 = arith.addf %633, %399 : vector<16x128xf32>
      %cst_123 = arith.constant 0.000000e+00 : f32
      %635 = vector.broadcast %cst_123 : f32 to vector<16x128xf32>
      %636 = arith.maximumf %634, %635 : vector<16x128xf32>
      %637 = vector.broadcast %99 : f32 to vector<16x128xf32>
      %638 = arith.mulf %515, %637 : vector<16x128xf32>
      %639 = vector.broadcast %100 : f32 to vector<16x128xf32>
      %640 = arith.mulf %569, %639 : vector<16x128xf32>
      %641 = arith.addf %638, %640 : vector<16x128xf32>
      %642 = vector.broadcast %101 : f32 to vector<16x128xf32>
      %643 = arith.mulf %623, %642 : vector<16x128xf32>
      %644 = arith.addf %641, %643 : vector<16x128xf32>
      %645 = vector.broadcast %106 : f32 to vector<16x128xf32>
      %646 = arith.addf %644, %645 : vector<16x128xf32>
      %647 = arith.addf %646, %412 : vector<16x128xf32>
      %cst_124 = arith.constant 0.000000e+00 : f32
      %648 = vector.broadcast %cst_124 : f32 to vector<16x128xf32>
      %649 = arith.maximumf %647, %648 : vector<16x128xf32>
      %650 = vector.broadcast %102 : f32 to vector<16x128xf32>
      %651 = arith.mulf %515, %650 : vector<16x128xf32>
      %652 = vector.broadcast %103 : f32 to vector<16x128xf32>
      %653 = arith.mulf %569, %652 : vector<16x128xf32>
      %654 = arith.addf %651, %653 : vector<16x128xf32>
      %655 = vector.broadcast %104 : f32 to vector<16x128xf32>
      %656 = arith.mulf %623, %655 : vector<16x128xf32>
      %657 = arith.addf %654, %656 : vector<16x128xf32>
      %658 = vector.broadcast %107 : f32 to vector<16x128xf32>
      %659 = arith.addf %657, %658 : vector<16x128xf32>
      %660 = arith.addf %659, %425 : vector<16x128xf32>
      %cst_125 = arith.constant 0.000000e+00 : f32
      %661 = vector.broadcast %cst_125 : f32 to vector<16x128xf32>
      %662 = arith.maximumf %660, %661 : vector<16x128xf32>
      %663 = vector.broadcast %108 : f32 to vector<16x128xf32>
      %664 = arith.mulf %636, %663 : vector<16x128xf32>
      %665 = vector.broadcast %109 : f32 to vector<16x128xf32>
      %666 = arith.mulf %649, %665 : vector<16x128xf32>
      %667 = arith.addf %664, %666 : vector<16x128xf32>
      %668 = vector.broadcast %110 : f32 to vector<16x128xf32>
      %669 = arith.mulf %662, %668 : vector<16x128xf32>
      %670 = arith.addf %667, %669 : vector<16x128xf32>
      %671 = vector.broadcast %117 : f32 to vector<16x128xf32>
      %672 = arith.addf %670, %671 : vector<16x128xf32>
      %cst_126 = arith.constant 0.000000e+00 : f32
      %673 = vector.broadcast %cst_126 : f32 to vector<16x128xf32>
      %674 = arith.maximumf %672, %673 : vector<16x128xf32>
      %675 = vector.broadcast %111 : f32 to vector<16x128xf32>
      %676 = arith.mulf %636, %675 : vector<16x128xf32>
      %677 = vector.broadcast %112 : f32 to vector<16x128xf32>
      %678 = arith.mulf %649, %677 : vector<16x128xf32>
      %679 = arith.addf %676, %678 : vector<16x128xf32>
      %680 = vector.broadcast %113 : f32 to vector<16x128xf32>
      %681 = arith.mulf %662, %680 : vector<16x128xf32>
      %682 = arith.addf %679, %681 : vector<16x128xf32>
      %683 = vector.broadcast %118 : f32 to vector<16x128xf32>
      %684 = arith.addf %682, %683 : vector<16x128xf32>
      %cst_127 = arith.constant 0.000000e+00 : f32
      %685 = vector.broadcast %cst_127 : f32 to vector<16x128xf32>
      %686 = arith.maximumf %684, %685 : vector<16x128xf32>
      %687 = vector.broadcast %114 : f32 to vector<16x128xf32>
      %688 = arith.mulf %636, %687 : vector<16x128xf32>
      %689 = vector.broadcast %115 : f32 to vector<16x128xf32>
      %690 = arith.mulf %649, %689 : vector<16x128xf32>
      %691 = arith.addf %688, %690 : vector<16x128xf32>
      %692 = vector.broadcast %116 : f32 to vector<16x128xf32>
      %693 = arith.mulf %662, %692 : vector<16x128xf32>
      %694 = arith.addf %691, %693 : vector<16x128xf32>
      %695 = vector.broadcast %119 : f32 to vector<16x128xf32>
      %696 = arith.addf %694, %695 : vector<16x128xf32>
      %cst_128 = arith.constant 0.000000e+00 : f32
      %697 = vector.broadcast %cst_128 : f32 to vector<16x128xf32>
      %698 = arith.maximumf %696, %697 : vector<16x128xf32>
      %c1_i32_129 = arith.constant 1 : i32
      %699 = tpu.dynamic_rotate %674 by %c1_i32_129 dim 1 : vector<16x128xf32>, i32 -> vector<16x128xf32>
      %cst_130 = arith.constant 0.000000e+00 : f32
      %700 = vector.broadcast %cst_130 : f32 to vector<16x128xf32>
      %701 = arith.select %174, %699, %700 : vector<16x128xi1>, vector<16x128xf32>
      %c127_i32_131 = arith.constant 127 : i32
      %702 = tpu.dynamic_rotate %674 by %c127_i32_131 dim 1 : vector<16x128xf32>, i32 -> vector<16x128xf32>
      %cst_132 = arith.constant 0.000000e+00 : f32
      %703 = vector.broadcast %cst_132 : f32 to vector<16x128xf32>
      %704 = arith.select %176, %702, %703 : vector<16x128xi1>, vector<16x128xf32>
      %705 = vector.broadcast %123 : f32 to vector<16x128xf32>
      %706 = arith.mulf %701, %705 : vector<16x128xf32>
      %707 = vector.broadcast %124 : f32 to vector<16x128xf32>
      %708 = arith.mulf %674, %707 : vector<16x128xf32>
      %709 = arith.addf %706, %708 : vector<16x128xf32>
      %710 = vector.broadcast %125 : f32 to vector<16x128xf32>
      %711 = arith.mulf %704, %710 : vector<16x128xf32>
      %712 = arith.addf %709, %711 : vector<16x128xf32>
      %c1_i32_133 = arith.constant 1 : i32
      %713 = tpu.dynamic_rotate %701 by %c1_i32_133 dim 0 : vector<16x128xf32>, i32 -> vector<16x128xf32>
      %cst_134 = arith.constant 0.000000e+00 : f32
      %714 = vector.broadcast %cst_134 : f32 to vector<16x128xf32>
      %715 = arith.select %170, %713, %714 : vector<16x128xi1>, vector<16x128xf32>
      %716 = vector.broadcast %120 : f32 to vector<16x128xf32>
      %717 = arith.mulf %715, %716 : vector<16x128xf32>
      %718 = arith.addf %712, %717 : vector<16x128xf32>
      %c1_i32_135 = arith.constant 1 : i32
      %719 = tpu.dynamic_rotate %674 by %c1_i32_135 dim 0 : vector<16x128xf32>, i32 -> vector<16x128xf32>
      %cst_136 = arith.constant 0.000000e+00 : f32
      %720 = vector.broadcast %cst_136 : f32 to vector<16x128xf32>
      %721 = arith.select %170, %719, %720 : vector<16x128xi1>, vector<16x128xf32>
      %722 = vector.broadcast %121 : f32 to vector<16x128xf32>
      %723 = arith.mulf %721, %722 : vector<16x128xf32>
      %724 = arith.addf %718, %723 : vector<16x128xf32>
      %c1_i32_137 = arith.constant 1 : i32
      %725 = tpu.dynamic_rotate %704 by %c1_i32_137 dim 0 : vector<16x128xf32>, i32 -> vector<16x128xf32>
      %cst_138 = arith.constant 0.000000e+00 : f32
      %726 = vector.broadcast %cst_138 : f32 to vector<16x128xf32>
      %727 = arith.select %170, %725, %726 : vector<16x128xi1>, vector<16x128xf32>
      %728 = vector.broadcast %122 : f32 to vector<16x128xf32>
      %729 = arith.mulf %727, %728 : vector<16x128xf32>
      %730 = arith.addf %724, %729 : vector<16x128xf32>
      %c15_i32_139 = arith.constant 15 : i32
      %731 = tpu.dynamic_rotate %701 by %c15_i32_139 dim 0 : vector<16x128xf32>, i32 -> vector<16x128xf32>
      %cst_140 = arith.constant 0.000000e+00 : f32
      %732 = vector.broadcast %cst_140 : f32 to vector<16x128xf32>
      %733 = arith.select %172, %731, %732 : vector<16x128xi1>, vector<16x128xf32>
      %734 = vector.broadcast %126 : f32 to vector<16x128xf32>
      %735 = arith.mulf %733, %734 : vector<16x128xf32>
      %736 = arith.addf %730, %735 : vector<16x128xf32>
      %c15_i32_141 = arith.constant 15 : i32
      %737 = tpu.dynamic_rotate %674 by %c15_i32_141 dim 0 : vector<16x128xf32>, i32 -> vector<16x128xf32>
      %cst_142 = arith.constant 0.000000e+00 : f32
      %738 = vector.broadcast %cst_142 : f32 to vector<16x128xf32>
      %739 = arith.select %172, %737, %738 : vector<16x128xi1>, vector<16x128xf32>
      %740 = vector.broadcast %127 : f32 to vector<16x128xf32>
      %741 = arith.mulf %739, %740 : vector<16x128xf32>
      %742 = arith.addf %736, %741 : vector<16x128xf32>
      %c15_i32_143 = arith.constant 15 : i32
      %743 = tpu.dynamic_rotate %704 by %c15_i32_143 dim 0 : vector<16x128xf32>, i32 -> vector<16x128xf32>
      %cst_144 = arith.constant 0.000000e+00 : f32
      %744 = vector.broadcast %cst_144 : f32 to vector<16x128xf32>
      %745 = arith.select %172, %743, %744 : vector<16x128xi1>, vector<16x128xf32>
      %746 = vector.broadcast %128 : f32 to vector<16x128xf32>
      %747 = arith.mulf %745, %746 : vector<16x128xf32>
      %748 = arith.addf %742, %747 : vector<16x128xf32>
      %749 = vector.broadcast %147 : f32 to vector<16x128xf32>
      %750 = arith.addf %748, %749 : vector<16x128xf32>
      %cst_145 = arith.constant 0.000000e+00 : f32
      %751 = vector.broadcast %cst_145 : f32 to vector<16x128xf32>
      %752 = arith.maximumf %750, %751 : vector<16x128xf32>
      %c1_i32_146 = arith.constant 1 : i32
      %753 = tpu.dynamic_rotate %686 by %c1_i32_146 dim 1 : vector<16x128xf32>, i32 -> vector<16x128xf32>
      %cst_147 = arith.constant 0.000000e+00 : f32
      %754 = vector.broadcast %cst_147 : f32 to vector<16x128xf32>
      %755 = arith.select %174, %753, %754 : vector<16x128xi1>, vector<16x128xf32>
      %c127_i32_148 = arith.constant 127 : i32
      %756 = tpu.dynamic_rotate %686 by %c127_i32_148 dim 1 : vector<16x128xf32>, i32 -> vector<16x128xf32>
      %cst_149 = arith.constant 0.000000e+00 : f32
      %757 = vector.broadcast %cst_149 : f32 to vector<16x128xf32>
      %758 = arith.select %176, %756, %757 : vector<16x128xi1>, vector<16x128xf32>
      %759 = vector.broadcast %132 : f32 to vector<16x128xf32>
      %760 = arith.mulf %755, %759 : vector<16x128xf32>
      %761 = vector.broadcast %133 : f32 to vector<16x128xf32>
      %762 = arith.mulf %686, %761 : vector<16x128xf32>
      %763 = arith.addf %760, %762 : vector<16x128xf32>
      %764 = vector.broadcast %134 : f32 to vector<16x128xf32>
      %765 = arith.mulf %758, %764 : vector<16x128xf32>
      %766 = arith.addf %763, %765 : vector<16x128xf32>
      %c1_i32_150 = arith.constant 1 : i32
      %767 = tpu.dynamic_rotate %755 by %c1_i32_150 dim 0 : vector<16x128xf32>, i32 -> vector<16x128xf32>
      %cst_151 = arith.constant 0.000000e+00 : f32
      %768 = vector.broadcast %cst_151 : f32 to vector<16x128xf32>
      %769 = arith.select %170, %767, %768 : vector<16x128xi1>, vector<16x128xf32>
      %770 = vector.broadcast %129 : f32 to vector<16x128xf32>
      %771 = arith.mulf %769, %770 : vector<16x128xf32>
      %772 = arith.addf %766, %771 : vector<16x128xf32>
      %c1_i32_152 = arith.constant 1 : i32
      %773 = tpu.dynamic_rotate %686 by %c1_i32_152 dim 0 : vector<16x128xf32>, i32 -> vector<16x128xf32>
      %cst_153 = arith.constant 0.000000e+00 : f32
      %774 = vector.broadcast %cst_153 : f32 to vector<16x128xf32>
      %775 = arith.select %170, %773, %774 : vector<16x128xi1>, vector<16x128xf32>
      %776 = vector.broadcast %130 : f32 to vector<16x128xf32>
      %777 = arith.mulf %775, %776 : vector<16x128xf32>
      %778 = arith.addf %772, %777 : vector<16x128xf32>
      %c1_i32_154 = arith.constant 1 : i32
      %779 = tpu.dynamic_rotate %758 by %c1_i32_154 dim 0 : vector<16x128xf32>, i32 -> vector<16x128xf32>
      %cst_155 = arith.constant 0.000000e+00 : f32
      %780 = vector.broadcast %cst_155 : f32 to vector<16x128xf32>
      %781 = arith.select %170, %779, %780 : vector<16x128xi1>, vector<16x128xf32>
      %782 = vector.broadcast %131 : f32 to vector<16x128xf32>
      %783 = arith.mulf %781, %782 : vector<16x128xf32>
      %784 = arith.addf %778, %783 : vector<16x128xf32>
      %c15_i32_156 = arith.constant 15 : i32
      %785 = tpu.dynamic_rotate %755 by %c15_i32_156 dim 0 : vector<16x128xf32>, i32 -> vector<16x128xf32>
      %cst_157 = arith.constant 0.000000e+00 : f32
      %786 = vector.broadcast %cst_157 : f32 to vector<16x128xf32>
      %787 = arith.select %172, %785, %786 : vector<16x128xi1>, vector<16x128xf32>
      %788 = vector.broadcast %135 : f32 to vector<16x128xf32>
      %789 = arith.mulf %787, %788 : vector<16x128xf32>
      %790 = arith.addf %784, %789 : vector<16x128xf32>
      %c15_i32_158 = arith.constant 15 : i32
      %791 = tpu.dynamic_rotate %686 by %c15_i32_158 dim 0 : vector<16x128xf32>, i32 -> vector<16x128xf32>
      %cst_159 = arith.constant 0.000000e+00 : f32
      %792 = vector.broadcast %cst_159 : f32 to vector<16x128xf32>
      %793 = arith.select %172, %791, %792 : vector<16x128xi1>, vector<16x128xf32>
      %794 = vector.broadcast %136 : f32 to vector<16x128xf32>
      %795 = arith.mulf %793, %794 : vector<16x128xf32>
      %796 = arith.addf %790, %795 : vector<16x128xf32>
      %c15_i32_160 = arith.constant 15 : i32
      %797 = tpu.dynamic_rotate %758 by %c15_i32_160 dim 0 : vector<16x128xf32>, i32 -> vector<16x128xf32>
      %cst_161 = arith.constant 0.000000e+00 : f32
      %798 = vector.broadcast %cst_161 : f32 to vector<16x128xf32>
      %799 = arith.select %172, %797, %798 : vector<16x128xi1>, vector<16x128xf32>
      %800 = vector.broadcast %137 : f32 to vector<16x128xf32>
      %801 = arith.mulf %799, %800 : vector<16x128xf32>
      %802 = arith.addf %796, %801 : vector<16x128xf32>
      %803 = vector.broadcast %148 : f32 to vector<16x128xf32>
      %804 = arith.addf %802, %803 : vector<16x128xf32>
      %cst_162 = arith.constant 0.000000e+00 : f32
      %805 = vector.broadcast %cst_162 : f32 to vector<16x128xf32>
      %806 = arith.maximumf %804, %805 : vector<16x128xf32>
      %c1_i32_163 = arith.constant 1 : i32
      %807 = tpu.dynamic_rotate %698 by %c1_i32_163 dim 1 : vector<16x128xf32>, i32 -> vector<16x128xf32>
      %cst_164 = arith.constant 0.000000e+00 : f32
      %808 = vector.broadcast %cst_164 : f32 to vector<16x128xf32>
      %809 = arith.select %174, %807, %808 : vector<16x128xi1>, vector<16x128xf32>
      %c127_i32_165 = arith.constant 127 : i32
      %810 = tpu.dynamic_rotate %698 by %c127_i32_165 dim 1 : vector<16x128xf32>, i32 -> vector<16x128xf32>
      %cst_166 = arith.constant 0.000000e+00 : f32
      %811 = vector.broadcast %cst_166 : f32 to vector<16x128xf32>
      %812 = arith.select %176, %810, %811 : vector<16x128xi1>, vector<16x128xf32>
      %813 = vector.broadcast %141 : f32 to vector<16x128xf32>
      %814 = arith.mulf %809, %813 : vector<16x128xf32>
      %815 = vector.broadcast %142 : f32 to vector<16x128xf32>
      %816 = arith.mulf %698, %815 : vector<16x128xf32>
      %817 = arith.addf %814, %816 : vector<16x128xf32>
      %818 = vector.broadcast %143 : f32 to vector<16x128xf32>
      %819 = arith.mulf %812, %818 : vector<16x128xf32>
      %820 = arith.addf %817, %819 : vector<16x128xf32>
      %c1_i32_167 = arith.constant 1 : i32
      %821 = tpu.dynamic_rotate %809 by %c1_i32_167 dim 0 : vector<16x128xf32>, i32 -> vector<16x128xf32>
      %cst_168 = arith.constant 0.000000e+00 : f32
      %822 = vector.broadcast %cst_168 : f32 to vector<16x128xf32>
      %823 = arith.select %170, %821, %822 : vector<16x128xi1>, vector<16x128xf32>
      %824 = vector.broadcast %138 : f32 to vector<16x128xf32>
      %825 = arith.mulf %823, %824 : vector<16x128xf32>
      %826 = arith.addf %820, %825 : vector<16x128xf32>
      %c1_i32_169 = arith.constant 1 : i32
      %827 = tpu.dynamic_rotate %698 by %c1_i32_169 dim 0 : vector<16x128xf32>, i32 -> vector<16x128xf32>
      %cst_170 = arith.constant 0.000000e+00 : f32
      %828 = vector.broadcast %cst_170 : f32 to vector<16x128xf32>
      %829 = arith.select %170, %827, %828 : vector<16x128xi1>, vector<16x128xf32>
      %830 = vector.broadcast %139 : f32 to vector<16x128xf32>
      %831 = arith.mulf %829, %830 : vector<16x128xf32>
      %832 = arith.addf %826, %831 : vector<16x128xf32>
      %c1_i32_171 = arith.constant 1 : i32
      %833 = tpu.dynamic_rotate %812 by %c1_i32_171 dim 0 : vector<16x128xf32>, i32 -> vector<16x128xf32>
      %cst_172 = arith.constant 0.000000e+00 : f32
      %834 = vector.broadcast %cst_172 : f32 to vector<16x128xf32>
      %835 = arith.select %170, %833, %834 : vector<16x128xi1>, vector<16x128xf32>
      %836 = vector.broadcast %140 : f32 to vector<16x128xf32>
      %837 = arith.mulf %835, %836 : vector<16x128xf32>
      %838 = arith.addf %832, %837 : vector<16x128xf32>
      %c15_i32_173 = arith.constant 15 : i32
      %839 = tpu.dynamic_rotate %809 by %c15_i32_173 dim 0 : vector<16x128xf32>, i32 -> vector<16x128xf32>
      %cst_174 = arith.constant 0.000000e+00 : f32
      %840 = vector.broadcast %cst_174 : f32 to vector<16x128xf32>
      %841 = arith.select %172, %839, %840 : vector<16x128xi1>, vector<16x128xf32>
      %842 = vector.broadcast %144 : f32 to vector<16x128xf32>
      %843 = arith.mulf %841, %842 : vector<16x128xf32>
      %844 = arith.addf %838, %843 : vector<16x128xf32>
      %c15_i32_175 = arith.constant 15 : i32
      %845 = tpu.dynamic_rotate %698 by %c15_i32_175 dim 0 : vector<16x128xf32>, i32 -> vector<16x128xf32>
      %cst_176 = arith.constant 0.000000e+00 : f32
      %846 = vector.broadcast %cst_176 : f32 to vector<16x128xf32>
      %847 = arith.select %172, %845, %846 : vector<16x128xi1>, vector<16x128xf32>
      %848 = vector.broadcast %145 : f32 to vector<16x128xf32>
      %849 = arith.mulf %847, %848 : vector<16x128xf32>
      %850 = arith.addf %844, %849 : vector<16x128xf32>
      %c15_i32_177 = arith.constant 15 : i32
      %851 = tpu.dynamic_rotate %812 by %c15_i32_177 dim 0 : vector<16x128xf32>, i32 -> vector<16x128xf32>
      %cst_178 = arith.constant 0.000000e+00 : f32
      %852 = vector.broadcast %cst_178 : f32 to vector<16x128xf32>
      %853 = arith.select %172, %851, %852 : vector<16x128xi1>, vector<16x128xf32>
      %854 = vector.broadcast %146 : f32 to vector<16x128xf32>
      %855 = arith.mulf %853, %854 : vector<16x128xf32>
      %856 = arith.addf %850, %855 : vector<16x128xf32>
      %857 = vector.broadcast %149 : f32 to vector<16x128xf32>
      %858 = arith.addf %856, %857 : vector<16x128xf32>
      %cst_179 = arith.constant 0.000000e+00 : f32
      %859 = vector.broadcast %cst_179 : f32 to vector<16x128xf32>
      %860 = arith.maximumf %858, %859 : vector<16x128xf32>
      %861 = vector.broadcast %150 : f32 to vector<16x128xf32>
      %862 = arith.mulf %752, %861 : vector<16x128xf32>
      %863 = vector.broadcast %151 : f32 to vector<16x128xf32>
      %864 = arith.mulf %806, %863 : vector<16x128xf32>
      %865 = arith.addf %862, %864 : vector<16x128xf32>
      %866 = vector.broadcast %152 : f32 to vector<16x128xf32>
      %867 = arith.mulf %860, %866 : vector<16x128xf32>
      %868 = arith.addf %865, %867 : vector<16x128xf32>
      %869 = vector.broadcast %159 : f32 to vector<16x128xf32>
      %870 = arith.addf %868, %869 : vector<16x128xf32>
      %871 = arith.addf %870, %636 : vector<16x128xf32>
      %cst_180 = arith.constant 0.000000e+00 : f32
      %872 = vector.broadcast %cst_180 : f32 to vector<16x128xf32>
      %873 = arith.maximumf %871, %872 : vector<16x128xf32>
      %874 = vector.broadcast %153 : f32 to vector<16x128xf32>
      %875 = arith.mulf %752, %874 : vector<16x128xf32>
      %876 = vector.broadcast %154 : f32 to vector<16x128xf32>
      %877 = arith.mulf %806, %876 : vector<16x128xf32>
      %878 = arith.addf %875, %877 : vector<16x128xf32>
      %879 = vector.broadcast %155 : f32 to vector<16x128xf32>
      %880 = arith.mulf %860, %879 : vector<16x128xf32>
      %881 = arith.addf %878, %880 : vector<16x128xf32>
      %882 = vector.broadcast %160 : f32 to vector<16x128xf32>
      %883 = arith.addf %881, %882 : vector<16x128xf32>
      %884 = arith.addf %883, %649 : vector<16x128xf32>
      %cst_181 = arith.constant 0.000000e+00 : f32
      %885 = vector.broadcast %cst_181 : f32 to vector<16x128xf32>
      %886 = arith.maximumf %884, %885 : vector<16x128xf32>
      %887 = vector.broadcast %156 : f32 to vector<16x128xf32>
      %888 = arith.mulf %752, %887 : vector<16x128xf32>
      %889 = vector.broadcast %157 : f32 to vector<16x128xf32>
      %890 = arith.mulf %806, %889 : vector<16x128xf32>
      %891 = arith.addf %888, %890 : vector<16x128xf32>
      %892 = vector.broadcast %158 : f32 to vector<16x128xf32>
      %893 = arith.mulf %860, %892 : vector<16x128xf32>
      %894 = arith.addf %891, %893 : vector<16x128xf32>
      %895 = vector.broadcast %161 : f32 to vector<16x128xf32>
      %896 = arith.addf %894, %895 : vector<16x128xf32>
      %897 = arith.addf %896, %662 : vector<16x128xf32>
      %cst_182 = arith.constant 0.000000e+00 : f32
      %898 = vector.broadcast %cst_182 : f32 to vector<16x128xf32>
      %899 = arith.maximumf %897, %898 : vector<16x128xf32>
      %c1_i32_183 = arith.constant 1 : i32
      %900 = tpu.dynamic_rotate %873 by %c1_i32_183 dim 1 : vector<16x128xf32>, i32 -> vector<16x128xf32>
      %cst_184 = arith.constant 0.000000e+00 : f32
      %901 = vector.broadcast %cst_184 : f32 to vector<16x128xf32>
      %902 = arith.select %174, %900, %901 : vector<16x128xi1>, vector<16x128xf32>
      %c127_i32_185 = arith.constant 127 : i32
      %903 = tpu.dynamic_rotate %873 by %c127_i32_185 dim 1 : vector<16x128xf32>, i32 -> vector<16x128xf32>
      %cst_186 = arith.constant 0.000000e+00 : f32
      %904 = vector.broadcast %cst_186 : f32 to vector<16x128xf32>
      %905 = arith.select %176, %903, %904 : vector<16x128xi1>, vector<16x128xf32>
      %c0_187 = arith.constant 0 : index
      %c0_188 = arith.constant 0 : index
      %c0_189 = arith.constant 0 : index
      %c0_190 = arith.constant 0 : index
      %906 = vector.load %arg3[%c0_187, %c0_188, %c0_189, %c0_190] : memref<3x3x16x128xf32, #tpu.memory_space<vmem>>, vector<1x1x16x128xf32>
      %907 = vector.shape_cast %906 : vector<1x1x16x128xf32> to vector<16x128xf32>
      %908 = arith.mulf %902, %907 : vector<16x128xf32>
      %c0_191 = arith.constant 0 : index
      %c1_192 = arith.constant 1 : index
      %c0_193 = arith.constant 0 : index
      %c0_194 = arith.constant 0 : index
      %909 = vector.load %arg3[%c0_191, %c1_192, %c0_193, %c0_194] : memref<3x3x16x128xf32, #tpu.memory_space<vmem>>, vector<1x1x16x128xf32>
      %910 = vector.shape_cast %909 : vector<1x1x16x128xf32> to vector<16x128xf32>
      %911 = arith.mulf %873, %910 : vector<16x128xf32>
      %912 = arith.addf %908, %911 : vector<16x128xf32>
      %c0_195 = arith.constant 0 : index
      %c2_196 = arith.constant 2 : index
      %c0_197 = arith.constant 0 : index
      %c0_198 = arith.constant 0 : index
      %913 = vector.load %arg3[%c0_195, %c2_196, %c0_197, %c0_198] : memref<3x3x16x128xf32, #tpu.memory_space<vmem>>, vector<1x1x16x128xf32>
      %914 = vector.shape_cast %913 : vector<1x1x16x128xf32> to vector<16x128xf32>
      %915 = arith.mulf %905, %914 : vector<16x128xf32>
      %916 = arith.addf %912, %915 : vector<16x128xf32>
      %cst_199 = arith.constant dense<0.000000e+00> : vector<128xf32>
      %917 = vector.multi_reduction <add>, %916, %cst_199 [0] : vector<16x128xf32> to vector<128xf32>
      %918 = vector.shape_cast %917 : vector<128xf32> to vector<1x128xf32>
      %919 = vector.broadcast %162 : f32 to vector<1x128xf32>
      %920 = arith.addf %918, %919 : vector<1x128xf32>
      %c0_200 = arith.constant 0 : index
      %c0_201 = arith.constant 0 : index
      %921 = arith.index_cast %arg5 : i32 to index
      %c0_202 = arith.constant 0 : index
      %922 = vector.load %arg4[%c0_200, %c0_201, %921, %c0_202] : memref<1x3x8x128xf32, #tpu.memory_space<vmem>>, vector<1x1x1x128xf32>
      %923 = vector.shape_cast %922 : vector<1x1x1x128xf32> to vector<1x128xf32>
      %924 = vector.shape_cast %920 : vector<1x128xf32> to vector<1x1x1x128xf32>
      tpu.vector_store %arg4[%c0_200, %c0_201, %921, %c0_202], %924 {strides = array<i32>} : memref<1x3x8x128xf32, #tpu.memory_space<vmem>>, vector<1x1x1x128xf32>,
      %c1_i32_203 = arith.constant 1 : i32
      %925 = tpu.dynamic_rotate %886 by %c1_i32_203 dim 1 : vector<16x128xf32>, i32 -> vector<16x128xf32>
      %cst_204 = arith.constant 0.000000e+00 : f32
      %926 = vector.broadcast %cst_204 : f32 to vector<16x128xf32>
      %927 = arith.select %174, %925, %926 : vector<16x128xi1>, vector<16x128xf32>
      %c127_i32_205 = arith.constant 127 : i32
      %928 = tpu.dynamic_rotate %886 by %c127_i32_205 dim 1 : vector<16x128xf32>, i32 -> vector<16x128xf32>
      %cst_206 = arith.constant 0.000000e+00 : f32
      %929 = vector.broadcast %cst_206 : f32 to vector<16x128xf32>
      %930 = arith.select %176, %928, %929 : vector<16x128xi1>, vector<16x128xf32>
      %c1_207 = arith.constant 1 : index
      %c0_208 = arith.constant 0 : index
      %c0_209 = arith.constant 0 : index
      %c0_210 = arith.constant 0 : index
      %931 = vector.load %arg3[%c1_207, %c0_208, %c0_209, %c0_210] : memref<3x3x16x128xf32, #tpu.memory_space<vmem>>, vector<1x1x16x128xf32>
      %932 = vector.shape_cast %931 : vector<1x1x16x128xf32> to vector<16x128xf32>
      %933 = arith.mulf %927, %932 : vector<16x128xf32>
      %c1_211 = arith.constant 1 : index
      %c1_212 = arith.constant 1 : index
      %c0_213 = arith.constant 0 : index
      %c0_214 = arith.constant 0 : index
      %934 = vector.load %arg3[%c1_211, %c1_212, %c0_213, %c0_214] : memref<3x3x16x128xf32, #tpu.memory_space<vmem>>, vector<1x1x16x128xf32>
      %935 = vector.shape_cast %934 : vector<1x1x16x128xf32> to vector<16x128xf32>
      %936 = arith.mulf %886, %935 : vector<16x128xf32>
      %937 = arith.addf %933, %936 : vector<16x128xf32>
      %c1_215 = arith.constant 1 : index
      %c2_216 = arith.constant 2 : index
      %c0_217 = arith.constant 0 : index
      %c0_218 = arith.constant 0 : index
      %938 = vector.load %arg3[%c1_215, %c2_216, %c0_217, %c0_218] : memref<3x3x16x128xf32, #tpu.memory_space<vmem>>, vector<1x1x16x128xf32>
      %939 = vector.shape_cast %938 : vector<1x1x16x128xf32> to vector<16x128xf32>
      %940 = arith.mulf %930, %939 : vector<16x128xf32>
      %941 = arith.addf %937, %940 : vector<16x128xf32>
      %cst_219 = arith.constant dense<0.000000e+00> : vector<128xf32>
      %942 = vector.multi_reduction <add>, %941, %cst_219 [0] : vector<16x128xf32> to vector<128xf32>
      %943 = vector.shape_cast %942 : vector<128xf32> to vector<1x128xf32>
      %944 = vector.broadcast %163 : f32 to vector<1x128xf32>
      %945 = arith.addf %943, %944 : vector<1x128xf32>
      %c0_220 = arith.constant 0 : index
      %c1_221 = arith.constant 1 : index
      %946 = arith.index_cast %arg5 : i32 to index
      %c0_222 = arith.constant 0 : index
      %947 = vector.load %arg4[%c0_220, %c1_221, %946, %c0_222] : memref<1x3x8x128xf32, #tpu.memory_space<vmem>>, vector<1x1x1x128xf32>
      %948 = vector.shape_cast %947 : vector<1x1x1x128xf32> to vector<1x128xf32>
      %949 = vector.shape_cast %945 : vector<1x128xf32> to vector<1x1x1x128xf32>
      tpu.vector_store %arg4[%c0_220, %c1_221, %946, %c0_222], %949 {strides = array<i32>} : memref<1x3x8x128xf32, #tpu.memory_space<vmem>>, vector<1x1x1x128xf32>,
      %c1_i32_223 = arith.constant 1 : i32
      %950 = tpu.dynamic_rotate %899 by %c1_i32_223 dim 1 : vector<16x128xf32>, i32 -> vector<16x128xf32>
      %cst_224 = arith.constant 0.000000e+00 : f32
      %951 = vector.broadcast %cst_224 : f32 to vector<16x128xf32>
      %952 = arith.select %174, %950, %951 : vector<16x128xi1>, vector<16x128xf32>
      %c127_i32_225 = arith.constant 127 : i32
      %953 = tpu.dynamic_rotate %899 by %c127_i32_225 dim 1 : vector<16x128xf32>, i32 -> vector<16x128xf32>
      %cst_226 = arith.constant 0.000000e+00 : f32
      %954 = vector.broadcast %cst_226 : f32 to vector<16x128xf32>
      %955 = arith.select %176, %953, %954 : vector<16x128xi1>, vector<16x128xf32>
      %c2_227 = arith.constant 2 : index
      %c0_228 = arith.constant 0 : index
      %c0_229 = arith.constant 0 : index
      %c0_230 = arith.constant 0 : index
      %956 = vector.load %arg3[%c2_227, %c0_228, %c0_229, %c0_230] : memref<3x3x16x128xf32, #tpu.memory_space<vmem>>, vector<1x1x16x128xf32>
      %957 = vector.shape_cast %956 : vector<1x1x16x128xf32> to vector<16x128xf32>
      %958 = arith.mulf %952, %957 : vector<16x128xf32>
      %c2_231 = arith.constant 2 : index
      %c1_232 = arith.constant 1 : index
      %c0_233 = arith.constant 0 : index
      %c0_234 = arith.constant 0 : index
      %959 = vector.load %arg3[%c2_231, %c1_232, %c0_233, %c0_234] : memref<3x3x16x128xf32, #tpu.memory_space<vmem>>, vector<1x1x16x128xf32>
      %960 = vector.shape_cast %959 : vector<1x1x16x128xf32> to vector<16x128xf32>
      %961 = arith.mulf %899, %960 : vector<16x128xf32>
      %962 = arith.addf %958, %961 : vector<16x128xf32>
      %c2_235 = arith.constant 2 : index
      %c2_236 = arith.constant 2 : index
      %c0_237 = arith.constant 0 : index
      %c0_238 = arith.constant 0 : index
      %963 = vector.load %arg3[%c2_235, %c2_236, %c0_237, %c0_238] : memref<3x3x16x128xf32, #tpu.memory_space<vmem>>, vector<1x1x16x128xf32>
      %964 = vector.shape_cast %963 : vector<1x1x16x128xf32> to vector<16x128xf32>
      %965 = arith.mulf %955, %964 : vector<16x128xf32>
      %966 = arith.addf %962, %965 : vector<16x128xf32>
      %cst_239 = arith.constant dense<0.000000e+00> : vector<128xf32>
      %967 = vector.multi_reduction <add>, %966, %cst_239 [0] : vector<16x128xf32> to vector<128xf32>
      %968 = vector.shape_cast %967 : vector<128xf32> to vector<1x128xf32>
      %969 = vector.broadcast %164 : f32 to vector<1x128xf32>
      %970 = arith.addf %968, %969 : vector<1x128xf32>
      %c0_240 = arith.constant 0 : index
      %c2_241 = arith.constant 2 : index
      %971 = arith.index_cast %arg5 : i32 to index
      %c0_242 = arith.constant 0 : index
      %972 = vector.load %arg4[%c0_240, %c2_241, %971, %c0_242] : memref<1x3x8x128xf32, #tpu.memory_space<vmem>>, vector<1x1x1x128xf32>
      %973 = vector.shape_cast %972 : vector<1x1x1x128xf32> to vector<1x128xf32>
      %974 = vector.shape_cast %970 : vector<1x128xf32> to vector<1x1x1x128xf32>
      tpu.vector_store %arg4[%c0_240, %c2_241, %971, %c0_242], %974 {strides = array<i32>} : memref<1x3x8x128xf32, #tpu.memory_space<vmem>>, vector<1x1x1x128xf32>,
    }
    %c8_i32_4 = arith.constant 8 : i32
    return
  }
  func.func @transform_0(%arg0: i32) -> i32 {
    %c0_i32 = arith.constant 0 : i32
    %c0_i32_0 = arith.constant 0 : i32
    return %c0_i32 : i32
  }
  func.func @transform_1(%arg0: i32) -> (i32, i32, i32, i32) {
    %c0_i32 = arith.constant 0 : i32
    %c0_i32_0 = arith.constant 0 : i32
    %c0_i32_1 = arith.constant 0 : i32
    %c0_i32_2 = arith.constant 0 : i32
    return %arg0, %c0_i32, %c0_i32_0, %c0_i32_1 : i32, i32, i32, i32
  }
  func.func @transform_2(%arg0: i32) -> (i32, i32, i32, i32) {
    %c0_i32 = arith.constant 0 : i32
    %c0_i32_0 = arith.constant 0 : i32
    %c0_i32_1 = arith.constant 0 : i32
    %c0_i32_2 = arith.constant 0 : i32
    %c0_i32_3 = arith.constant 0 : i32
    return %c0_i32, %c0_i32_0, %c0_i32_1, %c0_i32_2 : i32, i32, i32, i32
  }
  func.func @transform_3(%arg0: i32) -> (i32, i32, i32, i32) {
    %c0_i32 = arith.constant 0 : i32
    %c0_i32_0 = arith.constant 0 : i32
    %c0_i32_1 = arith.constant 0 : i32
    %c0_i32_2 = arith.constant 0 : i32
    return %arg0, %c0_i32, %c0_i32_0, %c0_i32_1 : i32, i32, i32, i32
  }
}

</mosaic_0001>

<llo_original>
// kernel: tpu_custom_call.1
$region0: #{tpu_custom_call.1}
  #allocation0 [shape = 'u32[]', space=smem, size = 0x4, offset = 0x4, fixed_abs, tag = 'smem constant byte address 0x4 - core index']
  #allocation1 [shape = 'u32[72,128]{1,0:T(1,128)}', space=vmem, size = 0x9000, scoped, tag = 'internal scratch']
  %s0 = inlined_call_operand.hbm [shape: f32[165], index: 0, kind: input, shape index: {}]
  %s1 = inlined_call_operand.hbm [shape: f32[2,3,128,128], index: 1, kind: input, shape index: {}]
  %s2 = inlined_call_operand.hbm [shape: f32[3,3,16,128], index: 2, kind: input, shape index: {}]
  %s3 = inlined_call_operand.hbm [shape: f32[2,3,8,128], index: 3, kind: output, shape index: {}]
  %s4 = sld [smem:[#allocation0]]
  $region64: #{tpu_custom_call.1} parent=0
    _
  %s6 = ssub.s32 1, %s4
  %s7 = scalar_select 0, %s6, %s4
  $region1: #{tpu_custom_call.1} parent=0
    #allocation2 [shape = 'u8[1024]{0}', space=smem, size = 0x400, scoped, tag = 'input window, operand 0, single buffered']
    #allocation3 [shape = 's32[2]{0}', space=sflag, size = 0x8, scoped, tag = 'scoped memory for tpu_custom_call.1']
    #allocation4 [shape = 's32[2]{0}', space=sflag, size = 0x8, scoped, tag = 'scoped memory for tpu_custom_call.1']
    #allocation5 [shape = 's32[2]{0}', space=sflag, size = 0x8, scoped, tag = 'scoped memory for tpu_custom_call.1']
    #allocation6 [shape = 'u8[393216]{0}', space=vmem, size = 0x60000, scoped, tag = 'input window, operand 1']
    #allocation7 [shape = 'u8[73728]{0}', space=vmem, size = 0x12000, scoped, tag = 'input window, operand 2, single buffered']
    #allocation8 [shape = 's32[1]{0}', space=sflag, size = 0x4, scoped, tag = 'scoped memory for tpu_custom_call.1']
    #allocation9 [shape = 'u8[24576]{0}', space=vmem, size = 0x6000, scoped, tag = 'output window, operand 0']
    %8 = vsyncpa [#allocation5], 0
    %9 = vsyncpa [#allocation3], 0
    %s10 = scalar_lea.sflag [#allocation3], 1
    %11 = vsyncpa %s10, 0
    %12 = vsyncpa [#allocation8], 0
    %13 = vsyncpa [#allocation4], 0
    %s14 = scalar_lea.sflag [#allocation4], 1
    %15 = vsyncpa %s14, 0
    loop: start=0, step=1, limit=4
    $region2: #{tpu_custom_call.1} parent=1 // loop_pre_header
      _
    $region3: #{tpu_custom_call.1} parent=1 // loop_header
      %s17 = sphi 0, %s21
      %p18 = scmp.ge.s32.totalorder %s17, 4
      %s25 = sphi 0, %s25
      %s27 = sphi 0, %s25
      %s28 = sphi 0, %s27
      %s42 = sphi 0, %s28
      %s48 = sphi 0, %s50
      %s51 = sphi 0, %s48
      %s52 = sphi 0, %s51
      %s68 = sphi 0, %s52
      %s72 = sphi 0, %s72
      %s74 = sphi 0, %s72
      %s75 = sphi 0, %s74
      %s89 = sphi 0, %s75
      %s95 = sphi 0, %s97
      %s98 = sphi 0, %s95
      %s99 = sphi 0, %s98
      %s115 = sphi 0, %s99
    $region4: #{tpu_custom_call.1} parent=1 // loop_header_branch
      %20 = sbr.rel (%p18) target = $region8
    $region5: #{tpu_custom_call.1} parent=1 // loop_body
      %s22 = ssub.s32 %s17, 1
      %s23 = ssub.s32 %s17, 2
      %s24 = sadd.s32 %s17, 1
      %s26 = sadd.s32 %s25, 1
      %p29 = scmp.eq.s32.totalorder %s17, 1
      %p30 = scmp.ne.s32.totalorder %s25, %s27
      %p31 = scmp.eq.s32.totalorder %s17, 0
      %p32 = por %p30, %p31
      %p33 = scmp.ne.s32.totalorder %s25, %s27
      %p34 = scmp.eq.s32.totalorder %s22, 1
      %p35 = por %p33, %p34
      %p36 = scmp.ne.s32.totalorder %s27, %s28
      %p37 = scmp.eq.s32.totalorder %s22, 0
      %p38 = por %p36, %p37
      %p39 = scmp.ne.s32.totalorder %s27, %s28
      %p40 = scmp.eq.s32.totalorder %s23, 1
      %p41 = por %p39, %p40
      %p43 = scmp.ne.s32.totalorder %s28, %s42
      %p44 = scmp.eq.s32.totalorder %s23, 0
      %p45 = por %p43, %p44
      %s46 = ssub.s32 %s17, %s24
      %p47 = scmp.eq.s32.totalorder %s46, 0
      %s49 = sadd.s32 %s48, 1
      %s50 = scalar_select %p47, %s48, %s49
      %p53 = pneg %p47
      %p54 = scmp.eq.s32.totalorder %s17, 1
      %p55 = por %p53, %p54
      %p56 = scmp.ne.s32.totalorder %s48, %s51
      %p57 = scmp.eq.s32.totalorder %s17, 0
      %p58 = por %p56, %p57
      %p59 = scmp.ne.s32.totalorder %s48, %s51
      %p60 = scmp.eq.s32.totalorder %s22, 1
      %p61 = por %p59, %p60
      %p62 = scmp.ne.s32.totalorder %s51, %s52
      %p63 = scmp.eq.s32.totalorder %s22, 0
      %p64 = por %p62, %p63
      %p65 = scmp.ne.s32.totalorder %s51, %s52
      %p66 = scmp.eq.s32.totalorder %s23, 1
      %p67 = por %p65, %p66
      %p69 = scmp.ne.s32.totalorder %s52, %s68
      %p70 = scmp.eq.s32.totalorder %s23, 0
      %p71 = por %p69, %p70
      %s73 = sadd.s32 %s72, 1
      %p76 = scmp.eq.s32.totalorder %s17, 1
      %p77 = scmp.ne.s32.totalorder %s72, %s74
      %p78 = scmp.eq.s32.totalorder %s17, 0
      %p79 = por %p77, %p78
      %p80 = scmp.ne.s32.totalorder %s72, %s74
      %p81 = scmp.eq.s32.totalorder %s22, 1
      %p82 = por %p80, %p81
      %p83 = scmp.ne.s32.totalorder %s74, %s75
      %p84 = scmp.eq.s32.totalorder %s22, 0
      %p85 = por %p83, %p84
      %p86 = scmp.ne.s32.totalorder %s74, %s75
      %p87 = scmp.eq.s32.totalorder %s23, 1
      %p88 = por %p86, %p87
      %p90 = scmp.ne.s32.totalorder %s75, %s89
      %p91 = scmp.eq.s32.totalorder %s23, 0
      %p92 = por %p90, %p91
      %s93 = ssub.s32 %s17, %s24
      %p94 = scmp.eq.s32.totalorder %s93, 0
      %s96 = sadd.s32 %s95, 1
      %s97 = scalar_select %p94, %s95, %s96
      %p100 = pneg %p94
      %p101 = scmp.eq.s32.totalorder %s17, 1
      %p102 = por %p100, %p101
      %p103 = scmp.ne.s32.totalorder %s95, %s98
      %p104 = scmp.eq.s32.totalorder %s17, 0
      %p105 = por %p103, %p104
      %p106 = scmp.ne.s32.totalorder %s95, %s98
      %p107 = scmp.eq.s32.totalorder %s22, 1
      %p108 = por %p106, %p107
      %p109 = scmp.ne.s32.totalorder %s98, %s99
      %p110 = scmp.eq.s32.totalorder %s22, 0
      %p111 = por %p109, %p110
      %p112 = scmp.ne.s32.totalorder %s98, %s99
      %p113 = scmp.eq.s32.totalorder %s23, 1
      %p114 = por %p112, %p113
      %p116 = scmp.ne.s32.totalorder %s99, %s115
      %p117 = scmp.eq.s32.totalorder %s23, 0
      %p118 = por %p116, %p117
      %p119 = scmp.le.s32.totalorder 1, %s17
      %p120 = scmp.lt.s32.totalorder %s17, 3
      %p121 = pnand %p119, %p120
      %p122 = pneg %p121
      // Predicated region
      $region9: #{tpu_custom_call.1} parent=5 // pred_check
        _
      $region10: #{tpu_custom_call.1} parent=5 // pred_check_branch
        %124 = sbr.rel (%p121) target = $region12
      $region11: #{tpu_custom_call.1} parent=5 // pred_region
        %s125 = ssub.s32 %s17, 1
        // Predicated region
        $region13: #{tpu_custom_call.1} parent=11 // pred_check
          %p126 = pneg %p38
        $region14: #{tpu_custom_call.1} parent=11 // pred_check_branch
          %128 = sbr.rel (%p126) target = $region16
        $region15: #{tpu_custom_call.1} parent=11 // pred_region
          %130 = vsyncadd [#allocation5], 0
          %s132 = sshll.u32 %s0, 4
          %s133 = int_to_ptr.hbm [resolvable:$true] %s132
          %135 = dma.hbm_to_smem %s133, 32, [#allocation2], [#allocation5]
        $region16: #{tpu_custom_call.1} parent=11 // pred_fallthru
          _
        // Predicated region
        $region17: #{tpu_custom_call.1} parent=11 // pred_check
          %p136 = pneg %p85
        $region18: #{tpu_custom_call.1} parent=11 // pred_check_branch
          %138 = sbr.rel (%p136) target = $region20
        $region19: #{tpu_custom_call.1} parent=11 // pred_region
          %140 = vsyncadd [#allocation8], 0
          %s141 = sshll.u32 %s2, 4
          %s142 = int_to_ptr.hbm [resolvable:$true] %s141
          %s143 = sshll.u32 [#allocation7], 4
          %s144 = int_to_ptr.vmem [resolvable:$true] %s143
          %149 = dma.hbm_to_vmem [thread:$0]  %s142, 2304, %s144, [#allocation8], 128, 128, 8
        $region20: #{tpu_custom_call.1} parent=11 // pred_fallthru
          _
      $region12: #{tpu_custom_call.1} parent=5 // pred_fallthru
        _
      %p150 = scmp.lt.s32.totalorder %s17, 2
      // Predicated region
      $region21: #{tpu_custom_call.1} parent=5 // pred_check
        %p151 = pneg %p150
      $region22: #{tpu_custom_call.1} parent=5 // pred_check_branch
        %153 = sbr.rel (%p151) target = $region24
      $region23: #{tpu_custom_call.1} parent=5 // pred_region
        // Predicated region
        $region25: #{tpu_custom_call.1} parent=23 // pred_check
          %p154 = pneg %p58
        $region26: #{tpu_custom_call.1} parent=23 // pred_check_branch
          %156 = sbr.rel (%p154) target = $region28
        $region27: #{tpu_custom_call.1} parent=23 // pred_region
          %s157 = sand.u32 %s48, 1
          %s158 = scalar_lea.sflag [#allocation3], %s157
          %s159 = sand.u32 %s48, 1
          %s160 = smul.addr %s159, 384
          %s161 = scalar_lea.vmem [#allocation6], %s160
          %163 = vsyncadd %s158, 0
          %s164 = smul.addr %s17, 48
          %s165 = smul.addr %s164, 8
          %s166 = scalar_lea.hbm %s1, %s165
          %s167 = sshll.u32 %s166, 4
          %s168 = int_to_ptr.hbm [resolvable:$true] %s167
          %s169 = sshll.u32 %s161, 4
          %s170 = int_to_ptr.vmem [resolvable:$true] %s169
          %175 = dma.hbm_to_vmem [thread:$0]  %s168, 6144, %s170, %s158, 128, 128, 8
        $region28: #{tpu_custom_call.1} parent=23 // pred_fallthru
          _
      $region24: #{tpu_custom_call.1} parent=5 // pred_fallthru
        _
      %p176 = scmp.le.s32.totalorder 1, %s17
      %p177 = scmp.lt.s32.totalorder %s17, 3
      %p178 = pnand %p176, %p177
      %p179 = pneg %p178
      // Predicated region
      $region29: #{tpu_custom_call.1} parent=5 // pred_check
        _
      $region30: #{tpu_custom_call.1} parent=5 // pred_check_branch
        %181 = sbr.rel (%p178) target = $region32
      $region31: #{tpu_custom_call.1} parent=5 // pred_region
        %s182 = ssub.s32 %s17, 1
        // Predicated region
        $region33: #{tpu_custom_call.1} parent=31 // pred_check
          %p183 = pneg %p38
        $region34: #{tpu_custom_call.1} parent=31 // pred_check_branch
          %185 = sbr.rel (%p183) target = $region36
        $region35: #{tpu_custom_call.1} parent=31 // pred_region
          %187 = dma.done [#allocation5], 32
        $region36: #{tpu_custom_call.1} parent=31 // pred_fallthru
          _
        %s188 = sand.u32 %s51, 1
        %s189 = scalar_lea.sflag [#allocation3], %s188
        %s190 = sand.u32 %s51, 1
        %s191 = smul.addr %s190, 384
        %s192 = scalar_lea.vmem [#allocation6], %s191
        // Predicated region
        $region37: #{tpu_custom_call.1} parent=31 // pred_check
          %p193 = pneg %p64
        $region38: #{tpu_custom_call.1} parent=31 // pred_check_branch
          %195 = sbr.rel (%p193) target = $region40
        $region39: #{tpu_custom_call.1} parent=31 // pred_region
          %197 = dma.done %s189, 6144
        $region40: #{tpu_custom_call.1} parent=31 // pred_fallthru
          _
        // Predicated region
        $region41: #{tpu_custom_call.1} parent=31 // pred_check
          %p198 = pneg %p85
        $region42: #{tpu_custom_call.1} parent=31 // pred_check_branch
          %200 = sbr.rel (%p198) target = $region44
        $region43: #{tpu_custom_call.1} parent=31 // pred_region
          %202 = dma.done [#allocation8], 2304
        $region44: #{tpu_custom_call.1} parent=31 // pred_fallthru
          _
        %203 = sfence
        %p204 = pneg %p38
        %p205 = pneg %p35
        %s206 = sand.u32 %s51, 1
        %s207 = scalar_lea.sflag [#allocation3], %s206
        %s208 = sand.u32 %s51, 1
        %s209 = smul.addr %s208, 384
        %s210 = scalar_lea.vmem [#allocation6], %s209
        %p211 = pneg %p64
        %p212 = pneg %p61
        %p213 = pneg %p85
        %p214 = pneg %p82
        %p215 = pneg %p111
        %p216 = pneg %p108
        %s217 = sand.u32 %s98, 1
        %s218 = scalar_lea.sflag [#allocation4], %s217
        %s219 = sand.u32 %s98, 1
        %s220 = smul.addr %s219, 24
        %s221 = scalar_lea.vmem [#allocation9], %s220
        %s222 = sld [smem:[#allocation2]]
        %s223 = sld [smem:[#allocation2 + $0x1]]
        %s224 = sld [smem:[#allocation2 + $0x2]]
        %s225 = sld [smem:[#allocation2 + $0x3]]
        %s226 = sld [smem:[#allocation2 + $0x4]]
        %s227 = sld [smem:[#allocation2 + $0x5]]
        %s228 = sld [smem:[#allocation2 + $0x6]]
        %s229 = sld [smem:[#allocation2 + $0x7]]
        %s230 = sld [smem:[#allocation2 + $0x8]]
        %s231 = sld [smem:[#allocation2 + $0x9]]
        %s232 = sld [smem:[#allocation2 + $0xa]]
        %s233 = sld [smem:[#allocation2 + $0xb]]
        %s234 = sld [smem:[#allocation2 + $0xc]]
        %s235 = sld [smem:[#allocation2 + $0xd]]
        %s236 = sld [smem:[#allocation2 + $0xe]]
        %s237 = sld [smem:[#allocation2 + $0xf]]
        %s238 = sld [smem:[#allocation2 + $0x10]]
        %s239 = sld [smem:[#allocation2 + $0x11]]
        %s240 = sld [smem:[#allocation2 + $0x12]]
        %s241 = sld [smem:[#allocation2 + $0x13]]
        %s242 = sld [smem:[#allocation2 + $0x14]]
        %s243 = sld [smem:[#allocation2 + $0x15]]
        %s244 = sld [smem:[#allocation2 + $0x16]]
        %s245 = sld [smem:[#allocation2 + $0x17]]
        %s246 = sld [smem:[#allocation2 + $0x18]]
        %s247 = sld [smem:[#allocation2 + $0x19]]
        %s248 = sld [smem:[#allocation2 + $0x1a]]
        %s249 = sld [smem:[#allocation2 + $0x1b]]
        %s250 = sld [smem:[#allocation2 + $0x1c]]
        %s251 = sld [smem:[#allocation2 + $0x1d]]
        %s252 = sld [smem:[#allocation2 + $0x1e]]
        %s253 = sld [smem:[#allocation2 + $0x1f]]
        %s254 = sld [smem:[#allocation2 + $0x20]]
        %s255 = sld [smem:[#allocation2 + $0x21]]
        %s256 = sld [smem:[#allocation2 + $0x22]]
        %s257 = sld [smem:[#allocation2 + $0x23]]
        %s258 = sld [smem:[#allocation2 + $0x24]]
        %s259 = sld [smem:[#allocation2 + $0x25]]
        %s260 = sld [smem:[#allocation2 + $0x26]]
        %s261 = sld [smem:[#allocation2 + $0x27]]
        %s262 = sld [smem:[#allocation2 + $0x28]]
        %s263 = sld [smem:[#allocation2 + $0x29]]
        %s264 = sld [smem:[#allocation2 + $0x2a]]
        %s265 = sld [smem:[#allocation2 + $0x2b]]
        %s266 = sld [smem:[#allocation2 + $0x2c]]
        %s267 = sld [smem:[#allocation2 + $0x2d]]
        %s268 = sld [smem:[#allocation2 + $0x2e]]
        %s269 = sld [smem:[#allocation2 + $0x2f]]
        %s270 = sld [smem:[#allocation2 + $0x30]]
        %s271 = sld [smem:[#allocation2 + $0x31]]
        %s272 = sld [smem:[#allocation2 + $0x32]]
        %s273 = sld [smem:[#allocation2 + $0x33]]
        %s274 = sld [smem:[#allocation2 + $0x34]]
        %s275 = sld [smem:[#allocation2 + $0x35]]
        %s276 = sld [smem:[#allocation2 + $0x36]]
        %s277 = sld [smem:[#allocation2 + $0x37]]
        %s278 = sld [smem:[#allocation2 + $0x38]]
        %s279 = sld [smem:[#allocation2 + $0x39]]
        %s280 = sld [smem:[#allocation2 + $0x3a]]
        %s281 = sld [smem:[#allocation2 + $0x3b]]
        %s282 = sld [smem:[#allocation2 + $0x3c]]
        %s283 = sld [smem:[#allocation2 + $0x3d]]
        %s284 = sld [smem:[#allocation2 + $0x3e]]
        %s285 = sld [smem:[#allocation2 + $0x3f]]
        %s286 = sld [smem:[#allocation2 + $0x40]]
        %s287 = sld [smem:[#allocation2 + $0x41]]
        %s288 = sld [smem:[#allocation2 + $0x42]]
        %s289 = sld [smem:[#allocation2 + $0x43]]
        %s290 = sld [smem:[#allocation2 + $0x44]]
        %s291 = sld [smem:[#allocation2 + $0x45]]
        %s292 = sld [smem:[#allocation2 + $0x46]]
        %s293 = sld [smem:[#allocation2 + $0x47]]
        %s294 = sld [smem:[#allocation2 + $0x48]]
        %s295 = sld [smem:[#allocation2 + $0x49]]
        %s296 = sld [smem:[#allocation2 + $0x4a]]
        %s297 = sld [smem:[#allocation2 + $0x4b]]
        %s298 = sld [smem:[#allocation2 + $0x4c]]
        %s299 = sld [smem:[#allocation2 + $0x4d]]
        %s300 = sld [smem:[#allocation2 + $0x4e]]
        %s301 = sld [smem:[#allocation2 + $0x4f]]
        %s302 = sld [smem:[#allocation2 + $0x50]]
        %s303 = sld [smem:[#allocation2 + $0x51]]
        %s304 = sld [smem:[#allocation2 + $0x52]]
        %s305 = sld [smem:[#allocation2 + $0x53]]
        %s306 = sld [smem:[#allocation2 + $0x54]]
        %s307 = sld [smem:[#allocation2 + $0x55]]
        %s308 = sld [smem:[#allocation2 + $0x56]]
        %s309 = sld [smem:[#allocation2 + $0x57]]
        %s310 = sld [smem:[#allocation2 + $0x58]]
        %s311 = sld [smem:[#allocation2 + $0x59]]
        %s312 = sld [smem:[#allocation2 + $0x5a]]
        %s313 = sld [smem:[#allocation2 + $0x5b]]
        %s314 = sld [smem:[#allocation2 + $0x5c]]
        %s315 = sld [smem:[#allocation2 + $0x5d]]
        %s316 = sld [smem:[#allocation2 + $0x5e]]
        %s317 = sld [smem:[#allocation2 + $0x5f]]
        %s318 = sld [smem:[#allocation2 + $0x60]]
        %s319 = sld [smem:[#allocation2 + $0x61]]
        %s320 = sld [smem:[#allocation2 + $0x62]]
        %s321 = sld [smem:[#allocation2 + $0x63]]
        %s322 = sld [smem:[#allocation2 + $0x64]]
        %s323 = sld [smem:[#allocation2 + $0x65]]
        %s324 = sld [smem:[#allocation2 + $0x66]]
        %s325 = sld [smem:[#allocation2 + $0x67]]
        %s326 = sld [smem:[#allocation2 + $0x68]]
        %s327 = sld [smem:[#allocation2 + $0x69]]
        %s328 = sld [smem:[#allocation2 + $0x6a]]
        %s329 = sld [smem:[#allocation2 + $0x6b]]
        %s330 = sld [smem:[#allocation2 + $0x6c]]
        %s331 = sld [smem:[#allocation2 + $0x6d]]
        %s332 = sld [smem:[#allocation2 + $0x6e]]
        %s333 = sld [smem:[#allocation2 + $0x6f]]
        %s334 = sld [smem:[#allocation2 + $0x70]]
        %s335 = sld [smem:[#allocation2 + $0x71]]
        %s336 = sld [smem:[#allocation2 + $0x72]]
        %s337 = sld [smem:[#allocation2 + $0x73]]
        %s338 = sld [smem:[#allocation2 + $0x74]]
        %s339 = sld [smem:[#allocation2 + $0x75]]
        %s340 = sld [smem:[#allocation2 + $0x76]]
        %s341 = sld [smem:[#allocation2 + $0x77]]
        %s342 = sld [smem:[#allocation2 + $0x78]]
        %s343 = sld [smem:[#allocation2 + $0x79]]
        %s344 = sld [smem:[#allocation2 + $0x7a]]
        %s345 = sld [smem:[#allocation2 + $0x7b]]
        %s346 = sld [smem:[#allocation2 + $0x7c]]
        %s347 = sld [smem:[#allocation2 + $0x7d]]
        %s348 = sld [smem:[#allocation2 + $0x7e]]
        %s349 = sld [smem:[#allocation2 + $0x7f]]
        %s350 = sld [smem:[#allocation2 + $0x80]]
        %s351 = sld [smem:[#allocation2 + $0x81]]
        %s352 = sld [smem:[#allocation2 + $0x82]]
        %s353 = sld [smem:[#allocation2 + $0x83]]
        %s354 = sld [smem:[#allocation2 + $0x84]]
        %s355 = sld [smem:[#allocation2 + $0x85]]
        %s356 = sld [smem:[#allocation2 + $0x86]]
        %s357 = sld [smem:[#allocation2 + $0x87]]
        %s358 = sld [smem:[#allocation2 + $0x88]]
        %s359 = sld [smem:[#allocation2 + $0x89]]
        %s360 = sld [smem:[#allocation2 + $0x8a]]
        %s361 = sld [smem:[#allocation2 + $0x8b]]
        %s362 = sld [smem:[#allocation2 + $0x8c]]
        %s363 = sld [smem:[#allocation2 + $0x8d]]
        %s364 = sld [smem:[#allocation2 + $0x8e]]
        %s365 = sld [smem:[#allocation2 + $0x8f]]
        %s366 = sld [smem:[#allocation2 + $0x90]]
        %s367 = sld [smem:[#allocation2 + $0x91]]
        %s368 = sld [smem:[#allocation2 + $0x92]]
        %s369 = sld [smem:[#allocation2 + $0x93]]
        %s370 = sld [smem:[#allocation2 + $0x94]]
        %s371 = sld [smem:[#allocation2 + $0x95]]
        %s372 = sld [smem:[#allocation2 + $0x96]]
        %s373 = sld [smem:[#allocation2 + $0x97]]
        %s374 = sld [smem:[#allocation2 + $0x98]]
        %s375 = sld [smem:[#allocation2 + $0x99]]
        %s376 = sld [smem:[#allocation2 + $0x9a]]
        %s377 = sld [smem:[#allocation2 + $0x9b]]
        %s378 = sld [smem:[#allocation2 + $0x9c]]
        %s379 = sld [smem:[#allocation2 + $0x9d]]
        %s380 = sld [smem:[#allocation2 + $0x9e]]
        %s381 = sld [smem:[#allocation2 + $0x9f]]
        %s382 = sld [smem:[#allocation2 + $0xa0]]
        %s383 = sld [smem:[#allocation2 + $0xa1]]
        %s384 = sld [smem:[#allocation2 + $0xa2]]
        %s385 = sld [smem:[#allocation2 + $0xa3]]
        %s386 = sld [smem:[#allocation2 + $0xa4]]
        %v387 = vlaneseq
        %v388 = vshrl.u32 %v387, 7
        %v389 = vadd.s32 %v388, 8
        %v390 = vlaneseq
        %v391 = vand.u32 %v390, 127
        %v392 = vand.u32 %v391, 15
        %vm393 = vcmp.gt.s32.totalorder %v388, 0
        %vm394 = vcmp.gt.s32.totalorder %v389, 0
        %vm395 = vcmp.lt.s32.totalorder %v388, 15
        %vm396 = vcmp.lt.s32.totalorder %v389, 15
        %vm397 = vcmp.gt.s32.totalorder %v392, 0
        %vm398 = vcmp.lt.s32.totalorder %v392, 15
        loop: start=0, step=1, limit=8
        $region45: #{tpu_custom_call.1} parent=31 // loop_pre_header
          _
        $region46: #{tpu_custom_call.1} parent=31 // loop_header
          %s400 = sphi 0, %s404
          %p401 = scmp.ge.s32.totalorder %s400, 8
        $region47: #{tpu_custom_call.1} parent=31 // loop_header_branch
          %403 = sbr.rel (%p401) target = $region51
        $region48: #{tpu_custom_call.1} parent=31 // loop_body
          %s405 = smul.u32 %s400, 16
          %s406 = scalar_lea.vmem %s192, %s405 [#allocation6]
          %v407 = vld [vmem:[%s406] sm:$0xff]
          %v408 = vld [vmem:[%s406 + $0x8] sm:$0xff]
          %s409 = sadd.s32 %s405, 128
          %s410 = scalar_lea.vmem %s192, %s409 [#allocation6]
          %v411 = vld [vmem:[%s410] sm:$0xff]
          %v412 = vld [vmem:[%s410 + $0x8] sm:$0xff]
          %s413 = sadd.s32 %s405, 256
          %s414 = scalar_lea.vmem %s192, %s413 [#allocation6]
          %v415 = vld [vmem:[%s414] sm:$0xff]
          %v416 = vld [vmem:[%s414 + $0x8] sm:$0xff]
          %v417 = vstv %s222
          %v418 = vmul.f32 %v407, %v417
          %v419 = vmul.f32 %v408, %v417
          %v420 = vstv %s223
          %v421 = vmul.f32 %v411, %v420
          %v422 = vmul.f32 %v412, %v420
          %v423 = vadd.f32 %v418, %v421
          %v424 = vadd.f32 %v419, %v422
          %v425 = vstv %s224
          %v426 = vmul.f32 %v415, %v425
          %v427 = vmul.f32 %v416, %v425
          %v428 = vadd.f32 %v423, %v426
          %v429 = vadd.f32 %v424, %v427
          %v430 = vstv %s231
          %v431 = vadd.f32 %v428, %v430
          %v432 = vadd.f32 %v429, %v430
          %v433 = vmax.f32 %v431, 0.0
          %v434 = vmax.f32 %v432, 0.0
          %v435 = vstv %s225
          %v436 = vmul.f32 %v407, %v435
          %v437 = vmul.f32 %v408, %v435
          %v438 = vstv %s226
          %v439 = vmul.f32 %v411, %v438
          %v440 = vmul.f32 %v412, %v438
          %v441 = vadd.f32 %v436, %v439
          %v442 = vadd.f32 %v437, %v440
          %v443 = vstv %s227
          %v444 = vmul.f32 %v415, %v443
          %v445 = vmul.f32 %v416, %v443
          %v446 = vadd.f32 %v441, %v444
          %v447 = vadd.f32 %v442, %v445
          %v448 = vstv %s232
          %v449 = vadd.f32 %v446, %v448
          %v450 = vadd.f32 %v447, %v448
          %v451 = vmax.f32 %v449, 0.0
          %v452 = vmax.f32 %v450, 0.0
          %v453 = vstv %s228
          %v454 = vmul.f32 %v407, %v453
          %v455 = vmul.f32 %v408, %v453
          %v456 = vstv %s229
          %v457 = vmul.f32 %v411, %v456
          %v458 = vmul.f32 %v412, %v456
          %v459 = vadd.f32 %v454, %v457
          %v460 = vadd.f32 %v455, %v458
          %v461 = vstv %s230
          %v462 = vmul.f32 %v415, %v461
          %v463 = vmul.f32 %v416, %v461
          %v464 = vadd.f32 %v459, %v462
          %v465 = vadd.f32 %v460, %v463
          %v466 = vstv %s233
          %v467 = vadd.f32 %v464, %v466
          %v468 = vadd.f32 %v465, %v466
          %v469 = vmax.f32 %v467, 0.0
          %v470 = vmax.f32 %v468, 0.0
          %471 = vrot.lane.b32.xlu0 %v433, 1
          %v472 = vpop.permute.xlu0 %471
          %473 = vrot.lane.b32.xlu0 %v434, 1
          %v474 = vpop.permute.xlu0 %473
          %v475 = vsel %vm397, %v472, 0.0
          %v476 = vsel %vm397, %v474, 0.0
          %477 = vrot.lane.b32.xlu0 %v433, 127
          %v478 = vpop.permute.xlu0 %477
          %479 = vrot.lane.b32.xlu0 %v434, 127
          %v480 = vpop.permute.xlu0 %479
          %v481 = vsel %vm398, %v478, 0.0
          %v482 = vsel %vm398, %v480, 0.0
          %v483 = vstv %s237
          %v484 = vmul.f32 %v475, %v483
          %v485 = vmul.f32 %v476, %v483
          %v486 = vstv %s238
          %v487 = vmul.f32 %v433, %v486
          %v488 = vmul.f32 %v434, %v486
          %v489 = vadd.f32 %v484, %v487
          %v490 = vadd.f32 %v485, %v488
          %v491 = vstv %s239
          %v492 = vmul.f32 %v481, %v491
          %v493 = vmul.f32 %v482, %v491
          %v494 = vadd.f32 %v489, %v492
          %v495 = vadd.f32 %v490, %v493
          %v496 = vrot.slane %v475, 7
          %v497 = vrot.slane %v476, 7
          %vm498 = vcmp.lt.s32.totalorder %v388, 1
          %v499 = vsel %vm498, %v496, %v497
          %v500 = vsel %vm498, %v497, %v496
          %v501 = vsel %vm393, %v500, 0.0
          %v502 = vsel %vm394, %v499, 0.0
          %v503 = vstv %s234
          %v504 = vmul.f32 %v501, %v503
          %v505 = vmul.f32 %v502, %v503
          %v506 = vadd.f32 %v494, %v504
          %v507 = vadd.f32 %v495, %v505
          %v508 = vrot.slane %v433, 7
          %v509 = vrot.slane %v434, 7
          %v510 = vsel %vm498, %v508, %v509
          %v511 = vsel %vm498, %v509, %v508
          %v512 = vsel %vm393, %v511, 0.0
          %v513 = vsel %vm394, %v510, 0.0
          %v514 = vstv %s235
          %v515 = vmul.f32 %v512, %v514
          %v516 = vmul.f32 %v513, %v514
          %v517 = vadd.f32 %v506, %v515
          %v518 = vadd.f32 %v507, %v516
          %v519 = vrot.slane %v481, 7
          %v520 = vrot.slane %v482, 7
          %v521 = vsel %vm498, %v519, %v520
          %v522 = vsel %vm498, %v520, %v519
          %v523 = vsel %vm393, %v522, 0.0
          %v524 = vsel %vm394, %v521, 0.0
          %v525 = vstv %s236
          %v526 = vmul.f32 %v523, %v525
          %v527 = vmul.f32 %v524, %v525
          %v528 = vadd.f32 %v517, %v526
          %v529 = vadd.f32 %v518, %v527
          %v530 = vrot.slane %v475, 1
          %v531 = vrot.slane %v476, 1
          %vm532 = vcmp.lt.s32.totalorder %v388, 7
          %v533 = vsel %vm532, %v530, %v531
          %v534 = vsel %vm532, %v531, %v530
          %v535 = vsel %vm395, %v533, 0.0
          %v536 = vsel %vm396, %v534, 0.0
          %v537 = vstv %s240
          %v538 = vmul.f32 %v535, %v537
          %v539 = vmul.f32 %v536, %v537
          %v540 = vadd.f32 %v528, %v538
          %v541 = vadd.f32 %v529, %v539
          %v542 = vrot.slane %v433, 1
          %v543 = vrot.slane %v434, 1
          %v544 = vsel %vm532, %v542, %v543
          %v545 = vsel %vm532, %v543, %v542
          %v546 = vsel %vm395, %v544, 0.0
          %v547 = vsel %vm396, %v545, 0.0
          %v548 = vstv %s241
          %v549 = vmul.f32 %v546, %v548
          %v550 = vmul.f32 %v547, %v548
          %v551 = vadd.f32 %v540, %v549
          %v552 = vadd.f32 %v541, %v550
          %v553 = vrot.slane %v481, 1
          %v554 = vrot.slane %v482, 1
          %v555 = vsel %vm532, %v553, %v554
          %v556 = vsel %vm532, %v554, %v553
          %v557 = vsel %vm395, %v555, 0.0
          %v558 = vsel %vm396, %v556, 0.0
          %v559 = vstv %s242
          %v560 = vmul.f32 %v557, %v559
          %v561 = vmul.f32 %v558, %v559
          %v562 = vadd.f32 %v551, %v560
          %v563 = vadd.f32 %v552, %v561
          %v564 = vstv %s261
          %v565 = vadd.f32 %v562, %v564
          %v566 = vadd.f32 %v563, %v564
          %v567 = vmax.f32 %v565, 0.0
          %v568 = vmax.f32 %v566, 0.0
          %569 = vrot.lane.b32.xlu0 %v451, 1
          %v570 = vpop.permute.xlu0 %569
          %571 = vrot.lane.b32.xlu0 %v452, 1
          %v572 = vpop.permute.xlu0 %571
          %v573 = vsel %vm397, %v570, 0.0
          %v574 = vsel %vm397, %v572, 0.0
          %575 = vrot.lane.b32.xlu0 %v451, 127
          %v576 = vpop.permute.xlu0 %575
          %577 = vrot.lane.b32.xlu0 %v452, 127
          %v578 = vpop.permute.xlu0 %577
          %v579 = vsel %vm398, %v576, 0.0
          %v580 = vsel %vm398, %v578, 0.0
          %v581 = vstv %s246
          %v582 = vmul.f32 %v573, %v581
          %v583 = vmul.f32 %v574, %v581
          %v584 = vstv %s247
          %v585 = vmul.f32 %v451, %v584
          %v586 = vmul.f32 %v452, %v584
          %v587 = vadd.f32 %v582, %v585
          %v588 = vadd.f32 %v583, %v586
          %v589 = vstv %s248
          %v590 = vmul.f32 %v579, %v589
          %v591 = vmul.f32 %v580, %v589
          %v592 = vadd.f32 %v587, %v590
          %v593 = vadd.f32 %v588, %v591
          %v594 = vrot.slane %v573, 7
          %v595 = vrot.slane %v574, 7
          %v596 = vsel %vm498, %v594, %v595
          %v597 = vsel %vm498, %v595, %v594
          %v598 = vsel %vm393, %v597, 0.0
          %v599 = vsel %vm394, %v596, 0.0
          %v600 = vstv %s243
          %v601 = vmul.f32 %v598, %v600
          %v602 = vmul.f32 %v599, %v600
          %v603 = vadd.f32 %v592, %v601
          %v604 = vadd.f32 %v593, %v602
          %v605 = vrot.slane %v451, 7
          %v606 = vrot.slane %v452, 7
          %v607 = vsel %vm498, %v605, %v606
          %v608 = vsel %vm498, %v606, %v605
          %v609 = vsel %vm393, %v608, 0.0
          %v610 = vsel %vm394, %v607, 0.0
          %v611 = vstv %s244
          %v612 = vmul.f32 %v609, %v611
          %v613 = vmul.f32 %v610, %v611
          %v614 = vadd.f32 %v603, %v612
          %v615 = vadd.f32 %v604, %v613
          %v616 = vrot.slane %v579, 7
          %v617 = vrot.slane %v580, 7
          %v618 = vsel %vm498, %v616, %v617
          %v619 = vsel %vm498, %v617, %v616
          %v620 = vsel %vm393, %v619, 0.0
          %v621 = vsel %vm394, %v618, 0.0
          %v622 = vstv %s245
          %v623 = vmul.f32 %v620, %v622
          %v624 = vmul.f32 %v621, %v622
          %v625 = vadd.f32 %v614, %v623
          %v626 = vadd.f32 %v615, %v624
          %v627 = vrot.slane %v573, 1
          %v628 = vrot.slane %v574, 1
          %v629 = vsel %vm532, %v627, %v628
          %v630 = vsel %vm532, %v628, %v627
          %v631 = vsel %vm395, %v629, 0.0
          %v632 = vsel %vm396, %v630, 0.0
          %v633 = vstv %s249
          %v634 = vmul.f32 %v631, %v633
          %v635 = vmul.f32 %v632, %v633
          %v636 = vadd.f32 %v625, %v634
          %v637 = vadd.f32 %v626, %v635
          %v638 = vrot.slane %v451, 1
          %v639 = vrot.slane %v452, 1
          %v640 = vsel %vm532, %v638, %v639
          %v641 = vsel %vm532, %v639, %v638
          %v642 = vsel %vm395, %v640, 0.0
          %v643 = vsel %vm396, %v641, 0.0
          %v644 = vstv %s250
          %v645 = vmul.f32 %v642, %v644
          %v646 = vmul.f32 %v643, %v644
          %v647 = vadd.f32 %v636, %v645
          %v648 = vadd.f32 %v637, %v646
          %v649 = vrot.slane %v579, 1
          %v650 = vrot.slane %v580, 1
          %v651 = vsel %vm532, %v649, %v650
          %v652 = vsel %vm532, %v650, %v649
          %v653 = vsel %vm395, %v651, 0.0
          %v654 = vsel %vm396, %v652, 0.0
          %v655 = vstv %s251
          %v656 = vmul.f32 %v653, %v655
          %v657 = vmul.f32 %v654, %v655
          %v658 = vadd.f32 %v647, %v656
          %v659 = vadd.f32 %v648, %v657
          %v660 = vstv %s262
          %v661 = vadd.f32 %v658, %v660
          %v662 = vadd.f32 %v659, %v660
          %v663 = vmax.f32 %v661, 0.0
          %v664 = vmax.f32 %v662, 0.0
          %665 = vrot.lane.b32.xlu0 %v469, 1
          %v666 = vpop.permute.xlu0 %665
          %667 = vrot.lane.b32.xlu0 %v470, 1
          %v668 = vpop.permute.xlu0 %667
          %v669 = vsel %vm397, %v666, 0.0
          %v670 = vsel %vm397, %v668, 0.0
          %671 = vrot.lane.b32.xlu0 %v469, 127
          %v672 = vpop.permute.xlu0 %671
          %673 = vrot.lane.b32.xlu0 %v470, 127
          %v674 = vpop.permute.xlu0 %673
          %v675 = vsel %vm398, %v672, 0.0
          %v676 = vsel %vm398, %v674, 0.0
          %v677 = vstv %s255
          %v678 = vmul.f32 %v669, %v677
          %v679 = vmul.f32 %v670, %v677
          %v680 = vstv %s256
          %v681 = vmul.f32 %v469, %v680
          %v682 = vmul.f32 %v470, %v680
          %v683 = vadd.f32 %v678, %v681
          %v684 = vadd.f32 %v679, %v682
          %v685 = vstv %s257
          %v686 = vmul.f32 %v675, %v685
          %v687 = vmul.f32 %v676, %v685
          %v688 = vadd.f32 %v683, %v686
          %v689 = vadd.f32 %v684, %v687
          %v690 = vrot.slane %v669, 7
          %v691 = vrot.slane %v670, 7
          %v692 = vsel %vm498, %v690, %v691
          %v693 = vsel %vm498, %v691, %v690
          %v694 = vsel %vm393, %v693, 0.0
          %v695 = vsel %vm394, %v692, 0.0
          %v696 = vstv %s252
          %v697 = vmul.f32 %v694, %v696
          %v698 = vmul.f32 %v695, %v696
          %v699 = vadd.f32 %v688, %v697
          %v700 = vadd.f32 %v689, %v698
          %v701 = vrot.slane %v469, 7
          %v702 = vrot.slane %v470, 7
          %v703 = vsel %vm498, %v701, %v702
          %v704 = vsel %vm498, %v702, %v701
          %v705 = vsel %vm393, %v704, 0.0
          %v706 = vsel %vm394, %v703, 0.0
          %v707 = vstv %s253
          %v708 = vmul.f32 %v705, %v707
          %v709 = vmul.f32 %v706, %v707
          %v710 = vadd.f32 %v699, %v708
          %v711 = vadd.f32 %v700, %v709
          %v712 = vrot.slane %v675, 7
          %v713 = vrot.slane %v676, 7
          %v714 = vsel %vm498, %v712, %v713
          %v715 = vsel %vm498, %v713, %v712
          %v716 = vsel %vm393, %v715, 0.0
          %v717 = vsel %vm394, %v714, 0.0
          %v718 = vstv %s254
          %v719 = vmul.f32 %v716, %v718
          %v720 = vmul.f32 %v717, %v718
          %v721 = vadd.f32 %v710, %v719
          %v722 = vadd.f32 %v711, %v720
          %v723 = vrot.slane %v669, 1
          %v724 = vrot.slane %v670, 1
          %v725 = vsel %vm532, %v723, %v724
          %v726 = vsel %vm532, %v724, %v723
          %v727 = vsel %vm395, %v725, 0.0
          %v728 = vsel %vm396, %v726, 0.0
          %v729 = vstv %s258
          %v730 = vmul.f32 %v727, %v729
          %v731 = vmul.f32 %v728, %v729
          %v732 = vadd.f32 %v721, %v730
          %v733 = vadd.f32 %v722, %v731
          %v734 = vrot.slane %v469, 1
          %v735 = vrot.slane %v470, 1
          %v736 = vsel %vm532, %v734, %v735
          %v737 = vsel %vm532, %v735, %v734
          %v738 = vsel %vm395, %v736, 0.0
          %v739 = vsel %vm396, %v737, 0.0
          %v740 = vstv %s259
          %v741 = vmul.f32 %v738, %v740
          %v742 = vmul.f32 %v739, %v740
          %v743 = vadd.f32 %v732, %v741
          %v744 = vadd.f32 %v733, %v742
          %v745 = vrot.slane %v675, 1
          %v746 = vrot.slane %v676, 1
          %v747 = vsel %vm532, %v745, %v746
          %v748 = vsel %vm532, %v746, %v745
          %v749 = vsel %vm395, %v747, 0.0
          %v750 = vsel %vm396, %v748, 0.0
          %v751 = vstv %s260
          %v752 = vmul.f32 %v749, %v751
          %v753 = vmul.f32 %v750, %v751
          %v754 = vadd.f32 %v743, %v752
          %v755 = vadd.f32 %v744, %v753
          %v756 = vstv %s263
          %v757 = vadd.f32 %v754, %v756
          %v758 = vadd.f32 %v755, %v756
          %v759 = vmax.f32 %v757, 0.0
          %v760 = vmax.f32 %v758, 0.0
          %v761 = vstv %s264
          %v762 = vmul.f32 %v567, %v761
          %v763 = vmul.f32 %v568, %v761
          %v764 = vstv %s265
          %v765 = vmul.f32 %v663, %v764
          %v766 = vmul.f32 %v664, %v764
          %v767 = vadd.f32 %v762, %v765
          %v768 = vadd.f32 %v763, %v766
          %v769 = vstv %s266
          %v770 = vmul.f32 %v759, %v769
          %v771 = vmul.f32 %v760, %v769
          %v772 = vadd.f32 %v767, %v770
          %v773 = vadd.f32 %v768, %v771
          %v774 = vstv %s273
          %v775 = vadd.f32 %v772, %v774
          %v776 = vadd.f32 %v773, %v774
          %v777 = vadd.f32 %v775, %v407
          %v778 = vadd.f32 %v776, %v408
          %v779 = vmax.f32 %v777, 0.0
          %v780 = vmax.f32 %v778, 0.0
          %v781 = vstv %s267
          %v782 = vmul.f32 %v567, %v781
          %v783 = vmul.f32 %v568, %v781
          %v784 = vstv %s268
          %v785 = vmul.f32 %v663, %v784
          %v786 = vmul.f32 %v664, %v784
          %v787 = vadd.f32 %v782, %v785
          %v788 = vadd.f32 %v783, %v786
          %v789 = vstv %s269
          %v790 = vmul.f32 %v759, %v789
          %v791 = vmul.f32 %v760, %v789
          %v792 = vadd.f32 %v787, %v790
          %v793 = vadd.f32 %v788, %v791
          %v794 = vstv %s274
          %v795 = vadd.f32 %v792, %v794
          %v796 = vadd.f32 %v793, %v794
          %v797 = vadd.f32 %v795, %v411
          %v798 = vadd.f32 %v796, %v412
          %v799 = vmax.f32 %v797, 0.0
          %v800 = vmax.f32 %v798, 0.0
          %v801 = vstv %s270
          %v802 = vmul.f32 %v567, %v801
          %v803 = vmul.f32 %v568, %v801
          %v804 = vstv %s271
          %v805 = vmul.f32 %v663, %v804
          %v806 = vmul.f32 %v664, %v804
          %v807 = vadd.f32 %v802, %v805
          %v808 = vadd.f32 %v803, %v806
          %v809 = vstv %s272
          %v810 = vmul.f32 %v759, %v809
          %v811 = vmul.f32 %v760, %v809
          %v812 = vadd.f32 %v807, %v810
          %v813 = vadd.f32 %v808, %v811
          %v814 = vstv %s275
          %v815 = vadd.f32 %v812, %v814
          %v816 = vadd.f32 %v813, %v814
          %v817 = vadd.f32 %v815, %v415
          %v818 = vadd.f32 %v816, %v416
          %v819 = vmax.f32 %v817, 0.0
          %v820 = vmax.f32 %v818, 0.0
          %v821 = vstv %s276
          %v822 = vmul.f32 %v779, %v821
          %v823 = vmul.f32 %v780, %v821
          %v824 = vstv %s277
          %v825 = vmul.f32 %v799, %v824
          %v826 = vmul.f32 %v800, %v824
          %v827 = vadd.f32 %v822, %v825
          %v828 = vadd.f32 %v823, %v826
          %v829 = vstv %s278
          %v830 = vmul.f32 %v819, %v829
          %v831 = vmul.f32 %v820, %v829
          %v832 = vadd.f32 %v827, %v830
          %v833 = vadd.f32 %v828, %v831
          %v834 = vstv %s285
          %v835 = vadd.f32 %v832, %v834
          %v836 = vadd.f32 %v833, %v834
          %v837 = vmax.f32 %v835, 0.0
          %v838 = vmax.f32 %v836, 0.0
          %v839 = vstv %s279
          %v840 = vmul.f32 %v779, %v839
          %v841 = vmul.f32 %v780, %v839
          %v842 = vstv %s280
          %v843 = vmul.f32 %v799, %v842
          %v844 = vmul.f32 %v800, %v842
          %v845 = vadd.f32 %v840, %v843
          %v846 = vadd.f32 %v841, %v844
          %v847 = vstv %s281
          %v848 = vmul.f32 %v819, %v847
          %v849 = vmul.f32 %v820, %v847
          %v850 = vadd.f32 %v845, %v848
          %v851 = vadd.f32 %v846, %v849
          %v852 = vstv %s286
          %v853 = vadd.f32 %v850, %v852
          %v854 = vadd.f32 %v851, %v852
          %v855 = vmax.f32 %v853, 0.0
          %v856 = vmax.f32 %v854, 0.0
          %v857 = vstv %s282
          %v858 = vmul.f32 %v779, %v857
          %v859 = vmul.f32 %v780, %v857
          %v860 = vstv %s283
          %v861 = vmul.f32 %v799, %v860
          %v862 = vmul.f32 %v800, %v860
          %v863 = vadd.f32 %v858, %v861
          %v864 = vadd.f32 %v859, %v862
          %v865 = vstv %s284
          %v866 = vmul.f32 %v819, %v865
          %v867 = vmul.f32 %v820, %v865
          %v868 = vadd.f32 %v863, %v866
          %v869 = vadd.f32 %v864, %v867
          %v870 = vstv %s287
          %v871 = vadd.f32 %v868, %v870
          %v872 = vadd.f32 %v869, %v870
          %v873 = vmax.f32 %v871, 0.0
          %v874 = vmax.f32 %v872, 0.0
          %875 = vrot.lane.b32.xlu0 %v837, 1
          %v876 = vpop.permute.xlu0 %875
          %877 = vrot.lane.b32.xlu0 %v838, 1
          %v878 = vpop.permute.xlu0 %877
          %v879 = vsel %vm397, %v876, 0.0
          %v880 = vsel %vm397, %v878, 0.0
          %881 = vrot.lane.b32.xlu0 %v837, 127
          %v882 = vpop.permute.xlu0 %881
          %883 = vrot.lane.b32.xlu0 %v838, 127
          %v884 = vpop.permute.xlu0 %883
          %v885 = vsel %vm398, %v882, 0.0
          %v886 = vsel %vm398, %v884, 0.0
          %v887 = vstv %s291
          %v888 = vmul.f32 %v879, %v887
          %v889 = vmul.f32 %v880, %v887
          %v890 = vstv %s292
          %v891 = vmul.f32 %v837, %v890
          %v892 = vmul.f32 %v838, %v890
          %v893 = vadd.f32 %v888, %v891
          %v894 = vadd.f32 %v889, %v892
          %v895 = vstv %s293
          %v896 = vmul.f32 %v885, %v895
          %v897 = vmul.f32 %v886, %v895
          %v898 = vadd.f32 %v893, %v896
          %v899 = vadd.f32 %v894, %v897
          %v900 = vrot.slane %v879, 7
          %v901 = vrot.slane %v880, 7
          %v902 = vsel %vm498, %v900, %v901
          %v903 = vsel %vm498, %v901, %v900
          %v904 = vsel %vm393, %v903, 0.0
          %v905 = vsel %vm394, %v902, 0.0
          %v906 = vstv %s288
          %v907 = vmul.f32 %v904, %v906
          %v908 = vmul.f32 %v905, %v906
          %v909 = vadd.f32 %v898, %v907
          %v910 = vadd.f32 %v899, %v908
          %v911 = vrot.slane %v837, 7
          %v912 = vrot.slane %v838, 7
          %v913 = vsel %vm498, %v911, %v912
          %v914 = vsel %vm498, %v912, %v911
          %v915 = vsel %vm393, %v914, 0.0
          %v916 = vsel %vm394, %v913, 0.0
          %v917 = vstv %s289
          %v918 = vmul.f32 %v915, %v917
          %v919 = vmul.f32 %v916, %v917
          %v920 = vadd.f32 %v909, %v918
          %v921 = vadd.f32 %v910, %v919
          %v922 = vrot.slane %v885, 7
          %v923 = vrot.slane %v886, 7
          %v924 = vsel %vm498, %v922, %v923
          %v925 = vsel %vm498, %v923, %v922
          %v926 = vsel %vm393, %v925, 0.0
          %v927 = vsel %vm394, %v924, 0.0
          %v928 = vstv %s290
          %v929 = vmul.f32 %v926, %v928
          %v930 = vmul.f32 %v927, %v928
          %v931 = vadd.f32 %v920, %v929
          %v932 = vadd.f32 %v921, %v930
          %v933 = vrot.slane %v879, 1
          %v934 = vrot.slane %v880, 1
          %v935 = vsel %vm532, %v933, %v934
          %v936 = vsel %vm532, %v934, %v933
          %v937 = vsel %vm395, %v935, 0.0
          %v938 = vsel %vm396, %v936, 0.0
          %v939 = vstv %s294
          %v940 = vmul.f32 %v937, %v939
          %v941 = vmul.f32 %v938, %v939
          %v942 = vadd.f32 %v931, %v940
          %v943 = vadd.f32 %v932, %v941
          %v944 = vrot.slane %v837, 1
          %v945 = vrot.slane %v838, 1
          %v946 = vsel %vm532, %v944, %v945
          %v947 = vsel %vm532, %v945, %v944
          %v948 = vsel %vm395, %v946, 0.0
          %v949 = vsel %vm396, %v947, 0.0
          %v950 = vstv %s295
          %v951 = vmul.f32 %v948, %v950
          %v952 = vmul.f32 %v949, %v950
          %v953 = vadd.f32 %v942, %v951
          %v954 = vadd.f32 %v943, %v952
          %v955 = vrot.slane %v885, 1
          %v956 = vrot.slane %v886, 1
          %v957 = vsel %vm532, %v955, %v956
          %v958 = vsel %vm532, %v956, %v955
          %v959 = vsel %vm395, %v957, 0.0
          %v960 = vsel %vm396, %v958, 0.0
          %v961 = vstv %s296
          %v962 = vmul.f32 %v959, %v961
          %v963 = vmul.f32 %v960, %v961
          %v964 = vadd.f32 %v953, %v962
          %v965 = vadd.f32 %v954, %v963
          %v966 = vstv %s315
          %v967 = vadd.f32 %v964, %v966
          %v968 = vadd.f32 %v965, %v966
          %v969 = vmax.f32 %v967, 0.0
          %v970 = vmax.f32 %v968, 0.0
          %971 = vrot.lane.b32.xlu0 %v855, 1
          %v972 = vpop.permute.xlu0 %971
          %973 = vrot.lane.b32.xlu0 %v856, 1
          %v974 = vpop.permute.xlu0 %973
          %v975 = vsel %vm397, %v972, 0.0
          %v976 = vsel %vm397, %v974, 0.0
          %977 = vrot.lane.b32.xlu0 %v855, 127
          %v978 = vpop.permute.xlu0 %977
          %979 = vrot.lane.b32.xlu0 %v856, 127
          %v980 = vpop.permute.xlu0 %979
          %v981 = vsel %vm398, %v978, 0.0
          %v982 = vsel %vm398, %v980, 0.0
          %v983 = vstv %s300
          %v984 = vmul.f32 %v975, %v983
          %v985 = vmul.f32 %v976, %v983
          %v986 = vstv %s301
          %v987 = vmul.f32 %v855, %v986
          %v988 = vmul.f32 %v856, %v986
          %v989 = vadd.f32 %v984, %v987
          %v990 = vadd.f32 %v985, %v988
          %v991 = vstv %s302
          %v992 = vmul.f32 %v981, %v991
          %v993 = vmul.f32 %v982, %v991
          %v994 = vadd.f32 %v989, %v992
          %v995 = vadd.f32 %v990, %v993
          %v996 = vrot.slane %v975, 7
          %v997 = vrot.slane %v976, 7
          %v998 = vsel %vm498, %v996, %v997
          %v999 = vsel %vm498, %v997, %v996
          %v1000 = vsel %vm393, %v999, 0.0
          %v1001 = vsel %vm394, %v998, 0.0
          %v1002 = vstv %s297
          %v1003 = vmul.f32 %v1000, %v1002
          %v1004 = vmul.f32 %v1001, %v1002
          %v1005 = vadd.f32 %v994, %v1003
          %v1006 = vadd.f32 %v995, %v1004
          %v1007 = vrot.slane %v855, 7
          %v1008 = vrot.slane %v856, 7
          %v1009 = vsel %vm498, %v1007, %v1008
          %v1010 = vsel %vm498, %v1008, %v1007
          %v1011 = vsel %vm393, %v1010, 0.0
          %v1012 = vsel %vm394, %v1009, 0.0
          %v1013 = vstv %s298
          %v1014 = vmul.f32 %v1011, %v1013
          %v1015 = vmul.f32 %v1012, %v1013
          %v1016 = vadd.f32 %v1005, %v1014
          %v1017 = vadd.f32 %v1006, %v1015
          %v1018 = vrot.slane %v981, 7
          %v1019 = vrot.slane %v982, 7
          %v1020 = vsel %vm498, %v1018, %v1019
          %v1021 = vsel %vm498, %v1019, %v1018
          %v1022 = vsel %vm393, %v1021, 0.0
          %v1023 = vsel %vm394, %v1020, 0.0
          %v1024 = vstv %s299
          %v1025 = vmul.f32 %v1022, %v1024
          %v1026 = vmul.f32 %v1023, %v1024
          %v1027 = vadd.f32 %v1016, %v1025
          %v1028 = vadd.f32 %v1017, %v1026
          %v1029 = vrot.slane %v975, 1
          %v1030 = vrot.slane %v976, 1
          %v1031 = vsel %vm532, %v1029, %v1030
          %v1032 = vsel %vm532, %v1030, %v1029
          %v1033 = vsel %vm395, %v1031, 0.0
          %v1034 = vsel %vm396, %v1032, 0.0
          %v1035 = vstv %s303
          %v1036 = vmul.f32 %v1033, %v1035
          %v1037 = vmul.f32 %v1034, %v1035
          %v1038 = vadd.f32 %v1027, %v1036
          %v1039 = vadd.f32 %v1028, %v1037
          %v1040 = vrot.slane %v855, 1
          %v1041 = vrot.slane %v856, 1
          %v1042 = vsel %vm532, %v1040, %v1041
          %v1043 = vsel %vm532, %v1041, %v1040
          %v1044 = vsel %vm395, %v1042, 0.0
          %v1045 = vsel %vm396, %v1043, 0.0
          %v1046 = vstv %s304
          %v1047 = vmul.f32 %v1044, %v1046
          %v1048 = vmul.f32 %v1045, %v1046
          %v1049 = vadd.f32 %v1038, %v1047
          %v1050 = vadd.f32 %v1039, %v1048
          %v1051 = vrot.slane %v981, 1
          %v1052 = vrot.slane %v982, 1
          %v1053 = vsel %vm532, %v1051, %v1052
          %v1054 = vsel %vm532, %v1052, %v1051
          %v1055 = vsel %vm395, %v1053, 0.0
          %v1056 = vsel %vm396, %v1054, 0.0
          %v1057 = vstv %s305
          %v1058 = vmul.f32 %v1055, %v1057
          %v1059 = vmul.f32 %v1056, %v1057
          %v1060 = vadd.f32 %v1049, %v1058
          %v1061 = vadd.f32 %v1050, %v1059
          %v1062 = vstv %s316
          %v1063 = vadd.f32 %v1060, %v1062
          %v1064 = vadd.f32 %v1061, %v1062
          %v1065 = vmax.f32 %v1063, 0.0
          %v1066 = vmax.f32 %v1064, 0.0
          %1067 = vrot.lane.b32.xlu0 %v873, 1
          %v1068 = vpop.permute.xlu0 %1067
          %1069 = vrot.lane.b32.xlu0 %v874, 1
          %v1070 = vpop.permute.xlu0 %1069
          %v1071 = vsel %vm397, %v1068, 0.0
          %v1072 = vsel %vm397, %v1070, 0.0
          %1073 = vrot.lane.b32.xlu0 %v873, 127
          %v1074 = vpop.permute.xlu0 %1073
          %1075 = vrot.lane.b32.xlu0 %v874, 127
          %v1076 = vpop.permute.xlu0 %1075
          %v1077 = vsel %vm398, %v1074, 0.0
          %v1078 = vsel %vm398, %v1076, 0.0
          %v1079 = vstv %s309
          %v1080 = vmul.f32 %v1071, %v1079
          %v1081 = vmul.f32 %v1072, %v1079
          %v1082 = vstv %s310
          %v1083 = vmul.f32 %v873, %v1082
          %v1084 = vmul.f32 %v874, %v1082
          %v1085 = vadd.f32 %v1080, %v1083
          %v1086 = vadd.f32 %v1081, %v1084
          %v1087 = vstv %s311
          %v1088 = vmul.f32 %v1077, %v1087
          %v1089 = vmul.f32 %v1078, %v1087
          %v1090 = vadd.f32 %v1085, %v1088
          %v1091 = vadd.f32 %v1086, %v1089
          %v1092 = vrot.slane %v1071, 7
          %v1093 = vrot.slane %v1072, 7
          %v1094 = vsel %vm498, %v1092, %v1093
          %v1095 = vsel %vm498, %v1093, %v1092
          %v1096 = vsel %vm393, %v1095, 0.0
          %v1097 = vsel %vm394, %v1094, 0.0
          %v1098 = vstv %s306
          %v1099 = vmul.f32 %v1096, %v1098
          %v1100 = vmul.f32 %v1097, %v1098
          %v1101 = vadd.f32 %v1090, %v1099
          %v1102 = vadd.f32 %v1091, %v1100
          %v1103 = vrot.slane %v873, 7
          %v1104 = vrot.slane %v874, 7
          %v1105 = vsel %vm498, %v1103, %v1104
          %v1106 = vsel %vm498, %v1104, %v1103
          %v1107 = vsel %vm393, %v1106, 0.0
          %v1108 = vsel %vm394, %v1105, 0.0
          %v1109 = vstv %s307
          %v1110 = vmul.f32 %v1107, %v1109
          %v1111 = vmul.f32 %v1108, %v1109
          %v1112 = vadd.f32 %v1101, %v1110
          %v1113 = vadd.f32 %v1102, %v1111
          %v1114 = vrot.slane %v1077, 7
          %v1115 = vrot.slane %v1078, 7
          %v1116 = vsel %vm498, %v1114, %v1115
          %v1117 = vsel %vm498, %v1115, %v1114
          %v1118 = vsel %vm393, %v1117, 0.0
          %v1119 = vsel %vm394, %v1116, 0.0
          %v1120 = vstv %s308
          %v1121 = vmul.f32 %v1118, %v1120
          %v1122 = vmul.f32 %v1119, %v1120
          %v1123 = vadd.f32 %v1112, %v1121
          %v1124 = vadd.f32 %v1113, %v1122
          %v1125 = vrot.slane %v1071, 1
          %v1126 = vrot.slane %v1072, 1
          %v1127 = vsel %vm532, %v1125, %v1126
          %v1128 = vsel %vm532, %v1126, %v1125
          %v1129 = vsel %vm395, %v1127, 0.0
          %v1130 = vsel %vm396, %v1128, 0.0
          %v1131 = vstv %s312
          %v1132 = vmul.f32 %v1129, %v1131
          %v1133 = vmul.f32 %v1130, %v1131
          %v1134 = vadd.f32 %v1123, %v1132
          %v1135 = vadd.f32 %v1124, %v1133
          %v1136 = vrot.slane %v873, 1
          %v1137 = vrot.slane %v874, 1
          %v1138 = vsel %vm532, %v1136, %v1137
          %v1139 = vsel %vm532, %v1137, %v1136
          %v1140 = vsel %vm395, %v1138, 0.0
          %v1141 = vsel %vm396, %v1139, 0.0
          %v1142 = vstv %s313
          %v1143 = vmul.f32 %v1140, %v1142
          %v1144 = vmul.f32 %v1141, %v1142
          %v1145 = vadd.f32 %v1134, %v1143
          %v1146 = vadd.f32 %v1135, %v1144
          %v1147 = vrot.slane %v1077, 1
          %v1148 = vrot.slane %v1078, 1
          %v1149 = vsel %vm532, %v1147, %v1148
          %v1150 = vsel %vm532, %v1148, %v1147
          %v1151 = vsel %vm395, %v1149, 0.0
          %v1152 = vsel %vm396, %v1150, 0.0
          %v1153 = vstv %s314
          %v1154 = vmul.f32 %v1151, %v1153
          %v1155 = vmul.f32 %v1152, %v1153
          %v1156 = vadd.f32 %v1145, %v1154
          %v1157 = vadd.f32 %v1146, %v1155
          %v1158 = vstv %s317
          %v1159 = vadd.f32 %v1156, %v1158
          %v1160 = vadd.f32 %v1157, %v1158
          %v1161 = vmax.f32 %v1159, 0.0
          %v1162 = vmax.f32 %v1160, 0.0
          %v1163 = vstv %s318
          %v1164 = vmul.f32 %v969, %v1163
          %v1165 = vmul.f32 %v970, %v1163
          %v1166 = vstv %s319
          %v1167 = vmul.f32 %v1065, %v1166
          %v1168 = vmul.f32 %v1066, %v1166
          %v1169 = vadd.f32 %v1164, %v1167
          %v1170 = vadd.f32 %v1165, %v1168
          %v1171 = vstv %s320
          %v1172 = vmul.f32 %v1161, %v1171
          %v1173 = vmul.f32 %v1162, %v1171
          %v1174 = vadd.f32 %v1169, %v1172
          %v1175 = vadd.f32 %v1170, %v1173
          %v1176 = vstv %s327
          %v1177 = vadd.f32 %v1174, %v1176
          %v1178 = vadd.f32 %v1175, %v1176
          %v1179 = vadd.f32 %v1177, %v779
          %v1180 = vadd.f32 %v1178, %v780
          %v1181 = vmax.f32 %v1179, 0.0
          %v1182 = vmax.f32 %v1180, 0.0
          %v1183 = vstv %s321
          %v1184 = vmul.f32 %v969, %v1183
          %v1185 = vmul.f32 %v970, %v1183
          %v1186 = vstv %s322
          %v1187 = vmul.f32 %v1065, %v1186
          %v1188 = vmul.f32 %v1066, %v1186
          %v1189 = vadd.f32 %v1184, %v1187
          %v1190 = vadd.f32 %v1185, %v1188
          %v1191 = vstv %s323
          %v1192 = vmul.f32 %v1161, %v1191
          %v1193 = vmul.f32 %v1162, %v1191
          %v1194 = vadd.f32 %v1189, %v1192
          %v1195 = vadd.f32 %v1190, %v1193
          %v1196 = vstv %s328
          %v1197 = vadd.f32 %v1194, %v1196
          %v1198 = vadd.f32 %v1195, %v1196
          %v1199 = vadd.f32 %v1197, %v799
          %v1200 = vadd.f32 %v1198, %v800
          %v1201 = vmax.f32 %v1199, 0.0
          %v1202 = vmax.f32 %v1200, 0.0
          %v1203 = vstv %s324
          %v1204 = vmul.f32 %v969, %v1203
          %v1205 = vmul.f32 %v970, %v1203
          %v1206 = vstv %s325
          %v1207 = vmul.f32 %v1065, %v1206
          %v1208 = vmul.f32 %v1066, %v1206
          %v1209 = vadd.f32 %v1204, %v1207
          %v1210 = vadd.f32 %v1205, %v1208
          %v1211 = vstv %s326
          %v1212 = vmul.f32 %v1161, %v1211
          %v1213 = vmul.f32 %v1162, %v1211
          %v1214 = vadd.f32 %v1209, %v1212
          %v1215 = vadd.f32 %v1210, %v1213
          %v1216 = vstv %s329
          %v1217 = vadd.f32 %v1214, %v1216
          %v1218 = vadd.f32 %v1215, %v1216
          %v1219 = vadd.f32 %v1217, %v819
          %v1220 = vadd.f32 %v1218, %v820
          %v1221 = vmax.f32 %v1219, 0.0
          %v1222 = vmax.f32 %v1220, 0.0
          %v1223 = vstv %s330
          %v1224 = vmul.f32 %v1181, %v1223
          %v1225 = vmul.f32 %v1182, %v1223
          %v1226 = vstv %s331
          %v1227 = vmul.f32 %v1201, %v1226
          %v1228 = vmul.f32 %v1202, %v1226
          %v1229 = vadd.f32 %v1224, %v1227
          %v1230 = vadd.f32 %v1225, %v1228
          %v1231 = vstv %s332
          %v1232 = vmul.f32 %v1221, %v1231
          %v1233 = vmul.f32 %v1222, %v1231
          %v1234 = vadd.f32 %v1229, %v1232
          %v1235 = vadd.f32 %v1230, %v1233
          %v1236 = vstv %s339
          %v1237 = vadd.f32 %v1234, %v1236
          %v1238 = vadd.f32 %v1235, %v1236
          %v1239 = vmax.f32 %v1237, 0.0
          %v1240 = vmax.f32 %v1238, 0.0
          %v1241 = vstv %s333
          %v1242 = vmul.f32 %v1181, %v1241
          %v1243 = vmul.f32 %v1182, %v1241
          %v1244 = vstv %s334
          %v1245 = vmul.f32 %v1201, %v1244
          %v1246 = vmul.f32 %v1202, %v1244
          %v1247 = vadd.f32 %v1242, %v1245
          %v1248 = vadd.f32 %v1243, %v1246
          %v1249 = vstv %s335
          %v1250 = vmul.f32 %v1221, %v1249
          %v1251 = vmul.f32 %v1222, %v1249
          %v1252 = vadd.f32 %v1247, %v1250
          %v1253 = vadd.f32 %v1248, %v1251
          %v1254 = vstv %s340
          %v1255 = vadd.f32 %v1252, %v1254
          %v1256 = vadd.f32 %v1253, %v1254
          %v1257 = vmax.f32 %v1255, 0.0
          %v1258 = vmax.f32 %v1256, 0.0
          %v1259 = vstv %s336
          %v1260 = vmul.f32 %v1181, %v1259
          %v1261 = vmul.f32 %v1182, %v1259
          %v1262 = vstv %s337
          %v1263 = vmul.f32 %v1201, %v1262
          %v1264 = vmul.f32 %v1202, %v1262
          %v1265 = vadd.f32 %v1260, %v1263
          %v1266 = vadd.f32 %v1261, %v1264
          %v1267 = vstv %s338
          %v1268 = vmul.f32 %v1221, %v1267
          %v1269 = vmul.f32 %v1222, %v1267
          %v1270 = vadd.f32 %v1265, %v1268
          %v1271 = vadd.f32 %v1266, %v1269
          %v1272 = vstv %s341
          %v1273 = vadd.f32 %v1270, %v1272
          %v1274 = vadd.f32 %v1271, %v1272
          %v1275 = vmax.f32 %v1273, 0.0
          %v1276 = vmax.f32 %v1274, 0.0
          %1277 = vrot.lane.b32.xlu0 %v1239, 1
          %v1278 = vpop.permute.xlu0 %1277
          %1279 = vrot.lane.b32.xlu0 %v1240, 1
          %v1280 = vpop.permute.xlu0 %1279
          %v1281 = vsel %vm397, %v1278, 0.0
          %v1282 = vsel %vm397, %v1280, 0.0
          %1283 = vrot.lane.b32.xlu0 %v1239, 127
          %v1284 = vpop.permute.xlu0 %1283
          %1285 = vrot.lane.b32.xlu0 %v1240, 127
          %v1286 = vpop.permute.xlu0 %1285
          %v1287 = vsel %vm398, %v1284, 0.0
          %v1288 = vsel %vm398, %v1286, 0.0
          %v1289 = vstv %s345
          %v1290 = vmul.f32 %v1281, %v1289
          %v1291 = vmul.f32 %v1282, %v1289
          %v1292 = vstv %s346
          %v1293 = vmul.f32 %v1239, %v1292
          %v1294 = vmul.f32 %v1240, %v1292
          %v1295 = vadd.f32 %v1290, %v1293
          %v1296 = vadd.f32 %v1291, %v1294
          %v1297 = vstv %s347
          %v1298 = vmul.f32 %v1287, %v1297
          %v1299 = vmul.f32 %v1288, %v1297
          %v1300 = vadd.f32 %v1295, %v1298
          %v1301 = vadd.f32 %v1296, %v1299
          %v1302 = vrot.slane %v1281, 7
          %v1303 = vrot.slane %v1282, 7
          %v1304 = vsel %vm498, %v1302, %v1303
          %v1305 = vsel %vm498, %v1303, %v1302
          %v1306 = vsel %vm393, %v1305, 0.0
          %v1307 = vsel %vm394, %v1304, 0.0
          %v1308 = vstv %s342
          %v1309 = vmul.f32 %v1306, %v1308
          %v1310 = vmul.f32 %v1307, %v1308
          %v1311 = vadd.f32 %v1300, %v1309
          %v1312 = vadd.f32 %v1301, %v1310
          %v1313 = vrot.slane %v1239, 7
          %v1314 = vrot.slane %v1240, 7
          %v1315 = vsel %vm498, %v1313, %v1314
          %v1316 = vsel %vm498, %v1314, %v1313
          %v1317 = vsel %vm393, %v1316, 0.0
          %v1318 = vsel %vm394, %v1315, 0.0
          %v1319 = vstv %s343
          %v1320 = vmul.f32 %v1317, %v1319
          %v1321 = vmul.f32 %v1318, %v1319
          %v1322 = vadd.f32 %v1311, %v1320
          %v1323 = vadd.f32 %v1312, %v1321
          %v1324 = vrot.slane %v1287, 7
          %v1325 = vrot.slane %v1288, 7
          %v1326 = vsel %vm498, %v1324, %v1325
          %v1327 = vsel %vm498, %v1325, %v1324
          %v1328 = vsel %vm393, %v1327, 0.0
          %v1329 = vsel %vm394, %v1326, 0.0
          %v1330 = vstv %s344
          %v1331 = vmul.f32 %v1328, %v1330
          %v1332 = vmul.f32 %v1329, %v1330
          %v1333 = vadd.f32 %v1322, %v1331
          %v1334 = vadd.f32 %v1323, %v1332
          %v1335 = vrot.slane %v1281, 1
          %v1336 = vrot.slane %v1282, 1
          %v1337 = vsel %vm532, %v1335, %v1336
          %v1338 = vsel %vm532, %v1336, %v1335
          %v1339 = vsel %vm395, %v1337, 0.0
          %v1340 = vsel %vm396, %v1338, 0.0
          %v1341 = vstv %s348
          %v1342 = vmul.f32 %v1339, %v1341
          %v1343 = vmul.f32 %v1340, %v1341
          %v1344 = vadd.f32 %v1333, %v1342
          %v1345 = vadd.f32 %v1334, %v1343
          %v1346 = vrot.slane %v1239, 1
          %v1347 = vrot.slane %v1240, 1
          %v1348 = vsel %vm532, %v1346, %v1347
          %v1349 = vsel %vm532, %v1347, %v1346
          %v1350 = vsel %vm395, %v1348, 0.0
          %v1351 = vsel %vm396, %v1349, 0.0
          %v1352 = vstv %s349
          %v1353 = vmul.f32 %v1350, %v1352
          %v1354 = vmul.f32 %v1351, %v1352
          %v1355 = vadd.f32 %v1344, %v1353
          %v1356 = vadd.f32 %v1345, %v1354
          %v1357 = vrot.slane %v1287, 1
          %v1358 = vrot.slane %v1288, 1
          %v1359 = vsel %vm532, %v1357, %v1358
          %v1360 = vsel %vm532, %v1358, %v1357
          %v1361 = vsel %vm395, %v1359, 0.0
          %v1362 = vsel %vm396, %v1360, 0.0
          %v1363 = vstv %s350
          %v1364 = vmul.f32 %v1361, %v1363
          %v1365 = vmul.f32 %v1362, %v1363
          %v1366 = vadd.f32 %v1355, %v1364
          %v1367 = vadd.f32 %v1356, %v1365
          %v1368 = vstv %s369
          %v1369 = vadd.f32 %v1366, %v1368
          %v1370 = vadd.f32 %v1367, %v1368
          %v1371 = vmax.f32 %v1369, 0.0
          %v1372 = vmax.f32 %v1370, 0.0
          %1373 = vrot.lane.b32.xlu0 %v1257, 1
          %v1374 = vpop.permute.xlu0 %1373
          %1375 = vrot.lane.b32.xlu0 %v1258, 1
          %v1376 = vpop.permute.xlu0 %1375
          %v1377 = vsel %vm397, %v1374, 0.0
          %v1378 = vsel %vm397, %v1376, 0.0
          %1379 = vrot.lane.b32.xlu0 %v1257, 127
          %v1380 = vpop.permute.xlu0 %1379
          %1381 = vrot.lane.b32.xlu0 %v1258, 127
          %v1382 = vpop.permute.xlu0 %1381
          %v1383 = vsel %vm398, %v1380, 0.0
          %v1384 = vsel %vm398, %v1382, 0.0
          %v1385 = vstv %s354
          %v1386 = vmul.f32 %v1377, %v1385
          %v1387 = vmul.f32 %v1378, %v1385
          %v1388 = vstv %s355
          %v1389 = vmul.f32 %v1257, %v1388
          %v1390 = vmul.f32 %v1258, %v1388
          %v1391 = vadd.f32 %v1386, %v1389
          %v1392 = vadd.f32 %v1387, %v1390
          %v1393 = vstv %s356
          %v1394 = vmul.f32 %v1383, %v1393
          %v1395 = vmul.f32 %v1384, %v1393
          %v1396 = vadd.f32 %v1391, %v1394
          %v1397 = vadd.f32 %v1392, %v1395
          %v1398 = vrot.slane %v1377, 7
          %v1399 = vrot.slane %v1378, 7
          %v1400 = vsel %vm498, %v1398, %v1399
          %v1401 = vsel %vm498, %v1399, %v1398
          %v1402 = vsel %vm393, %v1401, 0.0
          %v1403 = vsel %vm394, %v1400, 0.0
          %v1404 = vstv %s351
          %v1405 = vmul.f32 %v1402, %v1404
          %v1406 = vmul.f32 %v1403, %v1404
          %v1407 = vadd.f32 %v1396, %v1405
          %v1408 = vadd.f32 %v1397, %v1406
          %v1409 = vrot.slane %v1257, 7
          %v1410 = vrot.slane %v1258, 7
          %v1411 = vsel %vm498, %v1409, %v1410
          %v1412 = vsel %vm498, %v1410, %v1409
          %v1413 = vsel %vm393, %v1412, 0.0
          %v1414 = vsel %vm394, %v1411, 0.0
          %v1415 = vstv %s352
          %v1416 = vmul.f32 %v1413, %v1415
          %v1417 = vmul.f32 %v1414, %v1415
          %v1418 = vadd.f32 %v1407, %v1416
          %v1419 = vadd.f32 %v1408, %v1417
          %v1420 = vrot.slane %v1383, 7
          %v1421 = vrot.slane %v1384, 7
          %v1422 = vsel %vm498, %v1420, %v1421
          %v1423 = vsel %vm498, %v1421, %v1420
          %v1424 = vsel %vm393, %v1423, 0.0
          %v1425 = vsel %vm394, %v1422, 0.0
          %v1426 = vstv %s353
          %v1427 = vmul.f32 %v1424, %v1426
          %v1428 = vmul.f32 %v1425, %v1426
          %v1429 = vadd.f32 %v1418, %v1427
          %v1430 = vadd.f32 %v1419, %v1428
          %v1431 = vrot.slane %v1377, 1
          %v1432 = vrot.slane %v1378, 1
          %v1433 = vsel %vm532, %v1431, %v1432
          %v1434 = vsel %vm532, %v1432, %v1431
          %v1435 = vsel %vm395, %v1433, 0.0
          %v1436 = vsel %vm396, %v1434, 0.0
          %v1437 = vstv %s357
          %v1438 = vmul.f32 %v1435, %v1437
          %v1439 = vmul.f32 %v1436, %v1437
          %v1440 = vadd.f32 %v1429, %v1438
          %v1441 = vadd.f32 %v1430, %v1439
          %v1442 = vrot.slane %v1257, 1
          %v1443 = vrot.slane %v1258, 1
          %v1444 = vsel %vm532, %v1442, %v1443
          %v1445 = vsel %vm532, %v1443, %v1442
          %v1446 = vsel %vm395, %v1444, 0.0
          %v1447 = vsel %vm396, %v1445, 0.0
          %v1448 = vstv %s358
          %v1449 = vmul.f32 %v1446, %v1448
          %v1450 = vmul.f32 %v1447, %v1448
          %v1451 = vadd.f32 %v1440, %v1449
          %v1452 = vadd.f32 %v1441, %v1450
          %v1453 = vrot.slane %v1383, 1
          %v1454 = vrot.slane %v1384, 1
          %v1455 = vsel %vm532, %v1453, %v1454
          %v1456 = vsel %vm532, %v1454, %v1453
          %v1457 = vsel %vm395, %v1455, 0.0
          %v1458 = vsel %vm396, %v1456, 0.0
          %v1459 = vstv %s359
          %v1460 = vmul.f32 %v1457, %v1459
          %v1461 = vmul.f32 %v1458, %v1459
          %v1462 = vadd.f32 %v1451, %v1460
          %v1463 = vadd.f32 %v1452, %v1461
          %v1464 = vstv %s370
          %v1465 = vadd.f32 %v1462, %v1464
          %v1466 = vadd.f32 %v1463, %v1464
          %v1467 = vmax.f32 %v1465, 0.0
          %v1468 = vmax.f32 %v1466, 0.0
          %1469 = vrot.lane.b32.xlu0 %v1275, 1
          %v1470 = vpop.permute.xlu0 %1469
          %1471 = vrot.lane.b32.xlu0 %v1276, 1
          %v1472 = vpop.permute.xlu0 %1471
          %v1473 = vsel %vm397, %v1470, 0.0
          %v1474 = vsel %vm397, %v1472, 0.0
          %1475 = vrot.lane.b32.xlu0 %v1275, 127
          %v1476 = vpop.permute.xlu0 %1475
          %1477 = vrot.lane.b32.xlu0 %v1276, 127
          %v1478 = vpop.permute.xlu0 %1477
          %v1479 = vsel %vm398, %v1476, 0.0
          %v1480 = vsel %vm398, %v1478, 0.0
          %v1481 = vstv %s363
          %v1482 = vmul.f32 %v1473, %v1481
          %v1483 = vmul.f32 %v1474, %v1481
          %v1484 = vstv %s364
          %v1485 = vmul.f32 %v1275, %v1484
          %v1486 = vmul.f32 %v1276, %v1484
          %v1487 = vadd.f32 %v1482, %v1485
          %v1488 = vadd.f32 %v1483, %v1486
          %v1489 = vstv %s365
          %v1490 = vmul.f32 %v1479, %v1489
          %v1491 = vmul.f32 %v1480, %v1489
          %v1492 = vadd.f32 %v1487, %v1490
          %v1493 = vadd.f32 %v1488, %v1491
          %v1494 = vrot.slane %v1473, 7
          %v1495 = vrot.slane %v1474, 7
          %v1496 = vsel %vm498, %v1494, %v1495
          %v1497 = vsel %vm498, %v1495, %v1494
          %v1498 = vsel %vm393, %v1497, 0.0
          %v1499 = vsel %vm394, %v1496, 0.0
          %v1500 = vstv %s360
          %v1501 = vmul.f32 %v1498, %v1500
          %v1502 = vmul.f32 %v1499, %v1500
          %v1503 = vadd.f32 %v1492, %v1501
          %v1504 = vadd.f32 %v1493, %v1502
          %v1505 = vrot.slane %v1275, 7
          %v1506 = vrot.slane %v1276, 7
          %v1507 = vsel %vm498, %v1505, %v1506
          %v1508 = vsel %vm498, %v1506, %v1505
          %v1509 = vsel %vm393, %v1508, 0.0
          %v1510 = vsel %vm394, %v1507, 0.0
          %v1511 = vstv %s361
          %v1512 = vmul.f32 %v1509, %v1511
          %v1513 = vmul.f32 %v1510, %v1511
          %v1514 = vadd.f32 %v1503, %v1512
          %v1515 = vadd.f32 %v1504, %v1513
          %v1516 = vrot.slane %v1479, 7
          %v1517 = vrot.slane %v1480, 7
          %v1518 = vsel %vm498, %v1516, %v1517
          %v1519 = vsel %vm498, %v1517, %v1516
          %v1520 = vsel %vm393, %v1519, 0.0
          %v1521 = vsel %vm394, %v1518, 0.0
          %v1522 = vstv %s362
          %v1523 = vmul.f32 %v1520, %v1522
          %v1524 = vmul.f32 %v1521, %v1522
          %v1525 = vadd.f32 %v1514, %v1523
          %v1526 = vadd.f32 %v1515, %v1524
          %v1527 = vrot.slane %v1473, 1
          %v1528 = vrot.slane %v1474, 1
          %v1529 = vsel %vm532, %v1527, %v1528
          %v1530 = vsel %vm532, %v1528, %v1527
          %v1531 = vsel %vm395, %v1529, 0.0
          %v1532 = vsel %vm396, %v1530, 0.0
          %v1533 = vstv %s366
          %v1534 = vmul.f32 %v1531, %v1533
          %v1535 = vmul.f32 %v1532, %v1533
          %v1536 = vadd.f32 %v1525, %v1534
          %v1537 = vadd.f32 %v1526, %v1535
          %v1538 = vrot.slane %v1275, 1
          %v1539 = vrot.slane %v1276, 1
          %v1540 = vsel %vm532, %v1538, %v1539
          %v1541 = vsel %vm532, %v1539, %v1538
          %v1542 = vsel %vm395, %v1540, 0.0
          %v1543 = vsel %vm396, %v1541, 0.0
          %v1544 = vstv %s367
          %v1545 = vmul.f32 %v1542, %v1544
          %v1546 = vmul.f32 %v1543, %v1544
          %v1547 = vadd.f32 %v1536, %v1545
          %v1548 = vadd.f32 %v1537, %v1546
          %v1549 = vrot.slane %v1479, 1
          %v1550 = vrot.slane %v1480, 1
          %v1551 = vsel %vm532, %v1549, %v1550
          %v1552 = vsel %vm532, %v1550, %v1549
          %v1553 = vsel %vm395, %v1551, 0.0
          %v1554 = vsel %vm396, %v1552, 0.0
          %v1555 = vstv %s368
          %v1556 = vmul.f32 %v1553, %v1555
          %v1557 = vmul.f32 %v1554, %v1555
          %v1558 = vadd.f32 %v1547, %v1556
          %v1559 = vadd.f32 %v1548, %v1557
          %v1560 = vstv %s371
          %v1561 = vadd.f32 %v1558, %v1560
          %v1562 = vadd.f32 %v1559, %v1560
          %v1563 = vmax.f32 %v1561, 0.0
          %v1564 = vmax.f32 %v1562, 0.0
          %v1565 = vstv %s372
          %v1566 = vmul.f32 %v1371, %v1565
          %v1567 = vmul.f32 %v1372, %v1565
          %v1568 = vstv %s373
          %v1569 = vmul.f32 %v1467, %v1568
          %v1570 = vmul.f32 %v1468, %v1568
          %v1571 = vadd.f32 %v1566, %v1569
          %v1572 = vadd.f32 %v1567, %v1570
          %v1573 = vstv %s374
          %v1574 = vmul.f32 %v1563, %v1573
          %v1575 = vmul.f32 %v1564, %v1573
          %v1576 = vadd.f32 %v1571, %v1574
          %v1577 = vadd.f32 %v1572, %v1575
          %v1578 = vstv %s381
          %v1579 = vadd.f32 %v1576, %v1578
          %v1580 = vadd.f32 %v1577, %v1578
          %v1581 = vadd.f32 %v1579, %v1181
          %v1582 = vadd.f32 %v1580, %v1182
          %v1583 = vmax.f32 %v1581, 0.0
          %v1584 = vmax.f32 %v1582, 0.0
          %v1585 = vstv %s375
          %v1586 = vmul.f32 %v1371, %v1585
          %v1587 = vmul.f32 %v1372, %v1585
          %v1588 = vstv %s376
          %v1589 = vmul.f32 %v1467, %v1588
          %v1590 = vmul.f32 %v1468, %v1588
          %v1591 = vadd.f32 %v1586, %v1589
          %v1592 = vadd.f32 %v1587, %v1590
          %v1593 = vstv %s377
          %v1594 = vmul.f32 %v1563, %v1593
          %v1595 = vmul.f32 %v1564, %v1593
          %v1596 = vadd.f32 %v1591, %v1594
          %v1597 = vadd.f32 %v1592, %v1595
          %v1598 = vstv %s382
          %v1599 = vadd.f32 %v1596, %v1598
          %v1600 = vadd.f32 %v1597, %v1598
          %v1601 = vadd.f32 %v1599, %v1201
          %v1602 = vadd.f32 %v1600, %v1202
          %v1603 = vmax.f32 %v1601, 0.0
          %v1604 = vmax.f32 %v1602, 0.0
          %v1605 = vstv %s378
          %v1606 = vmul.f32 %v1371, %v1605
          %v1607 = vmul.f32 %v1372, %v1605
          %v1608 = vstv %s379
          %v1609 = vmul.f32 %v1467, %v1608
          %v1610 = vmul.f32 %v1468, %v1608
          %v1611 = vadd.f32 %v1606, %v1609
          %v1612 = vadd.f32 %v1607, %v1610
          %v1613 = vstv %s380
          %v1614 = vmul.f32 %v1563, %v1613
          %v1615 = vmul.f32 %v1564, %v1613
          %v1616 = vadd.f32 %v1611, %v1614
          %v1617 = vadd.f32 %v1612, %v1615
          %v1618 = vstv %s383
          %v1619 = vadd.f32 %v1616, %v1618
          %v1620 = vadd.f32 %v1617, %v1618
          %v1621 = vadd.f32 %v1619, %v1221
          %v1622 = vadd.f32 %v1620, %v1222
          %v1623 = vmax.f32 %v1621, 0.0
          %v1624 = vmax.f32 %v1622, 0.0
          %1625 = vrot.lane.b32.xlu0 %v1583, 1
          %v1626 = vpop.permute.xlu0 %1625
          %1627 = vrot.lane.b32.xlu0 %v1584, 1
          %v1628 = vpop.permute.xlu0 %1627
          %v1629 = vsel %vm397, %v1626, 0.0
          %v1630 = vsel %vm397, %v1628, 0.0
          %1631 = vrot.lane.b32.xlu0 %v1583, 127
          %v1632 = vpop.permute.xlu0 %1631
          %1633 = vrot.lane.b32.xlu0 %v1584, 127
          %v1634 = vpop.permute.xlu0 %1633
          %v1635 = vsel %vm398, %v1632, 0.0
          %v1636 = vsel %vm398, %v1634, 0.0
          %v1637 = vld [vmem:[#allocation7] sm:$0xff]
          %v1638 = vld [vmem:[#allocation7 + $0x8] sm:$0xff]
          %v1639 = vmul.f32 %v1629, %v1637
          %v1640 = vmul.f32 %v1630, %v1638
          %s1641 = scalar_lea.vmem [#allocation7], 16
          %v1642 = vld [vmem:[%s1641] sm:$0xff]
          %v1643 = vld [vmem:[%s1641 + $0x8] sm:$0xff]
          %v1644 = vmul.f32 %v1583, %v1642
          %v1645 = vmul.f32 %v1584, %v1643
          %v1646 = vadd.f32 %v1639, %v1644
          %v1647 = vadd.f32 %v1640, %v1645
          %s1648 = scalar_lea.vmem [#allocation7], 32
          %v1649 = vld [vmem:[%s1648] sm:$0xff]
          %v1650 = vld [vmem:[%s1648 + $0x8] sm:$0xff]
          %v1651 = vmul.f32 %v1635, %v1649
          %v1652 = vmul.f32 %v1636, %v1650
          %v1653 = vadd.f32 %v1646, %v1651
          %v1654 = vadd.f32 %v1647, %v1652
          %v1655 = vadd.f32 %v1653, %v1654
          %v1656 = vrot.slane %v1655, 4
          %v1657 = vadd.f32 %v1655, %v1656
          %v1658 = vrot.slane %v1657, 2
          %v1659 = vadd.f32 %v1657, %v1658
          %v1660 = vrot.slane %v1659, 1
          %v1661 = vadd.f32 %v1659, %v1660
          %v1662 = vstv %s384
          %v1663 = vadd.f32 %v1661, %v1662
          %s1664 = scalar_lea.vmem %s221, %s400 [#allocation9]
          %1665 = vst [vmem:[%s1664] sm:$0x1] %v1663
          %1666 = vrot.lane.b32.xlu0 %v1603, 1
          %v1667 = vpop.permute.xlu0 %1666
          %1668 = vrot.lane.b32.xlu0 %v1604, 1
          %v1669 = vpop.permute.xlu0 %1668
          %v1670 = vsel %vm397, %v1667, 0.0
          %v1671 = vsel %vm397, %v1669, 0.0
          %1672 = vrot.lane.b32.xlu0 %v1603, 127
          %v1673 = vpop.permute.xlu0 %1672
          %1674 = vrot.lane.b32.xlu0 %v1604, 127
          %v1675 = vpop.permute.xlu0 %1674
          %v1676 = vsel %vm398, %v1673, 0.0
          %v1677 = vsel %vm398, %v1675, 0.0
          %s1678 = scalar_lea.vmem [#allocation7], 48
          %v1679 = vld [vmem:[%s1678] sm:$0xff]
          %v1680 = vld [vmem:[%s1678 + $0x8] sm:$0xff]
          %v1681 = vmul.f32 %v1670, %v1679
          %v1682 = vmul.f32 %v1671, %v1680
          %s1683 = scalar_lea.vmem [#allocation7], 64
          %v1684 = vld [vmem:[%s1683] sm:$0xff]
          %v1685 = vld [vmem:[%s1683 + $0x8] sm:$0xff]
          %v1686 = vmul.f32 %v1603, %v1684
          %v1687 = vmul.f32 %v1604, %v1685
          %v1688 = vadd.f32 %v1681, %v1686
          %v1689 = vadd.f32 %v1682, %v1687
          %s1690 = scalar_lea.vmem [#allocation7], 80
          %v1691 = vld [vmem:[%s1690] sm:$0xff]
          %v1692 = vld [vmem:[%s1690 + $0x8] sm:$0xff]
          %v1693 = vmul.f32 %v1676, %v1691
          %v1694 = vmul.f32 %v1677, %v1692
          %v1695 = vadd.f32 %v1688, %v1693
          %v1696 = vadd.f32 %v1689, %v1694
          %v1697 = vadd.f32 %v1695, %v1696
          %v1698 = vrot.slane %v1697, 4
          %v1699 = vadd.f32 %v1697, %v1698
          %v1700 = vrot.slane %v1699, 2
          %v1701 = vadd.f32 %v1699, %v1700
          %v1702 = vrot.slane %v1701, 1
          %v1703 = vadd.f32 %v1701, %v1702
          %v1704 = vstv %s385
          %v1705 = vadd.f32 %v1703, %v1704
          %s1706 = sadd.s32 %s400, 8
          %s1707 = scalar_lea.vmem %s221, %s1706 [#allocation9]
          %1708 = vst [vmem:[%s1707] sm:$0x1] %v1705
          %1709 = vrot.lane.b32.xlu0 %v1623, 1
          %v1710 = vpop.permute.xlu0 %1709
          %1711 = vrot.lane.b32.xlu0 %v1624, 1
          %v1712 = vpop.permute.xlu0 %1711
          %v1713 = vsel %vm397, %v1710, 0.0
          %v1714 = vsel %vm397, %v1712, 0.0
          %1715 = vrot.lane.b32.xlu0 %v1623, 127
          %v1716 = vpop.permute.xlu0 %1715
          %1717 = vrot.lane.b32.xlu0 %v1624, 127
          %v1718 = vpop.permute.xlu0 %1717
          %v1719 = vsel %vm398, %v1716, 0.0
          %v1720 = vsel %vm398, %v1718, 0.0
          %s1721 = scalar_lea.vmem [#allocation7], 96
          %v1722 = vld [vmem:[%s1721] sm:$0xff]
          %v1723 = vld [vmem:[%s1721 + $0x8] sm:$0xff]
          %v1724 = vmul.f32 %v1713, %v1722
          %v1725 = vmul.f32 %v1714, %v1723
          %s1726 = scalar_lea.vmem [#allocation7], 112
          %v1727 = vld [vmem:[%s1726] sm:$0xff]
          %v1728 = vld [vmem:[%s1726 + $0x8] sm:$0xff]
          %v1729 = vmul.f32 %v1623, %v1727
          %v1730 = vmul.f32 %v1624, %v1728
          %v1731 = vadd.f32 %v1724, %v1729
          %v1732 = vadd.f32 %v1725, %v1730
          %s1733 = scalar_lea.vmem [#allocation7], 128
          %v1734 = vld [vmem:[%s1733] sm:$0xff]
          %v1735 = vld [vmem:[%s1733 + $0x8] sm:$0xff]
          %v1736 = vmul.f32 %v1719, %v1734
          %v1737 = vmul.f32 %v1720, %v1735
          %v1738 = vadd.f32 %v1731, %v1736
          %v1739 = vadd.f32 %v1732, %v1737
          %v1740 = vadd.f32 %v1738, %v1739
          %v1741 = vrot.slane %v1740, 4
          %v1742 = vadd.f32 %v1740, %v1741
          %v1743 = vrot.slane %v1742, 2
          %v1744 = vadd.f32 %v1742, %v1743
          %v1745 = vrot.slane %v1744, 1
          %v1746 = vadd.f32 %v1744, %v1745
          %v1747 = vstv %s386
          %v1748 = vadd.f32 %v1746, %v1747
          %s1749 = sadd.s32 %s400, 16
          %s1750 = scalar_lea.vmem %s221, %s1749 [#allocation9]
          %1751 = vst [vmem:[%s1750] sm:$0x1] %v1748
        $region49: #{tpu_custom_call.1} parent=31 // loop_footer
          %s404 = sadd.s32 1, %s400
        $region50: #{tpu_custom_call.1} parent=31 // loop_footer_branch
          %399 = sbr.rel target = $region46
        $region51: #{tpu_custom_call.1} parent=31 // loop_exit
          _
        %s1752 = sand.u32 %s98, 1
        %s1753 = scalar_lea.sflag [#allocation4], %s1752
        %s1754 = sand.u32 %s98, 1
        %s1755 = smul.addr %s1754, 24
        %s1756 = scalar_lea.vmem [#allocation9], %s1755
        // Predicated region
        $region52: #{tpu_custom_call.1} parent=31 // pred_check
          %p1757 = pneg %p108
        $region53: #{tpu_custom_call.1} parent=31 // pred_check_branch
          %1759 = sbr.rel (%p1757) target = $region55
        $region54: #{tpu_custom_call.1} parent=31 // pred_region
          %1761 = vsyncadd %s1753, 0
          %s1762 = smul.addr %s22, 3
          %s1763 = smul.addr %s1762, 8
          %s1764 = scalar_lea.hbm %s3, %s1763
          %s1765 = sshll.u32 %s1756, 4
          %s1766 = int_to_ptr.vmem [resolvable:$true] %s1765
          %s1767 = sshll.u32 %s1764, 4
          %s1768 = int_to_ptr.hbm [resolvable:$true] %s1767
          %1773 = dma.vmem_to_hbm [thread:$0]  %s1766, 384, %s1768, %s1753, 128, 128, 8
        $region55: #{tpu_custom_call.1} parent=31 // pred_fallthru
          _
      $region32: #{tpu_custom_call.1} parent=5 // pred_fallthru
        _
      %p1774 = scmp.le.s32.totalorder 2, %s17
      // Predicated region
      $region56: #{tpu_custom_call.1} parent=5 // pred_check
        %p1775 = pneg %p1774
      $region57: #{tpu_custom_call.1} parent=5 // pred_check_branch
        %1777 = sbr.rel (%p1775) target = $region59
      $region58: #{tpu_custom_call.1} parent=5 // pred_region
        %s1778 = ssub.s32 %s17, 2
        // Predicated region
        $region60: #{tpu_custom_call.1} parent=58 // pred_check
          %p1779 = pneg %p114
        $region61: #{tpu_custom_call.1} parent=58 // pred_check_branch
          %1781 = sbr.rel (%p1779) target = $region63
        $region62: #{tpu_custom_call.1} parent=58 // pred_region
          %s1782 = sand.u32 %s99, 1
          %s1783 = scalar_lea.sflag [#allocation4], %s1782
          %s1784 = sand.u32 %s99, 1
          %s1785 = smul.addr %s1784, 24
          %s1786 = scalar_lea.vmem [#allocation9], %s1785
          %1788 = dma.done %s1783, 384
        $region63: #{tpu_custom_call.1} parent=58 // pred_fallthru
          _
      $region59: #{tpu_custom_call.1} parent=5 // pred_fallthru
        _
    $region6: #{tpu_custom_call.1} parent=1 // loop_footer
      %s21 = sadd.s32 1, %s17
    $region7: #{tpu_custom_call.1} parent=1 // loop_footer_branch
      %16 = sbr.rel target = $region3
    $region8: #{tpu_custom_call.1} parent=1 // loop_exit
      _
    %1789 = vsyncpa [#allocation3], 1
    %s1790 = scalar_lea.sflag [#allocation3], 1
    %1791 = vsyncpa %s1790, 1
    %1792 = vsyncpa [#allocation8], 1
    %1793 = vsyncpa [#allocation4], 1
    %s1794 = scalar_lea.sflag [#allocation4], 1
    %1795 = vsyncpa %s1794, 1
    %1796 = vsyncpa [#allocation5], 1
    %s1797 = scalar_lea.sflag [#allocation5], 1
    %1798 = vsyncpa %s1797, 1

</llo_original>
